<compile_context>
chip_gen: v6e
topology: v6e:2x2x1
jax: 0.10.0
libtpu: 0.0.40
codegen_flags: <defaults>
</compile_context>

<pallas_src>
import functools
import math

import jax
import jax.numpy as jnp
from jax.experimental import pallas as pl
from jax.experimental.pallas import tpu as pltpu

VOCAB = 10
D_MODEL = 50
NHEAD = 2
NUM_LAYERS = 3
DIM_FF = 2048          # nn.TransformerEncoderLayer default dim_feedforward
FF_CHUNK = 1024        # FFN inner-dim tile (2 chunks; h1 is 16 vregs)
LN_EPS = 1e-5

# Packed small-parameter layout: 128-lane-aligned segments inside one array.
#   segments 0..5   : q/k/v biases per head (width Dh), scale folded into q
#   segments 6..11  : bo, ln1w, ln1b, b2, ln2w, ln2b (width E)
#   offset B1_OFF   : b1 (width DIM_FF)
SEG_BO, SEG_LN1W, SEG_LN1B, SEG_B2, SEG_LN2W, SEG_LN2B = 6, 7, 8, 9, 10, 11
NSEG = 12
B1_OFF = NSEG * 128
SMALL_K = B1_OFF + DIM_FF      # 3584


def _layer_norm(v, w, b):
    mu = jnp.mean(v, axis=-1, keepdims=True)
    var = jnp.mean((v - mu) ** 2, axis=-1, keepdims=True)
    return (v - mu) * jax.lax.rsqrt(var + LN_EPS) * w + b


def encoder_layer_kernel(B, S,
                         h_ref,
                         wqkv_ref, wo_ref, w1_ref, w2t_ref,
                         smalls_ref, fw_ref, fb_ref,
                         o_ref,
                         x_scr):
    """One encoder layer per grid step; activation carried in VMEM scratch."""
    l = pl.program_id(0)
    E = D_MODEL
    H = NHEAD
    Dh = E // H
    N = B * S

    def seg(idx, width):
        off = idx * 128                              # lane-tile-aligned slice
        return smalls_ref[:, off:off + width]        # (1, width)

    @pl.when(l == 0)
    def _():
        x_scr[...] = h_ref[...]

    x = x_scr[...]                                   # (N, E) f32, batch-major rows

    # ---- multi-head self-attention (dropout = identity in eval) ----
    # Per-head/per-tensor weights: no misaligned lane slices of a packed qkv.
    attn = jnp.zeros((N, E), jnp.float32)
    for hh in range(H):                              # static unroll (H = 2)
        q = jnp.dot(x, wqkv_ref[hh],
                    preferred_element_type=jnp.float32) + seg(hh, Dh)
        k = jnp.dot(x, wqkv_ref[H + hh],
                    preferred_element_type=jnp.float32) + seg(H + hh, Dh)
        v = jnp.dot(x, wqkv_ref[2 * H + hh],
                    preferred_element_type=jnp.float32) + seg(2 * H + hh, Dh)
        q3 = q.reshape(B, S, Dh)                     # scale already folded in
        k3 = k.reshape(B, S, Dh)
        v3 = v.reshape(B, S, Dh)
        s = jnp.einsum('bsd,btd->bst', q3, k3,
                       preferred_element_type=jnp.float32)       # (B, S, S)
        s = s - jnp.max(s, axis=-1, keepdims=True)
        p = jnp.exp(s)
        # approx reciprocal -> EUP slot; ~1e-3 rel. err vs exact divide.
        p = p * pl.reciprocal(jnp.sum(p, axis=-1, keepdims=True), approx=True)
        ho = jnp.einsum('bst,btd->bsd', p, v3,
                        preferred_element_type=jnp.float32)      # (B, S, Dh)
        # concat(heads) @ Wo  ==  sum_h head_h @ Wo[h]  (Wo pre-split on host)
        attn = attn + jnp.dot(ho.reshape(N, Dh), wo_ref[hh],
                              preferred_element_type=jnp.float32)
    attn = attn + seg(SEG_BO, E)
    x = _layer_norm(x + attn, seg(SEG_LN1W, E), seg(SEG_LN1B, E))

    # ---- feed-forward (ReLU), bf16 weights, f32 accumulation ----
    xb = x.astype(jnp.bfloat16)
    ff = jnp.zeros((N, E), jnp.float32)
    for c in range(DIM_FF // FF_CHUNK):              # static unroll (2 chunks)
        lo = c * FF_CHUNK
        hi = lo + FF_CHUNK
        h1 = jnp.dot(xb, w1_ref[:, lo:hi],
                     preferred_element_type=jnp.float32)
        h1 = jnp.maximum(h1 + smalls_ref[:, B1_OFF + lo:B1_OFF + hi], 0.0)
        # w2 stored lane-dense as (E, DIM_FF); contract the F axis of both
        # operands (trans_b form) -> no (2048, 50) lane padding, 4 KB DMA rows.
        ff = ff + jax.lax.dot_general(
            h1.astype(jnp.bfloat16), w2t_ref[:, lo:hi],
            dimension_numbers=(((1,), (1,)), ((), ())),
            preferred_element_type=jnp.float32)
    ff = ff + seg(SEG_B2, E)
    x = _layer_norm(x + ff, seg(SEG_LN2W, E), seg(SEG_LN2B, E))

    x_scr[...] = x

    # final encoder LayerNorm + store directly in (S, B*E) == x.view(S, -1)
    # (kept as a direct store: only one lane rotate for b=1; a (S,B,E) output
    #  would need sublane-strided stores and is not clearly cheaper at 8x100)
    @pl.when(l == NUM_LAYERS - 1)
    def _():
        y = _layer_norm(x, fw_ref[...], fb_ref[...])             # (N, E)
        for b in range(B):                                       # static (B=2)
            o_ref[:, b * E:(b + 1) * E] = y[b * S:(b + 1) * S, :]


def init_params(key):
    E, F, L, H = D_MODEL, DIM_FF, NUM_LAYERS, NHEAD
    Dh = E // H
    ks = jax.random.split(key, 8)

    def nrm(k, shape, s=0.05):
        return (s * jax.random.normal(k, shape)).astype(jnp.float32)

    scale = 1.0 / math.sqrt(Dh)

    # Host-side parameter prep (layout conversion happens ONCE, not per call):
    #   in_proj_weight (3E, E) -> per-head, pre-transposed (L, 3H, E, Dh),
    #     head order [q_0..q_{H-1}, k_0.., v_0..], 1/sqrt(Dh) folded into Q.
    #   out_proj.weight (E, E) -> per-head split, pre-transposed (L, H, Dh, E).
    #   linear1.weight (F, E)  -> (L, E, F) bf16   (x @ W1)
    #   linear2.weight (E, F)  -> (L, E, F) bf16   (lane-dense; contracted on F)
    wqkv = nrm(ks[1], (L, 3 * H, E, Dh))
    wqkv = wqkv.at[:, :H].multiply(scale)            # fold softmax scale into Q
    bqkv = jnp.zeros((L, 3 * H, Dh), jnp.float32)
    bqkv = bqkv.at[:, :H].multiply(scale)            # (zeros here; documents fold)
    wo = nrm(ks[2], (L, H, Dh, E))
    bo = jnp.zeros((L, E), jnp.float32)
    ln1w = jnp.ones((L, E), jnp.float32)
    ln1b = jnp.zeros((L, E), jnp.float32)
    w1 = nrm(ks[3], (L, E, F)).astype(jnp.bfloat16)  # bf16 storage, f32 accum
    b1 = nrm(ks[4], (L, F))
    w2t = nrm(ks[5], (L, E, F)).astype(jnp.bfloat16)  # w2 pre-transposed
    b2 = nrm(ks[6], (L, E))
    ln2w = jnp.ones((L, E), jnp.float32)
    ln2b = jnp.zeros((L, E), jnp.float32)

    # Pack all tiny per-layer vectors into one lane-aligned array -> 1 DMA/step.
    smalls = jnp.zeros((L, 1, SMALL_K), jnp.float32)
    for j in range(3 * H):
        smalls = smalls.at[:, 0, j * 128:j * 128 + Dh].set(bqkv[:, j])
    for idx, vec in ((SEG_BO, bo), (SEG_LN1W, ln1w), (SEG_LN1B, ln1b),
                     (SEG_B2, b2), (SEG_LN2W, ln2w), (SEG_LN2B, ln2b)):
        smalls = smalls.at[:, 0, idx * 128:idx * 128 + E].set(vec)
    smalls = smalls.at[:, 0, B1_OFF:B1_OFF + F].set(b1)

    return dict(
        embedding=nrm(ks[0], (VOCAB, E), 1.0),
        wqkv=wqkv, wo=wo, w1=w1, w2t=w2t, smalls=smalls,
        fw=jnp.ones((1, E), jnp.float32),
        fb=jnp.zeros((1, E), jnp.float32),
    )


def transformer_forward(tokens, params):
    # tokens: (S, B) int32 (PyTorch default batch_first=False => dim0 = seq)
    S, B = tokens.shape
    E = D_MODEL
    N = B * S
    Dh = E // NHEAD

    # Embedding gather is glue (plain JAX); activations enter the kernel as
    # batch-major rows (row = b*S + s), so S sits on the sublane tile.
    h = params['embedding'][tokens.T].reshape(N, E)          # (N, E) f32

    kernel = functools.partial(encoder_layer_kernel, B, S)

    grid_spec = pltpu.PrefetchScalarGridSpec(
        num_scalar_prefetch=0,
        grid=(NUM_LAYERS,),
        in_specs=[
            pl.BlockSpec((N, E), lambda l: (0, 0)),                     # h
            pl.BlockSpec((None, 3 * NHEAD, E, Dh),
                         lambda l: (l, 0, 0, 0)),                       # wqkv
            pl.BlockSpec((None, NHEAD, Dh, E),
                         lambda l: (l, 0, 0, 0)),                       # wo
            pl.BlockSpec((None, E, DIM_FF), lambda l: (l, 0, 0)),       # w1 bf16
            pl.BlockSpec((None, E, DIM_FF), lambda l: (l, 0, 0)),       # w2T bf16
            pl.BlockSpec((None, 1, SMALL_K), lambda l: (l, 0, 0)),      # smalls
            pl.BlockSpec((1, E), lambda l: (0, 0)),                     # fw
            pl.BlockSpec((1, E), lambda l: (0, 0)),                     # fb
        ],
        out_specs=pl.BlockSpec((S, B * E), lambda l: (0, 0)),
        scratch_shapes=[pltpu.VMEM((N, E), jnp.float32)],
    )

    out = pl.pallas_call(
        kernel,
        out_shape=jax.ShapeDtypeStruct((S, B * E), jnp.float32),
        grid_spec=grid_spec,
        # Per-step resident VMEM ~2 MB (double-buffered bf16 w1/w2 + small
        # params) -- far under every generation's scoped limit; no tuning.
        compiler_params=pltpu.CompilerParams(
            dimension_semantics=("arbitrary",)),
        # TODO(synk): at larger batch, add a leading "parallel" row-tile grid
        # axis (tiles = multiples of S) so v7x's second TensorCore is used;
        # a no-op at B*S = 16.
    )(h,
      params['wqkv'], params['wo'], params['w1'], params['w2t'],
      params['smalls'], params['fw'], params['fb'])

    return out                       # (S, B*E) == x.view(x.shape[0], -1)


if __name__ == "__main__":
    key = jax.random.PRNGKey(0)
    pkey, xkey = jax.random.split(key)
    params = init_params(pkey)

    S, B = 8, 2
    tokens = jax.random.randint(xkey, (S, B), 0, VOCAB, dtype=jnp.int32)

    out = jax.jit(transformer_forward)(tokens, params)
    jax.block_until_ready(out)
    assert out.shape == (S, B * D_MODEL), out.shape
    assert bool(jnp.all(jnp.isfinite(out)))
    print("KERNEL_OK")
</pallas_src>

<mosaic_0001>
module attributes {stable_mosaic.version = 11 : i64} {
  func.func @encoder_layer_kernel(%arg0: i32, %arg1: memref<16x50xf32, #tpu.memory_space<vmem>>, %arg2: memref<1x6x50x25xf32, #tpu.memory_space<vmem>>, %arg3: memref<1x2x25x50xf32, #tpu.memory_space<vmem>>, %arg4: memref<1x50x2048xbf16, #tpu.memory_space<vmem>>, %arg5: memref<1x50x2048xbf16, #tpu.memory_space<vmem>>, %arg6: memref<1x1x3584xf32, #tpu.memory_space<vmem>>, %arg7: memref<1x50xf32, #tpu.memory_space<vmem>>, %arg8: memref<1x50xf32, #tpu.memory_space<vmem>>, %arg9: memref<8x100xf32, #tpu.memory_space<vmem>>, %arg10: memref<16x50xf32, #tpu.memory_space<vmem>>) attributes {dimension_semantics = [#tpu.dimension_semantics<arbitrary>], iteration_bounds = array<i64: 3>, scalar_prefetch = 0 : i64, scratch_operands = 1 : i64, tpu.core_type = #tpu.core_type<tc>, window_params = [{pipeline_mode = #tpu.pipeline_mode<synchronous>, transform_indices = @transform_0, window_bounds = array<i64: 16, 50>}, {transform_indices = @transform_1, window_bounds = array<i64: 1, 6, 50, 25>}, {transform_indices = @transform_2, window_bounds = array<i64: 1, 2, 25, 50>}, {transform_indices = @transform_3, window_bounds = array<i64: 1, 50, 2048>}, {transform_indices = @transform_4, window_bounds = array<i64: 1, 50, 2048>}, {transform_indices = @transform_5, window_bounds = array<i64: 1, 1, 3584>}, {pipeline_mode = #tpu.pipeline_mode<synchronous>, transform_indices = @transform_6, window_bounds = array<i64: 1, 50>}, {pipeline_mode = #tpu.pipeline_mode<synchronous>, transform_indices = @transform_7, window_bounds = array<i64: 1, 50>}, {pipeline_mode = #tpu.pipeline_mode<synchronous>, transform_indices = @transform_8, window_bounds = array<i64: 8, 100>}]} {
    %c0_i32 = arith.constant 0 : i32
    %0 = arith.cmpi eq, %arg0, %c0_i32 : i32
    %1 = arith.extui %0 : i1 to i32
    %c0_i32_0 = arith.constant 0 : i32
    %2 = arith.cmpi ne, %1, %c0_i32_0 : i32
    scf.if %2 {
      %c0_106 = arith.constant 0 : index
      %c0_107 = arith.constant 0 : index
      %183 = vector.load %arg1[%c0_106, %c0_107] : memref<16x50xf32, #tpu.memory_space<vmem>>, vector<16x50xf32>
      %c0_108 = arith.constant 0 : index
      %c0_109 = arith.constant 0 : index
      %184 = vector.load %arg10[%c0_108, %c0_109] : memref<16x50xf32, #tpu.memory_space<vmem>>, vector<16x50xf32>
      tpu.vector_store %arg10[%c0_108, %c0_109], %183 {strides = array<i32>} : memref<16x50xf32, #tpu.memory_space<vmem>>, vector<16x50xf32>,
    } else {
    }
    %c0 = arith.constant 0 : index
    %c0_1 = arith.constant 0 : index
    %3 = vector.load %arg10[%c0, %c0_1] : memref<16x50xf32, #tpu.memory_space<vmem>>, vector<16x50xf32>
    %cst = arith.constant 0.000000e+00 : f32
    %4 = vector.broadcast %cst : f32 to vector<16x50xf32>
    %c0_2 = arith.constant 0 : index
    %c0_3 = arith.constant 0 : index
    %c0_4 = arith.constant 0 : index
    %c0_5 = arith.constant 0 : index
    %5 = vector.load %arg2[%c0_2, %c0_3, %c0_4, %c0_5] : memref<1x6x50x25xf32, #tpu.memory_space<vmem>>, vector<1x1x50x25xf32>
    %6 = vector.shape_cast %5 : vector<1x1x50x25xf32> to vector<50x25xf32>
    %cst_6 = arith.constant dense<0.000000e+00> : vector<16x25xf32>
    %7 = tpu.matmul %3, %6, %cst_6 {dimension_numbers = #tpu.dot_dimension_numbers<[1], [0], [0], [1], [0, 0, 1, 1], [], []>} : vector<16x50xf32>, vector<50x25xf32>, vector<16x25xf32> -> vector<16x25xf32>
    %c0_7 = arith.constant 0 : index
    %c0_8 = arith.constant 0 : index
    %c0_9 = arith.constant 0 : index
    %8 = vector.load %arg6[%c0_7, %c0_8, %c0_9] : memref<1x1x3584xf32, #tpu.memory_space<vmem>>, vector<1x1x25xf32>
    %9 = vector.shape_cast %8 : vector<1x1x25xf32> to vector<1x25xf32>
    %10 = vector.broadcast %9 : vector<1x25xf32> to vector<16x25xf32>
    %11 = arith.addf %7, %10 : vector<16x25xf32>
    %c0_10 = arith.constant 0 : index
    %c2 = arith.constant 2 : index
    %c0_11 = arith.constant 0 : index
    %c0_12 = arith.constant 0 : index
    %12 = vector.load %arg2[%c0_10, %c2, %c0_11, %c0_12] : memref<1x6x50x25xf32, #tpu.memory_space<vmem>>, vector<1x1x50x25xf32>
    %13 = vector.shape_cast %12 : vector<1x1x50x25xf32> to vector<50x25xf32>
    %cst_13 = arith.constant dense<0.000000e+00> : vector<16x25xf32>
    %14 = tpu.matmul %3, %13, %cst_13 {dimension_numbers = #tpu.dot_dimension_numbers<[1], [0], [0], [1], [0, 0, 1, 1], [], []>} : vector<16x50xf32>, vector<50x25xf32>, vector<16x25xf32> -> vector<16x25xf32>
    %c0_14 = arith.constant 0 : index
    %c0_15 = arith.constant 0 : index
    %c256 = arith.constant 256 : index
    %15 = vector.load %arg6[%c0_14, %c0_15, %c256] : memref<1x1x3584xf32, #tpu.memory_space<vmem>>, vector<1x1x25xf32>
    %16 = vector.shape_cast %15 : vector<1x1x25xf32> to vector<1x25xf32>
    %17 = vector.broadcast %16 : vector<1x25xf32> to vector<16x25xf32>
    %18 = arith.addf %14, %17 : vector<16x25xf32>
    %c0_16 = arith.constant 0 : index
    %c4 = arith.constant 4 : index
    %c0_17 = arith.constant 0 : index
    %c0_18 = arith.constant 0 : index
    %19 = vector.load %arg2[%c0_16, %c4, %c0_17, %c0_18] : memref<1x6x50x25xf32, #tpu.memory_space<vmem>>, vector<1x1x50x25xf32>
    %20 = vector.shape_cast %19 : vector<1x1x50x25xf32> to vector<50x25xf32>
    %cst_19 = arith.constant dense<0.000000e+00> : vector<16x25xf32>
    %21 = tpu.matmul %3, %20, %cst_19 {dimension_numbers = #tpu.dot_dimension_numbers<[1], [0], [0], [1], [0, 0, 1, 1], [], []>} : vector<16x50xf32>, vector<50x25xf32>, vector<16x25xf32> -> vector<16x25xf32>
    %c0_20 = arith.constant 0 : index
    %c0_21 = arith.constant 0 : index
    %c512 = arith.constant 512 : index
    %22 = vector.load %arg6[%c0_20, %c0_21, %c512] : memref<1x1x3584xf32, #tpu.memory_space<vmem>>, vector<1x1x25xf32>
    %23 = vector.shape_cast %22 : vector<1x1x25xf32> to vector<1x25xf32>
    %24 = vector.broadcast %23 : vector<1x25xf32> to vector<16x25xf32>
    %25 = arith.addf %21, %24 : vector<16x25xf32>
    %26 = vector.shape_cast %11 : vector<16x25xf32> to vector<2x8x25xf32>
    %27 = vector.shape_cast %18 : vector<16x25xf32> to vector<2x8x25xf32>
    %28 = vector.shape_cast %25 : vector<16x25xf32> to vector<2x8x25xf32>
    "tpu.trace_start"() <{level = 10 : i32, message = "bsd,btd->bst"}> : () -> ()
    %cst_22 = arith.constant dense<0.000000e+00> : vector<2x8x8xf32>
    %29 = tpu.matmul %26, %27, %cst_22 {dimension_numbers = #tpu.dot_dimension_numbers<[2], [2], [1], [1], [0, 0, 0, 1, 1, 1], [0], [0]>} : vector<2x8x25xf32>, vector<2x8x25xf32>, vector<2x8x8xf32> -> vector<2x8x8xf32>
    "tpu.trace_stop"() : () -> ()
    %cst_23 = arith.constant dense<0xFF800000> : vector<2x8xf32>
    %30 = vector.multi_reduction <maximumf>, %29, %cst_23 [2] : vector<2x8x8xf32> to vector<2x8xf32>
    %31 = vector.shape_cast %30 : vector<2x8xf32> to vector<2x8x1xf32>
    %32 = vector.broadcast %31 : vector<2x8x1xf32> to vector<2x8x8xf32>
    %33 = arith.subf %29, %32 : vector<2x8x8xf32>
    %34 = math.exp %33 : vector<2x8x8xf32>
    %cst_24 = arith.constant dense<0.000000e+00> : vector<2x8xf32>
    %35 = vector.multi_reduction <add>, %34, %cst_24 [2] : vector<2x8x8xf32> to vector<2x8xf32>
    %36 = vector.shape_cast %35 : vector<2x8xf32> to vector<2x8x1xf32>
    %37 = tpu.reciprocal %36 {approx = true} : vector<2x8x1xf32> -> vector<2x8x1xf32>
    %38 = vector.broadcast %37 : vector<2x8x1xf32> to vector<2x8x8xf32>
    %39 = arith.mulf %34, %38 : vector<2x8x8xf32>
    "tpu.trace_start"() <{level = 10 : i32, message = "bst,btd->bsd"}> : () -> ()
    %cst_25 = arith.constant dense<0.000000e+00> : vector<2x8x25xf32>
    %40 = tpu.matmul %39, %28, %cst_25 {dimension_numbers = #tpu.dot_dimension_numbers<[2], [1], [1], [2], [0, 0, 0, 1, 1, 2], [0], [0]>} : vector<2x8x8xf32>, vector<2x8x25xf32>, vector<2x8x25xf32> -> vector<2x8x25xf32>
    "tpu.trace_stop"() : () -> ()
    %41 = vector.shape_cast %40 : vector<2x8x25xf32> to vector<16x25xf32>
    %c0_26 = arith.constant 0 : index
    %c0_27 = arith.constant 0 : index
    %c0_28 = arith.constant 0 : index
    %c0_29 = arith.constant 0 : index
    %42 = vector.load %arg3[%c0_26, %c0_27, %c0_28, %c0_29] : memref<1x2x25x50xf32, #tpu.memory_space<vmem>>, vector<1x1x25x50xf32>
    %43 = vector.shape_cast %42 : vector<1x1x25x50xf32> to vector<25x50xf32>
    %cst_30 = arith.constant dense<0.000000e+00> : vector<16x50xf32>
    %44 = tpu.matmul %41, %43, %cst_30 {dimension_numbers = #tpu.dot_dimension_numbers<[1], [0], [0], [1], [0, 0, 1, 1], [], []>} : vector<16x25xf32>, vector<25x50xf32>, vector<16x50xf32> -> vector<16x50xf32>
    %45 = arith.addf %4, %44 : vector<16x50xf32>
    %c0_31 = arith.constant 0 : index
    %c1 = arith.constant 1 : index
    %c0_32 = arith.constant 0 : index
    %c0_33 = arith.constant 0 : index
    %46 = vector.load %arg2[%c0_31, %c1, %c0_32, %c0_33] : memref<1x6x50x25xf32, #tpu.memory_space<vmem>>, vector<1x1x50x25xf32>
    %47 = vector.shape_cast %46 : vector<1x1x50x25xf32> to vector<50x25xf32>
    %cst_34 = arith.constant dense<0.000000e+00> : vector<16x25xf32>
    %48 = tpu.matmul %3, %47, %cst_34 {dimension_numbers = #tpu.dot_dimension_numbers<[1], [0], [0], [1], [0, 0, 1, 1], [], []>} : vector<16x50xf32>, vector<50x25xf32>, vector<16x25xf32> -> vector<16x25xf32>
    %c0_35 = arith.constant 0 : index
    %c0_36 = arith.constant 0 : index
    %c128 = arith.constant 128 : index
    %49 = vector.load %arg6[%c0_35, %c0_36, %c128] : memref<1x1x3584xf32, #tpu.memory_space<vmem>>, vector<1x1x25xf32>
    %50 = vector.shape_cast %49 : vector<1x1x25xf32> to vector<1x25xf32>
    %51 = vector.broadcast %50 : vector<1x25xf32> to vector<16x25xf32>
    %52 = arith.addf %48, %51 : vector<16x25xf32>
    %c0_37 = arith.constant 0 : index
    %c3 = arith.constant 3 : index
    %c0_38 = arith.constant 0 : index
    %c0_39 = arith.constant 0 : index
    %53 = vector.load %arg2[%c0_37, %c3, %c0_38, %c0_39] : memref<1x6x50x25xf32, #tpu.memory_space<vmem>>, vector<1x1x50x25xf32>
    %54 = vector.shape_cast %53 : vector<1x1x50x25xf32> to vector<50x25xf32>
    %cst_40 = arith.constant dense<0.000000e+00> : vector<16x25xf32>
    %55 = tpu.matmul %3, %54, %cst_40 {dimension_numbers = #tpu.dot_dimension_numbers<[1], [0], [0], [1], [0, 0, 1, 1], [], []>} : vector<16x50xf32>, vector<50x25xf32>, vector<16x25xf32> -> vector<16x25xf32>
    %c0_41 = arith.constant 0 : index
    %c0_42 = arith.constant 0 : index
    %c384 = arith.constant 384 : index
    %56 = vector.load %arg6[%c0_41, %c0_42, %c384] : memref<1x1x3584xf32, #tpu.memory_space<vmem>>, vector<1x1x25xf32>
    %57 = vector.shape_cast %56 : vector<1x1x25xf32> to vector<1x25xf32>
    %58 = vector.broadcast %57 : vector<1x25xf32> to vector<16x25xf32>
    %59 = arith.addf %55, %58 : vector<16x25xf32>
    %c0_43 = arith.constant 0 : index
    %c5 = arith.constant 5 : index
    %c0_44 = arith.constant 0 : index
    %c0_45 = arith.constant 0 : index
    %60 = vector.load %arg2[%c0_43, %c5, %c0_44, %c0_45] : memref<1x6x50x25xf32, #tpu.memory_space<vmem>>, vector<1x1x50x25xf32>
    %61 = vector.shape_cast %60 : vector<1x1x50x25xf32> to vector<50x25xf32>
    %cst_46 = arith.constant dense<0.000000e+00> : vector<16x25xf32>
    %62 = tpu.matmul %3, %61, %cst_46 {dimension_numbers = #tpu.dot_dimension_numbers<[1], [0], [0], [1], [0, 0, 1, 1], [], []>} : vector<16x50xf32>, vector<50x25xf32>, vector<16x25xf32> -> vector<16x25xf32>
    %c0_47 = arith.constant 0 : index
    %c0_48 = arith.constant 0 : index
    %c640 = arith.constant 640 : index
    %63 = vector.load %arg6[%c0_47, %c0_48, %c640] : memref<1x1x3584xf32, #tpu.memory_space<vmem>>, vector<1x1x25xf32>
    %64 = vector.shape_cast %63 : vector<1x1x25xf32> to vector<1x25xf32>
    %65 = vector.broadcast %64 : vector<1x25xf32> to vector<16x25xf32>
    %66 = arith.addf %62, %65 : vector<16x25xf32>
    %67 = vector.shape_cast %52 : vector<16x25xf32> to vector<2x8x25xf32>
    %68 = vector.shape_cast %59 : vector<16x25xf32> to vector<2x8x25xf32>
    %69 = vector.shape_cast %66 : vector<16x25xf32> to vector<2x8x25xf32>
    "tpu.trace_start"() <{level = 10 : i32, message = "bsd,btd->bst"}> : () -> ()
    %cst_49 = arith.constant dense<0.000000e+00> : vector<2x8x8xf32>
    %70 = tpu.matmul %67, %68, %cst_49 {dimension_numbers = #tpu.dot_dimension_numbers<[2], [2], [1], [1], [0, 0, 0, 1, 1, 1], [0], [0]>} : vector<2x8x25xf32>, vector<2x8x25xf32>, vector<2x8x8xf32> -> vector<2x8x8xf32>
    "tpu.trace_stop"() : () -> ()
    %cst_50 = arith.constant dense<0xFF800000> : vector<2x8xf32>
    %71 = vector.multi_reduction <maximumf>, %70, %cst_50 [2] : vector<2x8x8xf32> to vector<2x8xf32>
    %72 = vector.shape_cast %71 : vector<2x8xf32> to vector<2x8x1xf32>
    %73 = vector.broadcast %72 : vector<2x8x1xf32> to vector<2x8x8xf32>
    %74 = arith.subf %70, %73 : vector<2x8x8xf32>
    %75 = math.exp %74 : vector<2x8x8xf32>
    %cst_51 = arith.constant dense<0.000000e+00> : vector<2x8xf32>
    %76 = vector.multi_reduction <add>, %75, %cst_51 [2] : vector<2x8x8xf32> to vector<2x8xf32>
    %77 = vector.shape_cast %76 : vector<2x8xf32> to vector<2x8x1xf32>
    %78 = tpu.reciprocal %77 {approx = true} : vector<2x8x1xf32> -> vector<2x8x1xf32>
    %79 = vector.broadcast %78 : vector<2x8x1xf32> to vector<2x8x8xf32>
    %80 = arith.mulf %75, %79 : vector<2x8x8xf32>
    "tpu.trace_start"() <{level = 10 : i32, message = "bst,btd->bsd"}> : () -> ()
    %cst_52 = arith.constant dense<0.000000e+00> : vector<2x8x25xf32>
    %81 = tpu.matmul %80, %69, %cst_52 {dimension_numbers = #tpu.dot_dimension_numbers<[2], [1], [1], [2], [0, 0, 0, 1, 1, 2], [0], [0]>} : vector<2x8x8xf32>, vector<2x8x25xf32>, vector<2x8x25xf32> -> vector<2x8x25xf32>
    "tpu.trace_stop"() : () -> ()
    %82 = vector.shape_cast %81 : vector<2x8x25xf32> to vector<16x25xf32>
    %c0_53 = arith.constant 0 : index
    %c1_54 = arith.constant 1 : index
    %c0_55 = arith.constant 0 : index
    %c0_56 = arith.constant 0 : index
    %83 = vector.load %arg3[%c0_53, %c1_54, %c0_55, %c0_56] : memref<1x2x25x50xf32, #tpu.memory_space<vmem>>, vector<1x1x25x50xf32>
    %84 = vector.shape_cast %83 : vector<1x1x25x50xf32> to vector<25x50xf32>
    %cst_57 = arith.constant dense<0.000000e+00> : vector<16x50xf32>
    %85 = tpu.matmul %82, %84, %cst_57 {dimension_numbers = #tpu.dot_dimension_numbers<[1], [0], [0], [1], [0, 0, 1, 1], [], []>} : vector<16x25xf32>, vector<25x50xf32>, vector<16x50xf32> -> vector<16x50xf32>
    %86 = arith.addf %45, %85 : vector<16x50xf32>
    %c0_58 = arith.constant 0 : index
    %c0_59 = arith.constant 0 : index
    %c768 = arith.constant 768 : index
    %87 = vector.load %arg6[%c0_58, %c0_59, %c768] : memref<1x1x3584xf32, #tpu.memory_space<vmem>>, vector<1x1x50xf32>
    %88 = vector.shape_cast %87 : vector<1x1x50xf32> to vector<1x50xf32>
    %89 = vector.broadcast %88 : vector<1x50xf32> to vector<16x50xf32>
    %90 = arith.addf %86, %89 : vector<16x50xf32>
    %91 = arith.addf %3, %90 : vector<16x50xf32>
    %c0_60 = arith.constant 0 : index
    %c0_61 = arith.constant 0 : index
    %c896 = arith.constant 896 : index
    %92 = vector.load %arg6[%c0_60, %c0_61, %c896] : memref<1x1x3584xf32, #tpu.memory_space<vmem>>, vector<1x1x50xf32>
    %93 = vector.shape_cast %92 : vector<1x1x50xf32> to vector<1x50xf32>
    %c0_62 = arith.constant 0 : index
    %c0_63 = arith.constant 0 : index
    %c1024 = arith.constant 1024 : index
    %94 = vector.load %arg6[%c0_62, %c0_63, %c1024] : memref<1x1x3584xf32, #tpu.memory_space<vmem>>, vector<1x1x50xf32>
    %95 = vector.shape_cast %94 : vector<1x1x50xf32> to vector<1x50xf32>
    %cst_64 = arith.constant dense<0.000000e+00> : vector<16xf32>
    %96 = vector.multi_reduction <add>, %91, %cst_64 [1] : vector<16x50xf32> to vector<16xf32>
    %97 = vector.shape_cast %96 : vector<16xf32> to vector<16x1xf32>
    %cst_65 = arith.constant 5.000000e+01 : f32
    %98 = vector.broadcast %cst_65 : f32 to vector<16x1xf32>
    %99 = arith.divf %97, %98 : vector<16x1xf32>
    %100 = vector.broadcast %99 : vector<16x1xf32> to vector<16x50xf32>
    %101 = arith.subf %91, %100 : vector<16x50xf32>
    %102 = arith.mulf %101, %101 : vector<16x50xf32>
    %cst_66 = arith.constant dense<0.000000e+00> : vector<16xf32>
    %103 = vector.multi_reduction <add>, %102, %cst_66 [1] : vector<16x50xf32> to vector<16xf32>
    %104 = vector.shape_cast %103 : vector<16xf32> to vector<16x1xf32>
    %cst_67 = arith.constant 5.000000e+01 : f32
    %105 = vector.broadcast %cst_67 : f32 to vector<16x1xf32>
    %106 = arith.divf %104, %105 : vector<16x1xf32>
    %107 = vector.broadcast %99 : vector<16x1xf32> to vector<16x50xf32>
    %108 = arith.subf %91, %107 : vector<16x50xf32>
    %cst_68 = arith.constant 9.99999974E-6 : f32
    %109 = vector.broadcast %cst_68 : f32 to vector<16x1xf32>
    %110 = arith.addf %106, %109 : vector<16x1xf32>
    %111 = math.rsqrt %110 : vector<16x1xf32>
    %112 = vector.broadcast %111 : vector<16x1xf32> to vector<16x50xf32>
    %113 = arith.mulf %108, %112 : vector<16x50xf32>
    %114 = vector.broadcast %93 : vector<1x50xf32> to vector<16x50xf32>
    %115 = arith.mulf %113, %114 : vector<16x50xf32>
    %116 = vector.broadcast %95 : vector<1x50xf32> to vector<16x50xf32>
    %117 = arith.addf %115, %116 : vector<16x50xf32>
    %118 = arith.truncf %117 : vector<16x50xf32> to vector<16x50xbf16>
    %cst_69 = arith.constant 0.000000e+00 : f32
    %119 = vector.broadcast %cst_69 : f32 to vector<16x50xf32>
    %c0_70 = arith.constant 0 : index
    %c0_71 = arith.constant 0 : index
    %c0_72 = arith.constant 0 : index
    %120 = vector.load %arg4[%c0_70, %c0_71, %c0_72] : memref<1x50x2048xbf16, #tpu.memory_space<vmem>>, vector<1x50x1024xbf16>
    %121 = vector.shape_cast %120 : vector<1x50x1024xbf16> to vector<50x1024xbf16>
    %cst_73 = arith.constant dense<0.000000e+00> : vector<16x1024xf32>
    %122 = tpu.matmul %118, %121, %cst_73 {dimension_numbers = #tpu.dot_dimension_numbers<[1], [0], [0], [1], [0, 0, 1, 1], [], []>} : vector<16x50xbf16>, vector<50x1024xbf16>, vector<16x1024xf32> -> vector<16x1024xf32>
    %c0_74 = arith.constant 0 : index
    %c0_75 = arith.constant 0 : index
    %c1536 = arith.constant 1536 : index
    %123 = vector.load %arg6[%c0_74, %c0_75, %c1536] : memref<1x1x3584xf32, #tpu.memory_space<vmem>>, vector<1x1x1024xf32>
    %124 = vector.shape_cast %123 : vector<1x1x1024xf32> to vector<1x1024xf32>
    %125 = vector.broadcast %124 : vector<1x1024xf32> to vector<16x1024xf32>
    %126 = arith.addf %122, %125 : vector<16x1024xf32>
    %cst_76 = arith.constant 0.000000e+00 : f32
    %127 = vector.broadcast %cst_76 : f32 to vector<16x1024xf32>
    %128 = arith.maximumf %126, %127 : vector<16x1024xf32>
    %129 = arith.truncf %128 : vector<16x1024xf32> to vector<16x1024xbf16>
    %c0_77 = arith.constant 0 : index
    %c0_78 = arith.constant 0 : index
    %c0_79 = arith.constant 0 : index
    %130 = vector.load %arg5[%c0_77, %c0_78, %c0_79] : memref<1x50x2048xbf16, #tpu.memory_space<vmem>>, vector<1x50x1024xbf16>
    %131 = vector.shape_cast %130 : vector<1x50x1024xbf16> to vector<50x1024xbf16>
    %cst_80 = arith.constant dense<0.000000e+00> : vector<16x50xf32>
    %132 = tpu.matmul %129, %131, %cst_80 {dimension_numbers = #tpu.dot_dimension_numbers<[1], [1], [0], [0], [0, 0, 1, 0], [], []>} : vector<16x1024xbf16>, vector<50x1024xbf16>, vector<16x50xf32> -> vector<16x50xf32>
    %133 = arith.addf %119, %132 : vector<16x50xf32>
    %c0_81 = arith.constant 0 : index
    %c0_82 = arith.constant 0 : index
    %c1024_83 = arith.constant 1024 : index
    %134 = vector.load %arg4[%c0_81, %c0_82, %c1024_83] : memref<1x50x2048xbf16, #tpu.memory_space<vmem>>, vector<1x50x1024xbf16>
    %135 = vector.shape_cast %134 : vector<1x50x1024xbf16> to vector<50x1024xbf16>
    %cst_84 = arith.constant dense<0.000000e+00> : vector<16x1024xf32>
    %136 = tpu.matmul %118, %135, %cst_84 {dimension_numbers = #tpu.dot_dimension_numbers<[1], [0], [0], [1], [0, 0, 1, 1], [], []>} : vector<16x50xbf16>, vector<50x1024xbf16>, vector<16x1024xf32> -> vector<16x1024xf32>
    %c0_85 = arith.constant 0 : index
    %c0_86 = arith.constant 0 : index
    %c2560 = arith.constant 2560 : index
    %137 = vector.load %arg6[%c0_85, %c0_86, %c2560] : memref<1x1x3584xf32, #tpu.memory_space<vmem>>, vector<1x1x1024xf32>
    %138 = vector.shape_cast %137 : vector<1x1x1024xf32> to vector<1x1024xf32>
    %139 = vector.broadcast %138 : vector<1x1024xf32> to vector<16x1024xf32>
    %140 = arith.addf %136, %139 : vector<16x1024xf32>
    %cst_87 = arith.constant 0.000000e+00 : f32
    %141 = vector.broadcast %cst_87 : f32 to vector<16x1024xf32>
    %142 = arith.maximumf %140, %141 : vector<16x1024xf32>
    %143 = arith.truncf %142 : vector<16x1024xf32> to vector<16x1024xbf16>
    %c0_88 = arith.constant 0 : index
    %c0_89 = arith.constant 0 : index
    %c1024_90 = arith.constant 1024 : index
    %144 = vector.load %arg5[%c0_88, %c0_89, %c1024_90] : memref<1x50x2048xbf16, #tpu.memory_space<vmem>>, vector<1x50x1024xbf16>
    %145 = vector.shape_cast %144 : vector<1x50x1024xbf16> to vector<50x1024xbf16>
    %cst_91 = arith.constant dense<0.000000e+00> : vector<16x50xf32>
    %146 = tpu.matmul %143, %145, %cst_91 {dimension_numbers = #tpu.dot_dimension_numbers<[1], [1], [0], [0], [0, 0, 1, 0], [], []>} : vector<16x1024xbf16>, vector<50x1024xbf16>, vector<16x50xf32> -> vector<16x50xf32>
    %147 = arith.addf %133, %146 : vector<16x50xf32>
    %c0_92 = arith.constant 0 : index
    %c0_93 = arith.constant 0 : index
    %c1152 = arith.constant 1152 : index
    %148 = vector.load %arg6[%c0_92, %c0_93, %c1152] : memref<1x1x3584xf32, #tpu.memory_space<vmem>>, vector<1x1x50xf32>
    %149 = vector.shape_cast %148 : vector<1x1x50xf32> to vector<1x50xf32>
    %150 = vector.broadcast %149 : vector<1x50xf32> to vector<16x50xf32>
    %151 = arith.addf %147, %150 : vector<16x50xf32>
    %152 = arith.addf %117, %151 : vector<16x50xf32>
    %c0_94 = arith.constant 0 : index
    %c0_95 = arith.constant 0 : index
    %c1280 = arith.constant 1280 : index
    %153 = vector.load %arg6[%c0_94, %c0_95, %c1280] : memref<1x1x3584xf32, #tpu.memory_space<vmem>>, vector<1x1x50xf32>
    %154 = vector.shape_cast %153 : vector<1x1x50xf32> to vector<1x50xf32>
    %c0_96 = arith.constant 0 : index
    %c0_97 = arith.constant 0 : index
    %c1408 = arith.constant 1408 : index
    %155 = vector.load %arg6[%c0_96, %c0_97, %c1408] : memref<1x1x3584xf32, #tpu.memory_space<vmem>>, vector<1x1x50xf32>
    %156 = vector.shape_cast %155 : vector<1x1x50xf32> to vector<1x50xf32>
    %cst_98 = arith.constant dense<0.000000e+00> : vector<16xf32>
    %157 = vector.multi_reduction <add>, %152, %cst_98 [1] : vector<16x50xf32> to vector<16xf32>
    %158 = vector.shape_cast %157 : vector<16xf32> to vector<16x1xf32>
    %cst_99 = arith.constant 5.000000e+01 : f32
    %159 = vector.broadcast %cst_99 : f32 to vector<16x1xf32>
    %160 = arith.divf %158, %159 : vector<16x1xf32>
    %161 = vector.broadcast %160 : vector<16x1xf32> to vector<16x50xf32>
    %162 = arith.subf %152, %161 : vector<16x50xf32>
    %163 = arith.mulf %162, %162 : vector<16x50xf32>
    %cst_100 = arith.constant dense<0.000000e+00> : vector<16xf32>
    %164 = vector.multi_reduction <add>, %163, %cst_100 [1] : vector<16x50xf32> to vector<16xf32>
    %165 = vector.shape_cast %164 : vector<16xf32> to vector<16x1xf32>
    %cst_101 = arith.constant 5.000000e+01 : f32
    %166 = vector.broadcast %cst_101 : f32 to vector<16x1xf32>
    %167 = arith.divf %165, %166 : vector<16x1xf32>
    %168 = vector.broadcast %160 : vector<16x1xf32> to vector<16x50xf32>
    %169 = arith.subf %152, %168 : vector<16x50xf32>
    %cst_102 = arith.constant 9.99999974E-6 : f32
    %170 = vector.broadcast %cst_102 : f32 to vector<16x1xf32>
    %171 = arith.addf %167, %170 : vector<16x1xf32>
    %172 = math.rsqrt %171 : vector<16x1xf32>
    %173 = vector.broadcast %172 : vector<16x1xf32> to vector<16x50xf32>
    %174 = arith.mulf %169, %173 : vector<16x50xf32>
    %175 = vector.broadcast %154 : vector<1x50xf32> to vector<16x50xf32>
    %176 = arith.mulf %174, %175 : vector<16x50xf32>
    %177 = vector.broadcast %156 : vector<1x50xf32> to vector<16x50xf32>
    %178 = arith.addf %176, %177 : vector<16x50xf32>
    %c0_103 = arith.constant 0 : index
    %c0_104 = arith.constant 0 : index
    %179 = vector.load %arg10[%c0_103, %c0_104] : memref<16x50xf32, #tpu.memory_space<vmem>>, vector<16x50xf32>
    tpu.vector_store %arg10[%c0_103, %c0_104], %178 {strides = array<i32>} : memref<16x50xf32, #tpu.memory_space<vmem>>, vector<16x50xf32>,
    %c2_i32 = arith.constant 2 : i32
    %180 = arith.cmpi eq, %arg0, %c2_i32 : i32
    %181 = arith.extui %180 : i1 to i32
    %c0_i32_105 = arith.constant 0 : i32
    %182 = arith.cmpi ne, %181, %c0_i32_105 : i32
    scf.if %182 {
      %c0_106 = arith.constant 0 : index
      %c0_107 = arith.constant 0 : index
      %183 = vector.load %arg7[%c0_106, %c0_107] : memref<1x50xf32, #tpu.memory_space<vmem>>, vector<1x50xf32>
      %c0_108 = arith.constant 0 : index
      %c0_109 = arith.constant 0 : index
      %184 = vector.load %arg8[%c0_108, %c0_109] : memref<1x50xf32, #tpu.memory_space<vmem>>, vector<1x50xf32>
      %cst_110 = arith.constant dense<0.000000e+00> : vector<16xf32>
      %185 = vector.multi_reduction <add>, %178, %cst_110 [1] : vector<16x50xf32> to vector<16xf32>
      %186 = vector.shape_cast %185 : vector<16xf32> to vector<16x1xf32>
      %cst_111 = arith.constant 5.000000e+01 : f32
      %187 = vector.broadcast %cst_111 : f32 to vector<16x1xf32>
      %188 = arith.divf %186, %187 : vector<16x1xf32>
      %189 = vector.broadcast %188 : vector<16x1xf32> to vector<16x50xf32>
      %190 = arith.subf %178, %189 : vector<16x50xf32>
      %191 = arith.mulf %190, %190 : vector<16x50xf32>
      %cst_112 = arith.constant dense<0.000000e+00> : vector<16xf32>
      %192 = vector.multi_reduction <add>, %191, %cst_112 [1] : vector<16x50xf32> to vector<16xf32>
      %193 = vector.shape_cast %192 : vector<16xf32> to vector<16x1xf32>
      %cst_113 = arith.constant 5.000000e+01 : f32
      %194 = vector.broadcast %cst_113 : f32 to vector<16x1xf32>
      %195 = arith.divf %193, %194 : vector<16x1xf32>
      %196 = vector.broadcast %188 : vector<16x1xf32> to vector<16x50xf32>
      %197 = arith.subf %178, %196 : vector<16x50xf32>
      %cst_114 = arith.constant 9.99999974E-6 : f32
      %198 = vector.broadcast %cst_114 : f32 to vector<16x1xf32>
      %199 = arith.addf %195, %198 : vector<16x1xf32>
      %200 = math.rsqrt %199 : vector<16x1xf32>
      %201 = vector.broadcast %200 : vector<16x1xf32> to vector<16x50xf32>
      %202 = arith.mulf %197, %201 : vector<16x50xf32>
      %203 = vector.broadcast %183 : vector<1x50xf32> to vector<16x50xf32>
      %204 = arith.mulf %202, %203 : vector<16x50xf32>
      %205 = vector.broadcast %184 : vector<1x50xf32> to vector<16x50xf32>
      %206 = arith.addf %204, %205 : vector<16x50xf32>
      %207 = vector.extract_strided_slice %206 {offsets = [0, 0], sizes = [8, 50], strides = [1, 1]} : vector<16x50xf32> to vector<8x50xf32>
      %c0_115 = arith.constant 0 : index
      %c0_116 = arith.constant 0 : index
      %208 = vector.load %arg9[%c0_115, %c0_116] : memref<8x100xf32, #tpu.memory_space<vmem>>, vector<8x50xf32>
      tpu.vector_store %arg9[%c0_115, %c0_116], %207 {strides = array<i32>} : memref<8x100xf32, #tpu.memory_space<vmem>>, vector<8x50xf32>,
      %209 = vector.extract_strided_slice %206 {offsets = [8, 0], sizes = [8, 50], strides = [1, 1]} : vector<16x50xf32> to vector<8x50xf32>
      %c0_117 = arith.constant 0 : index
      %c50 = arith.constant 50 : index
      %210 = vector.load %arg9[%c0_117, %c50] : memref<8x100xf32, #tpu.memory_space<vmem>>, vector<8x50xf32>
      tpu.vector_store %arg9[%c0_117, %c50], %209 {strides = array<i32>} : memref<8x100xf32, #tpu.memory_space<vmem>>, vector<8x50xf32>,
    } else {
    }
    return
  }
  func.func @transform_0(%arg0: i32) -> (i32, i32) {
    %c0_i32 = arith.constant 0 : i32
    %c0_i32_0 = arith.constant 0 : i32
    %c0_i32_1 = arith.constant 0 : i32
    return %c0_i32, %c0_i32_0 : i32, i32
  }
  func.func @transform_1(%arg0: i32) -> (i32, i32, i32, i32) {
    %c0_i32 = arith.constant 0 : i32
    %c0_i32_0 = arith.constant 0 : i32
    %c0_i32_1 = arith.constant 0 : i32
    %c0_i32_2 = arith.constant 0 : i32
    return %arg0, %c0_i32, %c0_i32_0, %c0_i32_1 : i32, i32, i32, i32
  }
  func.func @transform_2(%arg0: i32) -> (i32, i32, i32, i32) {
    %c0_i32 = arith.constant 0 : i32
    %c0_i32_0 = arith.constant 0 : i32
    %c0_i32_1 = arith.constant 0 : i32
    %c0_i32_2 = arith.constant 0 : i32
    return %arg0, %c0_i32, %c0_i32_0, %c0_i32_1 : i32, i32, i32, i32
  }
  func.func @transform_3(%arg0: i32) -> (i32, i32, i32) {
    %c0_i32 = arith.constant 0 : i32
    %c0_i32_0 = arith.constant 0 : i32
    %c0_i32_1 = arith.constant 0 : i32
    return %arg0, %c0_i32, %c0_i32_0 : i32, i32, i32
  }
  func.func @transform_4(%arg0: i32) -> (i32, i32, i32) {
    %c0_i32 = arith.constant 0 : i32
    %c0_i32_0 = arith.constant 0 : i32
    %c0_i32_1 = arith.constant 0 : i32
    return %arg0, %c0_i32, %c0_i32_0 : i32, i32, i32
  }
  func.func @transform_5(%arg0: i32) -> (i32, i32, i32) {
    %c0_i32 = arith.constant 0 : i32
    %c0_i32_0 = arith.constant 0 : i32
    %c0_i32_1 = arith.constant 0 : i32
    return %arg0, %c0_i32, %c0_i32_0 : i32, i32, i32
  }
  func.func @transform_6(%arg0: i32) -> (i32, i32) {
    %c0_i32 = arith.constant 0 : i32
    %c0_i32_0 = arith.constant 0 : i32
    %c0_i32_1 = arith.constant 0 : i32
    return %c0_i32, %c0_i32_0 : i32, i32
  }
  func.func @transform_7(%arg0: i32) -> (i32, i32) {
    %c0_i32 = arith.constant 0 : i32
    %c0_i32_0 = arith.constant 0 : i32
    %c0_i32_1 = arith.constant 0 : i32
    return %c0_i32, %c0_i32_0 : i32, i32
  }
  func.func @transform_8(%arg0: i32) -> (i32, i32) {
    %c0_i32 = arith.constant 0 : i32
    %c0_i32_0 = arith.constant 0 : i32
    %c0_i32_1 = arith.constant 0 : i32
    return %c0_i32, %c0_i32_0 : i32, i32
  }
}

</mosaic_0001>

<llo_original>
// kernel: transformer_forward.1
$region0: #{transformer_forward.1}
  #allocation0 [shape = 'u32[]', space=smem, size = 0x4, offset = 0x4, fixed_abs, tag = 'smem constant byte address 0x4 - core index']
  #allocation1 [shape = 'u32[144,128]{1,0:T(1,128)}', space=vmem, size = 0x12000, scoped, tag = 'internal scratch']
  #allocation2 [shape = 'f32[16,50]{1,0:T(8,128)}', space=vmem, size = 0x2000, scoped, tag = 'scratch operand']
  %s0 = inlined_call_operand.vmem [shape: f32[16,50], index: 0, kind: input, shape index: {}]
  %s1 = inlined_call_operand.vmem [shape: f32[3,6,50,25], index: 1, kind: input, shape index: {}]
  %s2 = inlined_call_operand.vmem [shape: f32[3,2,25,50], index: 2, kind: input, shape index: {}]
  %s3 = inlined_call_operand.vmem [shape: bf16[3,50,2048], index: 3, kind: input, shape index: {}]
  %s4 = inlined_call_operand.hbm [shape: bf16[3,50,2048], index: 4, kind: input, shape index: {}]
  %s5 = inlined_call_operand.vmem [shape: f32[3,1,3584], index: 5, kind: input, shape index: {}]
  %s6 = inlined_call_operand.vmem [shape: f32[1,50], index: 6, kind: input, shape index: {}]
  %s7 = inlined_call_operand.vmem [shape: f32[1,50], index: 7, kind: input, shape index: {}]
  %s8 = inlined_call_operand.hbm [shape: f32[8,100], index: 8, kind: output, shape index: {}]
  %s9 = sld [smem:[#allocation0]]
  $region77: #{transformer_forward.1} parent=0
    _
  %s11 = ssub.s32 1, %s9
  %s12 = scalar_select 0, %s11, %s9
  $region1: #{transformer_forward.1} parent=0
    #allocation3 [shape = 'u8[458752]{0}', space=vmem, size = 0x70000, scoped, tag = 'input window, operand 4']
    #allocation4 [shape = 's32[2]{0}', space=sflag, size = 0x8, scoped, tag = 'scoped memory for transformer_forward.1']
    #allocation5 [shape = 's32[2]{0}', space=sflag, size = 0x8, scoped, tag = 'scoped memory for transformer_forward.1']
    #allocation6 [shape = 'u8[4096]{0}', space=vmem, size = 0x1000, scoped, tag = 'output window, operand 0, single buffered']
    %13 = vsyncpa [#allocation4], 0
    %s14 = scalar_lea.sflag [#allocation4], 1
    %15 = vsyncpa %s14, 0
    %16 = vsyncpa [#allocation5], 0
    loop: start=0, step=1, limit=5
    $region2: #{transformer_forward.1} parent=1 // loop_pre_header
      _
    $region3: #{transformer_forward.1} parent=1 // loop_header
      %s18 = sphi 0, %s22
      %p19 = scmp.ge.s32.totalorder %s18, 5
      %s26 = sphi 0, %s26
      %s28 = sphi 0, %s26
      %s29 = sphi 0, %s28
      %s43 = sphi 0, %s29
      %s49 = sphi 0, %s51
      %s52 = sphi 0, %s49
      %s53 = sphi 0, %s52
      %s69 = sphi 0, %s53
      %s75 = sphi 0, %s77
      %s78 = sphi 0, %s75
      %s79 = sphi 0, %s78
      %s95 = sphi 0, %s79
      %s101 = sphi 0, %s103
      %s104 = sphi 0, %s101
      %s105 = sphi 0, %s104
      %s121 = sphi 0, %s105
      %s127 = sphi 0, %s129
      %s130 = sphi 0, %s127
      %s131 = sphi 0, %s130
      %s147 = sphi 0, %s131
      %s153 = sphi 0, %s155
      %s156 = sphi 0, %s153
      %s157 = sphi 0, %s156
      %s173 = sphi 0, %s157
      %s177 = sphi 0, %s177
      %s179 = sphi 0, %s177
      %s180 = sphi 0, %s179
      %s194 = sphi 0, %s180
      %s198 = sphi 0, %s198
      %s200 = sphi 0, %s198
      %s201 = sphi 0, %s200
      %s215 = sphi 0, %s201
      %s219 = sphi 0, %s219
      %s221 = sphi 0, %s219
      %s222 = sphi 0, %s221
      %s236 = sphi 0, %s222
    $region4: #{transformer_forward.1} parent=1 // loop_header_branch
      %21 = sbr.rel (%p19) target = $region8
    $region5: #{transformer_forward.1} parent=1 // loop_body
      %s23 = ssub.s32 %s18, 1
      %s24 = ssub.s32 %s18, 2
      %s25 = sadd.s32 %s18, 1
      %s27 = sadd.s32 %s26, 1
      %p30 = scmp.eq.s32.totalorder %s18, 2
      %p31 = scmp.ne.s32.totalorder %s26, %s28
      %p32 = scmp.eq.s32.totalorder %s18, 0
      %p33 = por %p31, %p32
      %p34 = scmp.ne.s32.totalorder %s26, %s28
      %p35 = scmp.eq.s32.totalorder %s23, 2
      %p36 = por %p34, %p35
      %p37 = scmp.ne.s32.totalorder %s28, %s29
      %p38 = scmp.eq.s32.totalorder %s23, 0
      %p39 = por %p37, %p38
      %p40 = scmp.ne.s32.totalorder %s28, %s29
      %p41 = scmp.eq.s32.totalorder %s24, 2
      %p42 = por %p40, %p41
      %p44 = scmp.ne.s32.totalorder %s29, %s43
      %p45 = scmp.eq.s32.totalorder %s24, 0
      %p46 = por %p44, %p45
      %s47 = ssub.s32 %s18, %s25
      %p48 = scmp.eq.s32.totalorder %s47, 0
      %s50 = sadd.s32 %s49, 1
      %s51 = scalar_select %p48, %s49, %s50
      %p54 = pneg %p48
      %p55 = scmp.eq.s32.totalorder %s18, 2
      %p56 = por %p54, %p55
      %p57 = scmp.ne.s32.totalorder %s49, %s52
      %p58 = scmp.eq.s32.totalorder %s18, 0
      %p59 = por %p57, %p58
      %p60 = scmp.ne.s32.totalorder %s49, %s52
      %p61 = scmp.eq.s32.totalorder %s23, 2
      %p62 = por %p60, %p61
      %p63 = scmp.ne.s32.totalorder %s52, %s53
      %p64 = scmp.eq.s32.totalorder %s23, 0
      %p65 = por %p63, %p64
      %p66 = scmp.ne.s32.totalorder %s52, %s53
      %p67 = scmp.eq.s32.totalorder %s24, 2
      %p68 = por %p66, %p67
      %p70 = scmp.ne.s32.totalorder %s53, %s69
      %p71 = scmp.eq.s32.totalorder %s24, 0
      %p72 = por %p70, %p71
      %s73 = ssub.s32 %s18, %s25
      %p74 = scmp.eq.s32.totalorder %s73, 0
      %s76 = sadd.s32 %s75, 1
      %s77 = scalar_select %p74, %s75, %s76
      %p80 = pneg %p74
      %p81 = scmp.eq.s32.totalorder %s18, 2
      %p82 = por %p80, %p81
      %p83 = scmp.ne.s32.totalorder %s75, %s78
      %p84 = scmp.eq.s32.totalorder %s18, 0
      %p85 = por %p83, %p84
      %p86 = scmp.ne.s32.totalorder %s75, %s78
      %p87 = scmp.eq.s32.totalorder %s23, 2
      %p88 = por %p86, %p87
      %p89 = scmp.ne.s32.totalorder %s78, %s79
      %p90 = scmp.eq.s32.totalorder %s23, 0
      %p91 = por %p89, %p90
      %p92 = scmp.ne.s32.totalorder %s78, %s79
      %p93 = scmp.eq.s32.totalorder %s24, 2
      %p94 = por %p92, %p93
      %p96 = scmp.ne.s32.totalorder %s79, %s95
      %p97 = scmp.eq.s32.totalorder %s24, 0
      %p98 = por %p96, %p97
      %s99 = ssub.s32 %s18, %s25
      %p100 = scmp.eq.s32.totalorder %s99, 0
      %s102 = sadd.s32 %s101, 1
      %s103 = scalar_select %p100, %s101, %s102
      %p106 = pneg %p100
      %p107 = scmp.eq.s32.totalorder %s18, 2
      %p108 = por %p106, %p107
      %p109 = scmp.ne.s32.totalorder %s101, %s104
      %p110 = scmp.eq.s32.totalorder %s18, 0
      %p111 = por %p109, %p110
      %p112 = scmp.ne.s32.totalorder %s101, %s104
      %p113 = scmp.eq.s32.totalorder %s23, 2
      %p114 = por %p112, %p113
      %p115 = scmp.ne.s32.totalorder %s104, %s105
      %p116 = scmp.eq.s32.totalorder %s23, 0
      %p117 = por %p115, %p116
      %p118 = scmp.ne.s32.totalorder %s104, %s105
      %p119 = scmp.eq.s32.totalorder %s24, 2
      %p120 = por %p118, %p119
      %p122 = scmp.ne.s32.totalorder %s105, %s121
      %p123 = scmp.eq.s32.totalorder %s24, 0
      %p124 = por %p122, %p123
      %s125 = ssub.s32 %s18, %s25
      %p126 = scmp.eq.s32.totalorder %s125, 0
      %s128 = sadd.s32 %s127, 1
      %s129 = scalar_select %p126, %s127, %s128
      %p132 = pneg %p126
      %p133 = scmp.eq.s32.totalorder %s18, 2
      %p134 = por %p132, %p133
      %p135 = scmp.ne.s32.totalorder %s127, %s130
      %p136 = scmp.eq.s32.totalorder %s18, 0
      %p137 = por %p135, %p136
      %p138 = scmp.ne.s32.totalorder %s127, %s130
      %p139 = scmp.eq.s32.totalorder %s23, 2
      %p140 = por %p138, %p139
      %p141 = scmp.ne.s32.totalorder %s130, %s131
      %p142 = scmp.eq.s32.totalorder %s23, 0
      %p143 = por %p141, %p142
      %p144 = scmp.ne.s32.totalorder %s130, %s131
      %p145 = scmp.eq.s32.totalorder %s24, 2
      %p146 = por %p144, %p145
      %p148 = scmp.ne.s32.totalorder %s131, %s147
      %p149 = scmp.eq.s32.totalorder %s24, 0
      %p150 = por %p148, %p149
      %s151 = ssub.s32 %s18, %s25
      %p152 = scmp.eq.s32.totalorder %s151, 0
      %s154 = sadd.s32 %s153, 1
      %s155 = scalar_select %p152, %s153, %s154
      %p158 = pneg %p152
      %p159 = scmp.eq.s32.totalorder %s18, 2
      %p160 = por %p158, %p159
      %p161 = scmp.ne.s32.totalorder %s153, %s156
      %p162 = scmp.eq.s32.totalorder %s18, 0
      %p163 = por %p161, %p162
      %p164 = scmp.ne.s32.totalorder %s153, %s156
      %p165 = scmp.eq.s32.totalorder %s23, 2
      %p166 = por %p164, %p165
      %p167 = scmp.ne.s32.totalorder %s156, %s157
      %p168 = scmp.eq.s32.totalorder %s23, 0
      %p169 = por %p167, %p168
      %p170 = scmp.ne.s32.totalorder %s156, %s157
      %p171 = scmp.eq.s32.totalorder %s24, 2
      %p172 = por %p170, %p171
      %p174 = scmp.ne.s32.totalorder %s157, %s173
      %p175 = scmp.eq.s32.totalorder %s24, 0
      %p176 = por %p174, %p175
      %s178 = sadd.s32 %s177, 1
      %p181 = scmp.eq.s32.totalorder %s18, 2
      %p182 = scmp.ne.s32.totalorder %s177, %s179
      %p183 = scmp.eq.s32.totalorder %s18, 0
      %p184 = por %p182, %p183
      %p185 = scmp.ne.s32.totalorder %s177, %s179
      %p186 = scmp.eq.s32.totalorder %s23, 2
      %p187 = por %p185, %p186
      %p188 = scmp.ne.s32.totalorder %s179, %s180
      %p189 = scmp.eq.s32.totalorder %s23, 0
      %p190 = por %p188, %p189
      %p191 = scmp.ne.s32.totalorder %s179, %s180
      %p192 = scmp.eq.s32.totalorder %s24, 2
      %p193 = por %p191, %p192
      %p195 = scmp.ne.s32.totalorder %s180, %s194
      %p196 = scmp.eq.s32.totalorder %s24, 0
      %p197 = por %p195, %p196
      %s199 = sadd.s32 %s198, 1
      %p202 = scmp.eq.s32.totalorder %s18, 2
      %p203 = scmp.ne.s32.totalorder %s198, %s200
      %p204 = scmp.eq.s32.totalorder %s18, 0
      %p205 = por %p203, %p204
      %p206 = scmp.ne.s32.totalorder %s198, %s200
      %p207 = scmp.eq.s32.totalorder %s23, 2
      %p208 = por %p206, %p207
      %p209 = scmp.ne.s32.totalorder %s200, %s201
      %p210 = scmp.eq.s32.totalorder %s23, 0
      %p211 = por %p209, %p210
      %p212 = scmp.ne.s32.totalorder %s200, %s201
      %p213 = scmp.eq.s32.totalorder %s24, 2
      %p214 = por %p212, %p213
      %p216 = scmp.ne.s32.totalorder %s201, %s215
      %p217 = scmp.eq.s32.totalorder %s24, 0
      %p218 = por %p216, %p217
      %s220 = sadd.s32 %s219, 1
      %p223 = scmp.eq.s32.totalorder %s18, 2
      %p224 = scmp.ne.s32.totalorder %s219, %s221
      %p225 = scmp.eq.s32.totalorder %s18, 0
      %p226 = por %p224, %p225
      %p227 = scmp.ne.s32.totalorder %s219, %s221
      %p228 = scmp.eq.s32.totalorder %s23, 2
      %p229 = por %p227, %p228
      %p230 = scmp.ne.s32.totalorder %s221, %s222
      %p231 = scmp.eq.s32.totalorder %s23, 0
      %p232 = por %p230, %p231
      %p233 = scmp.ne.s32.totalorder %s221, %s222
      %p234 = scmp.eq.s32.totalorder %s24, 2
      %p235 = por %p233, %p234
      %p237 = scmp.ne.s32.totalorder %s222, %s236
      %p238 = scmp.eq.s32.totalorder %s24, 0
      %p239 = por %p237, %p238
      %p240 = scmp.le.s32.totalorder 1, %s18
      %p241 = scmp.lt.s32.totalorder %s18, 4
      %p242 = pnand %p240, %p241
      %p243 = pneg %p242
      // Predicated region
      $region9: #{transformer_forward.1} parent=5 // pred_check
        _
      $region10: #{transformer_forward.1} parent=5 // pred_check_branch
        %245 = sbr.rel (%p242) target = $region12
      $region11: #{transformer_forward.1} parent=5 // pred_region
        %s246 = ssub.s32 %s18, 1
        // Predicated region
        $region13: #{transformer_forward.1} parent=11 // pred_check
          %p247 = pneg %p39
        $region14: #{transformer_forward.1} parent=11 // pred_check_branch
          %249 = sbr.rel (%p247) target = $region16
        $region15: #{transformer_forward.1} parent=11 // pred_region
          _
        $region16: #{transformer_forward.1} parent=11 // pred_fallthru
          _
        // Predicated region
        $region17: #{transformer_forward.1} parent=11 // pred_check
          %p250 = pneg %p190
        $region18: #{transformer_forward.1} parent=11 // pred_check_branch
          %252 = sbr.rel (%p250) target = $region20
        $region19: #{transformer_forward.1} parent=11 // pred_region
          _
        $region20: #{transformer_forward.1} parent=11 // pred_fallthru
          _
        // Predicated region
        $region21: #{transformer_forward.1} parent=11 // pred_check
          %p253 = pneg %p211
        $region22: #{transformer_forward.1} parent=11 // pred_check_branch
          %255 = sbr.rel (%p253) target = $region24
        $region23: #{transformer_forward.1} parent=11 // pred_region
          _
        $region24: #{transformer_forward.1} parent=11 // pred_fallthru
          _
      $region12: #{transformer_forward.1} parent=5 // pred_fallthru
        _
      %p256 = scmp.lt.s32.totalorder %s18, 3
      // Predicated region
      $region25: #{transformer_forward.1} parent=5 // pred_check
        %p257 = pneg %p256
      $region26: #{transformer_forward.1} parent=5 // pred_check_branch
        %259 = sbr.rel (%p257) target = $region28
      $region27: #{transformer_forward.1} parent=5 // pred_region
        // Predicated region
        $region29: #{transformer_forward.1} parent=27 // pred_check
          %p260 = pneg %p59
        $region30: #{transformer_forward.1} parent=27 // pred_check_branch
          %262 = sbr.rel (%p260) target = $region32
        $region31: #{transformer_forward.1} parent=27 // pred_region
          %p263 = scmp.lt.s32.totalorder %s18, 2
          %s264 = scalar_select %p263, %s18, 2
          %s265 = smul.addr %s264, 42
          %s266 = smul.addr %s265, 8
          %s267 = scalar_lea.vmem %s1, %s266
        $region32: #{transformer_forward.1} parent=27 // pred_fallthru
          _
        // Predicated region
        $region33: #{transformer_forward.1} parent=27 // pred_check
          %p268 = pneg %p85
        $region34: #{transformer_forward.1} parent=27 // pred_check_branch
          %270 = sbr.rel (%p268) target = $region36
        $region35: #{transformer_forward.1} parent=27 // pred_region
          %p271 = scmp.lt.s32.totalorder %s18, 2
          %s272 = scalar_select %p271, %s18, 2
          %s273 = smul.addr %s272, 8
          %s274 = smul.addr %s273, 8
          %s275 = scalar_lea.vmem %s2, %s274
        $region36: #{transformer_forward.1} parent=27 // pred_fallthru
          _
        // Predicated region
        $region37: #{transformer_forward.1} parent=27 // pred_check
          %p276 = pneg %p111
        $region38: #{transformer_forward.1} parent=27 // pred_check_branch
          %278 = sbr.rel (%p276) target = $region40
        $region39: #{transformer_forward.1} parent=27 // pred_region
          %p279 = scmp.lt.s32.totalorder %s18, 2
          %s280 = scalar_select %p279, %s18, 2
          %s281 = smul.addr %s280, 112
          %s282 = smul.addr %s281, 4
          %s283 = scalar_lea.vmem %s3, %s282
        $region40: #{transformer_forward.1} parent=27 // pred_fallthru
          _
        // Predicated region
        $region41: #{transformer_forward.1} parent=27 // pred_check
          %p284 = pneg %p137
        $region42: #{transformer_forward.1} parent=27 // pred_check_branch
          %286 = sbr.rel (%p284) target = $region44
        $region43: #{transformer_forward.1} parent=27 // pred_region
          %s287 = sand.u32 %s127, 1
          %s288 = scalar_lea.sflag [#allocation4], %s287
          %s289 = sand.u32 %s127, 1
          %s290 = smul.addr %s289, 448
          %s291 = scalar_lea.vmem [#allocation3], %s290
          %s293 = ssub.s32 7168, 7168
          %294 = vsyncadd %s288, %s293
          %s295 = smul.addr %s18, 112
          %s296 = smul.addr %s295, 64
          %s297 = scalar_lea.hbm %s4, %s296
          %s298 = sshll.u32 %s291, 4
          %s299 = int_to_ptr.vmem [resolvable:$true] %s298
          %304 = dma.hbm_to_vmem [thread:$0]  %s297, 7168, %s299, %s288, 1024, 1024, 64
        $region44: #{transformer_forward.1} parent=27 // pred_fallthru
          _
        // Predicated region
        $region45: #{transformer_forward.1} parent=27 // pred_check
          %p305 = pneg %p163
        $region46: #{transformer_forward.1} parent=27 // pred_check_branch
          %307 = sbr.rel (%p305) target = $region48
        $region47: #{transformer_forward.1} parent=27 // pred_region
          %p308 = scmp.lt.s32.totalorder %s18, 2
          %s309 = scalar_select %p308, %s18, 2
          %s310 = smul.addr %s309, 28
          %s311 = scalar_lea.vmem %s5, %s310
        $region48: #{transformer_forward.1} parent=27 // pred_fallthru
          _
      $region28: #{transformer_forward.1} parent=5 // pred_fallthru
        _
      %p312 = scmp.le.s32.totalorder 1, %s18
      %p313 = scmp.lt.s32.totalorder %s18, 4
      %p314 = pnand %p312, %p313
      %p315 = pneg %p314
      // Predicated region
      $region49: #{transformer_forward.1} parent=5 // pred_check
        _
      $region50: #{transformer_forward.1} parent=5 // pred_check_branch
        %317 = sbr.rel (%p314) target = $region52
      $region51: #{transformer_forward.1} parent=5 // pred_region
        %s318 = ssub.s32 %s18, 1
        %s319 = sand.u32 %s130, 1
        %s320 = scalar_lea.sflag [#allocation4], %s319
        %s321 = sand.u32 %s130, 1
        %s322 = smul.addr %s321, 448
        %s323 = scalar_lea.vmem [#allocation3], %s322
        // Predicated region
        $region53: #{transformer_forward.1} parent=51 // pred_check
          %p324 = pneg %p143
        $region54: #{transformer_forward.1} parent=51 // pred_check_branch
          %326 = sbr.rel (%p324) target = $region56
        $region55: #{transformer_forward.1} parent=51 // pred_region
          %327 = dma.done %s320, 7168
        $region56: #{transformer_forward.1} parent=51 // pred_fallthru
          _
        %p328 = pneg %p39
        %p329 = pneg %p36
        %p330 = scmp.lt.s32.totalorder %s23, 2
        %s331 = scalar_select %p330, %s23, 2
        %s332 = smul.addr %s331, 42
        %s333 = smul.addr %s332, 8
        %s334 = scalar_lea.vmem %s1, %s333
        %p335 = pneg %p65
        %p336 = pneg %p62
        %p337 = scmp.lt.s32.totalorder %s23, 2
        %s338 = scalar_select %p337, %s23, 2
        %s339 = smul.addr %s338, 8
        %s340 = smul.addr %s339, 8
        %s341 = scalar_lea.vmem %s2, %s340
        %p342 = pneg %p91
        %p343 = pneg %p88
        %p344 = scmp.lt.s32.totalorder %s23, 2
        %s345 = scalar_select %p344, %s23, 2
        %s346 = smul.addr %s345, 112
        %s347 = smul.addr %s346, 4
        %s348 = scalar_lea.vmem %s3, %s347
        %p349 = pneg %p117
        %p350 = pneg %p114
        %s351 = sand.u32 %s130, 1
        %s352 = scalar_lea.sflag [#allocation4], %s351
        %s353 = sand.u32 %s130, 1
        %s354 = smul.addr %s353, 448
        %s355 = scalar_lea.vmem [#allocation3], %s354
        %p356 = pneg %p143
        %p357 = pneg %p140
        %p358 = scmp.lt.s32.totalorder %s23, 2
        %s359 = scalar_select %p358, %s23, 2
        %s360 = smul.addr %s359, 28
        %s361 = scalar_lea.vmem %s5, %s360
        %p362 = pneg %p169
        %p363 = pneg %p166
        %p364 = pneg %p190
        %p365 = pneg %p187
        %p366 = pneg %p211
        %p367 = pneg %p208
        %p368 = pneg %p232
        %p369 = pneg %p229
        %p370 = scmp.lt.s32.totalorder %s23, 2
        %s371 = scalar_select %p370, %s23, 2
        %s372 = smul.addr %s371, 42
        %s373 = smul.addr %s372, 8
        %s374 = scalar_lea.vmem %s1, %s373
        %p375 = scmp.lt.s32.totalorder %s23, 2
        %s376 = scalar_select %p375, %s23, 2
        %s377 = smul.addr %s376, 8
        %s378 = smul.addr %s377, 8
        %s379 = scalar_lea.vmem %s2, %s378
        %p380 = scmp.lt.s32.totalorder %s23, 2
        %s381 = scalar_select %p380, %s23, 2
        %s382 = smul.addr %s381, 112
        %s383 = smul.addr %s382, 4
        %s384 = scalar_lea.vmem %s3, %s383
        %p385 = scmp.lt.s32.totalorder %s23, 2
        %s386 = scalar_select %p385, %s23, 2
        %s387 = smul.addr %s386, 28
        %s388 = scalar_lea.vmem %s5, %s387
        %p390 = scmp.eq.s32.totalorder %s23, 0
        // Predicated region
        $region57: #{transformer_forward.1} parent=51 // pred_check
          %p391 = pneg %p390
        $region58: #{transformer_forward.1} parent=51 // pred_check_branch
          %393 = sbr.rel (%p391) target = $region60
        $region59: #{transformer_forward.1} parent=51 // pred_region
          %v394 = vld [vmem:[%s0] sm:$0xff]
          %v395 = vld [vmem:[%s0 + $0x8] sm:$0xff]
          %vm396 = vcmask 408576
          %397 = vst.msk [vmem:[#allocation2] sm:$0xff] %vm396, %v394
          %398 = vst.msk [vmem:[#allocation2 + $0x8] sm:$0xff] %vm396, %v395
        $region60: #{transformer_forward.1} parent=51 // pred_fallthru
          _
        %v399 = vld [vmem:[#allocation2] sm:$0xff]
        %v400 = vld [vmem:[#allocation2 + $0x8] sm:$0xff]
        %v401 = vld [vmem:[%s374] sm:$0xff]
        %v402 = vld [vmem:[%s374 + $0x8] sm:$0xff]
        %v403 = vld [vmem:[%s374 + $0x10] sm:$0xff]
        %v404 = vld [vmem:[%s374 + $0x18] sm:$0xff]
        %v405 = vld [vmem:[%s374 + $0x20] sm:$0xff]
        %v406 = vld [vmem:[%s374 + $0x28] sm:$0xff]
        %v407 = vld [vmem:[%s374 + $0x30] sm:$0x3]
        %v408 = vld [vmem:[%s388] sm:$0x1]
        %v410 = vlaneseq
        %v411 = vshrl.u32 %v410, 7
        %v412 = vsub.s32 0, %v411
        %v413 = vrot.slane %v408, %v412
        %vm415 = vcmask 408576
        %v417 = vsel %vm415, %v399, 0
        %v420 = vsel %vm415, %v400, 0
        %vm422 = vcmask 1041408
        %v424 = vsel %vm422, %v407, 0
        %426 = vmatprep.subr.mxu0 0.0
        %427 = vmatpush1.msra.mxu0 0.0
        %428 = vmatprep.subr.mxu0 0.0
        %429 = vmatpush1.msra.mxu0 0.0
        %430 = vmatprep.subr.mxu0 0.0
        %431 = vmatpush1.msra.mxu0 0.0
        %432 = vmatprep.subr.mxu0 0.0
        %433 = vmatpush1.msra.mxu0 0.0
        %434 = vmatprep.subr.mxu0 0.0
        %435 = vmatpush1.msra.mxu0 0.0
        %436 = vmatprep.subr.mxu0 0.0
        %437 = vmatpush1.msra.mxu0 0.0
        %438 = vmatprep.subr.mxu0 0.0
        %439 = vmatpush1.msra.mxu0 0.0
        %440 = vmatprep.subr.mxu0 0.0
        %441 = vmatpush1.msra.mxu0 0.0
        %442 = vmatprep.subr.mxu0 0.0
        %443 = vmatpush1.msra.mxu0 0.0
        %444 = vmatprep.subr.mxu0 0.0
        %445 = vmatpush1.msra.mxu0 %v424
        %446 = vmatprep.subr.mxu0 0.0
        %447 = vmatpush1.msra.mxu0 %v406
        %448 = vmatprep.subr.mxu0 0.0
        %449 = vmatpush1.msra.mxu0 %v405
        %450 = vmatprep.subr.mxu0 0.0
        %451 = vmatpush1.msra.mxu0 %v404
        %452 = vmatprep.subr.mxu0 0.0
        %453 = vmatpush1.msra.mxu0 %v403
        %454 = vmatprep.subr.mxu0 0.0
        %455 = vmatpush1.msra.mxu0 %v402
        %456 = vmatprep.subr.mxu0 0.0
        %457 = vmatpush1.msra.mxu0 %v401
        %458 = vmatprep.subr.mxu0 0.0
        %459 = vmatpush2.msra.mxu0 0.0
        %460 = vmatprep.subr.mxu0 0.0
        %461 = vmatpush2.msra.mxu0 0.0
        %462 = vmatprep.subr.mxu0 0.0
        %463 = vmatpush2.msra.mxu0 0.0
        %464 = vmatprep.subr.mxu0 0.0
        %465 = vmatpush2.msra.mxu0 0.0
        %466 = vmatprep.subr.mxu0 0.0
        %467 = vmatpush2.msra.mxu0 0.0
        %468 = vmatprep.subr.mxu0 0.0
        %469 = vmatpush2.msra.mxu0 0.0
        %470 = vmatprep.subr.mxu0 0.0
        %471 = vmatpush2.msra.mxu0 0.0
        %472 = vmatprep.subr.mxu0 0.0
        %473 = vmatpush2.msra.mxu0 0.0
        %474 = vmatprep.subr.mxu0 0.0
        %475 = vmatpush2.msra.mxu0 0.0
        %476 = vmatprep.subr.mxu0 0.0
        %477 = vmatpush2.msra.mxu0 0.0
        %478 = vmatprep.subr.mxu0 0.0
        %479 = vmatpush2.msra.mxu0 0.0
        %480 = vmatprep.subr.mxu0 0.0
        %481 = vmatpush2.msra.mxu0 0.0
        %482 = vmatprep.subr.mxu0 0.0
        %483 = vmatpush2.msra.mxu0 0.0
        %484 = vmatprep.subr.mxu0 0.0
        %485 = vmatpush2.msra.mxu0 0.0
        %486 = vmatprep.subr.mxu0 0.0
        %487 = vmatpush2.msra.mxu0 0.0
        %488 = vmatprep.subr.mxu0 0.0
        %489 = vmatpush2.msra.mxu0 0.0
        %490 = vmatprep.mubr.f32.mxu0 0.0
        %491 = vmatmul.mubr.f32.gmra.mxu0 %v417
        %v492 = vpop.f32.mrf.mxu0
        %v493 = vadd.f32 %v413, %v492
        %v494 = vpop.f32.mrf.mxu0
        %495 = vmatprep.mubr.f32.mxu0 0.0
        %496 = vmatmul.mubr.f32.gmra.mxu0 %v420
        %v497 = vpop.f32.mrf.mxu0
        %v498 = vadd.f32 %v413, %v497
        %v499 = vpop.f32.mrf.mxu0
        %500 = vdwg.mxu0
        %s501 = scalar_lea.vmem %s374, 112
        %v502 = vld [vmem:[%s501] sm:$0xff]
        %v503 = vld [vmem:[%s501 + $0x8] sm:$0xff]
        %v504 = vld [vmem:[%s501 + $0x10] sm:$0xff]
        %v505 = vld [vmem:[%s501 + $0x18] sm:$0xff]
        %v506 = vld [vmem:[%s501 + $0x20] sm:$0xff]
        %v507 = vld [vmem:[%s501 + $0x28] sm:$0xff]
        %v508 = vld [vmem:[%s501 + $0x30] sm:$0x3]
        %v509 = vld [vmem:[%s388 + $0x2] sm:$0x1]
        %v511 = vlaneseq
        %v512 = vshrl.u32 %v511, 7
        %v513 = vsub.s32 0, %v512
        %v514 = vrot.slane %v509, %v513
        %v517 = vsel %vm422, %v508, 0
        %519 = vmatprep.subr.mxu0 0.0
        %520 = vmatpush1.msra.mxu0 0.0
        %521 = vmatprep.subr.mxu0 0.0
        %522 = vmatpush1.msra.mxu0 0.0
        %523 = vmatprep.subr.mxu0 0.0
        %524 = vmatpush1.msra.mxu0 0.0
        %525 = vmatprep.subr.mxu0 0.0
        %526 = vmatpush1.msra.mxu0 0.0
        %527 = vmatprep.subr.mxu0 0.0
        %528 = vmatpush1.msra.mxu0 0.0
        %529 = vmatprep.subr.mxu0 0.0
        %530 = vmatpush1.msra.mxu0 0.0
        %531 = vmatprep.subr.mxu0 0.0
        %532 = vmatpush1.msra.mxu0 0.0
        %533 = vmatprep.subr.mxu0 0.0
        %534 = vmatpush1.msra.mxu0 0.0
        %535 = vmatprep.subr.mxu0 0.0
        %536 = vmatpush1.msra.mxu0 0.0
        %537 = vmatprep.subr.mxu0 0.0
        %538 = vmatpush1.msra.mxu0 %v517
        %539 = vmatprep.subr.mxu0 0.0
        %540 = vmatpush1.msra.mxu0 %v507
        %541 = vmatprep.subr.mxu0 0.0
        %542 = vmatpush1.msra.mxu0 %v506
        %543 = vmatprep.subr.mxu0 0.0
        %544 = vmatpush1.msra.mxu0 %v505
        %545 = vmatprep.subr.mxu0 0.0
        %546 = vmatpush1.msra.mxu0 %v504
        %547 = vmatprep.subr.mxu0 0.0
        %548 = vmatpush1.msra.mxu0 %v503
        %549 = vmatprep.subr.mxu0 0.0
        %550 = vmatpush1.msra.mxu0 %v502
        %551 = vmatprep.subr.mxu0 0.0
        %552 = vmatpush2.msra.mxu0 0.0
        %553 = vmatprep.subr.mxu0 0.0
        %554 = vmatpush2.msra.mxu0 0.0
        %555 = vmatprep.subr.mxu0 0.0
        %556 = vmatpush2.msra.mxu0 0.0
        %557 = vmatprep.subr.mxu0 0.0
        %558 = vmatpush2.msra.mxu0 0.0
        %559 = vmatprep.subr.mxu0 0.0
        %560 = vmatpush2.msra.mxu0 0.0
        %561 = vmatprep.subr.mxu0 0.0
        %562 = vmatpush2.msra.mxu0 0.0
        %563 = vmatprep.subr.mxu0 0.0
        %564 = vmatpush2.msra.mxu0 0.0
        %565 = vmatprep.subr.mxu0 0.0
        %566 = vmatpush2.msra.mxu0 0.0
        %567 = vmatprep.subr.mxu0 0.0
        %568 = vmatpush2.msra.mxu0 0.0
        %569 = vmatprep.subr.mxu0 0.0
        %570 = vmatpush2.msra.mxu0 0.0
        %571 = vmatprep.subr.mxu0 0.0
        %572 = vmatpush2.msra.mxu0 0.0
        %573 = vmatprep.subr.mxu0 0.0
        %574 = vmatpush2.msra.mxu0 0.0
        %575 = vmatprep.subr.mxu0 0.0
        %576 = vmatpush2.msra.mxu0 0.0
        %577 = vmatprep.subr.mxu0 0.0
        %578 = vmatpush2.msra.mxu0 0.0
        %579 = vmatprep.subr.mxu0 0.0
        %580 = vmatpush2.msra.mxu0 0.0
        %581 = vmatprep.subr.mxu0 0.0
        %582 = vmatpush2.msra.mxu0 0.0
        %583 = vmatprep.mubr.f32.mxu0 0.0
        %584 = vmatmul.mubr.f32.gmra.mxu0 %v417
        %v585 = vpop.f32.mrf.mxu0
        %v586 = vadd.f32 %v514, %v585
        %v587 = vpop.f32.mrf.mxu0
        %588 = vmatprep.mubr.f32.mxu0 0.0
        %589 = vmatmul.mubr.f32.gmra.mxu0 %v420
        %v590 = vpop.f32.mrf.mxu0
        %v591 = vadd.f32 %v514, %v590
        %v592 = vpop.f32.mrf.mxu0
        %593 = vdwg.mxu0
        %s594 = scalar_lea.vmem %s374, 224
        %v595 = vld [vmem:[%s594] sm:$0xff]
        %v596 = vld [vmem:[%s594 + $0x8] sm:$0xff]
        %v597 = vld [vmem:[%s594 + $0x10] sm:$0xff]
        %v598 = vld [vmem:[%s594 + $0x18] sm:$0xff]
        %v599 = vld [vmem:[%s594 + $0x20] sm:$0xff]
        %v600 = vld [vmem:[%s594 + $0x28] sm:$0xff]
        %v601 = vld [vmem:[%s594 + $0x30] sm:$0x3]
        %v602 = vld [vmem:[%s388 + $0x4] sm:$0x1]
        %v604 = vlaneseq
        %v605 = vshrl.u32 %v604, 7
        %v606 = vsub.s32 0, %v605
        %v607 = vrot.slane %v602, %v606
        %v610 = vsel %vm422, %v601, 0
        %612 = vmatprep.subr.mxu0 0.0
        %613 = vmatpush1.msra.mxu0 0.0
        %614 = vmatprep.subr.mxu0 0.0
        %615 = vmatpush1.msra.mxu0 0.0
        %616 = vmatprep.subr.mxu0 0.0
        %617 = vmatpush1.msra.mxu0 0.0
        %618 = vmatprep.subr.mxu0 0.0
        %619 = vmatpush1.msra.mxu0 0.0
        %620 = vmatprep.subr.mxu0 0.0
        %621 = vmatpush1.msra.mxu0 0.0
        %622 = vmatprep.subr.mxu0 0.0
        %623 = vmatpush1.msra.mxu0 0.0
        %624 = vmatprep.subr.mxu0 0.0
        %625 = vmatpush1.msra.mxu0 0.0
        %626 = vmatprep.subr.mxu0 0.0
        %627 = vmatpush1.msra.mxu0 0.0
        %628 = vmatprep.subr.mxu0 0.0
        %629 = vmatpush1.msra.mxu0 0.0
        %630 = vmatprep.subr.mxu0 0.0
        %631 = vmatpush1.msra.mxu0 %v610
        %632 = vmatprep.subr.mxu0 0.0
        %633 = vmatpush1.msra.mxu0 %v600
        %634 = vmatprep.subr.mxu0 0.0
        %635 = vmatpush1.msra.mxu0 %v599
        %636 = vmatprep.subr.mxu0 0.0
        %637 = vmatpush1.msra.mxu0 %v598
        %638 = vmatprep.subr.mxu0 0.0
        %639 = vmatpush1.msra.mxu0 %v597
        %640 = vmatprep.subr.mxu0 0.0
        %641 = vmatpush1.msra.mxu0 %v596
        %642 = vmatprep.subr.mxu0 0.0
        %643 = vmatpush1.msra.mxu0 %v595
        %644 = vmatprep.subr.mxu0 0.0
        %645 = vmatpush2.msra.mxu0 0.0
        %646 = vmatprep.subr.mxu0 0.0
        %647 = vmatpush2.msra.mxu0 0.0
        %648 = vmatprep.subr.mxu0 0.0
        %649 = vmatpush2.msra.mxu0 0.0
        %650 = vmatprep.subr.mxu0 0.0
        %651 = vmatpush2.msra.mxu0 0.0
        %652 = vmatprep.subr.mxu0 0.0
        %653 = vmatpush2.msra.mxu0 0.0
        %654 = vmatprep.subr.mxu0 0.0
        %655 = vmatpush2.msra.mxu0 0.0
        %656 = vmatprep.subr.mxu0 0.0
        %657 = vmatpush2.msra.mxu0 0.0
        %658 = vmatprep.subr.mxu0 0.0
        %659 = vmatpush2.msra.mxu0 0.0
        %660 = vmatprep.subr.mxu0 0.0
        %661 = vmatpush2.msra.mxu0 0.0
        %662 = vmatprep.subr.mxu0 0.0
        %663 = vmatpush2.msra.mxu0 0.0
        %664 = vmatprep.subr.mxu0 0.0
        %665 = vmatpush2.msra.mxu0 0.0
        %666 = vmatprep.subr.mxu0 0.0
        %667 = vmatpush2.msra.mxu0 0.0
        %668 = vmatprep.subr.mxu0 0.0
        %669 = vmatpush2.msra.mxu0 0.0
        %670 = vmatprep.subr.mxu0 0.0
        %671 = vmatpush2.msra.mxu0 0.0
        %672 = vmatprep.subr.mxu0 0.0
        %673 = vmatpush2.msra.mxu0 0.0
        %674 = vmatprep.subr.mxu0 0.0
        %675 = vmatpush2.msra.mxu0 0.0
        %676 = vmatprep.mubr.f32.mxu0 0.0
        %677 = vmatmul.mubr.f32.gmra.mxu0 %v417
        %v678 = vpop.f32.mrf.mxu0
        %v679 = vadd.f32 %v607, %v678
        %v680 = vpop.f32.mrf.mxu0
        %681 = vmatprep.mubr.f32.mxu0 0.0
        %682 = vmatmul.mubr.f32.gmra.mxu0 %v420
        %v683 = vpop.f32.mrf.mxu0
        %v684 = vadd.f32 %v607, %v683
        %v685 = vpop.f32.mrf.mxu0
        %686 = vdwg.mxu0
        %vm687 = vcmask 203776
        %v689 = vsel %vm687, %v493, 0
        %v692 = vsel %vm687, %v586, 0
        %694 = vmatprep.subr.mxu0 0.0
        %695 = vmatpush1.xpose.msra.mxu0 0.0
        %696 = vmatprep.subr.mxu0 0.0
        %697 = vmatpush1.xpose.msra.mxu0 0.0
        %698 = vmatprep.subr.mxu0 0.0
        %699 = vmatpush1.xpose.msra.mxu0 0.0
        %700 = vmatprep.subr.mxu0 0.0
        %701 = vmatpush1.xpose.msra.mxu0 0.0
        %702 = vmatprep.subr.mxu0 0.0
        %703 = vmatpush1.xpose.msra.mxu0 0.0
        %704 = vmatprep.subr.mxu0 0.0
        %705 = vmatpush1.xpose.msra.mxu0 0.0
        %706 = vmatprep.subr.mxu0 0.0
        %707 = vmatpush1.xpose.msra.mxu0 0.0
        %708 = vmatprep.subr.mxu0 0.0
        %709 = vmatpush1.xpose.msra.mxu0 0.0
        %710 = vmatprep.subr.mxu0 0.0
        %711 = vmatpush1.xpose.msra.mxu0 0.0
        %712 = vmatprep.subr.mxu0 0.0
        %713 = vmatpush1.xpose.msra.mxu0 0.0
        %714 = vmatprep.subr.mxu0 0.0
        %715 = vmatpush1.xpose.msra.mxu0 0.0
        %716 = vmatprep.subr.mxu0 0.0
        %717 = vmatpush1.xpose.msra.mxu0 0.0
        %718 = vmatprep.subr.mxu0 0.0
        %719 = vmatpush1.xpose.msra.mxu0 0.0
        %720 = vmatprep.subr.mxu0 0.0
        %721 = vmatpush1.xpose.msra.mxu0 0.0
        %722 = vmatprep.subr.mxu0 0.0
        %723 = vmatpush1.xpose.msra.mxu0 0.0
        %724 = vmatprep.subr.mxu0 0.0
        %725 = vmatpush1.xpose.msra.mxu0 %v692
        %726 = vmatprep.subr.mxu0 0.0
        %727 = vmatpush2.xpose.msra.mxu0 0.0
        %728 = vmatprep.subr.mxu0 0.0
        %729 = vmatpush2.xpose.msra.mxu0 0.0
        %730 = vmatprep.subr.mxu0 0.0
        %731 = vmatpush2.xpose.msra.mxu0 0.0
        %732 = vmatprep.subr.mxu0 0.0
        %733 = vmatpush2.xpose.msra.mxu0 0.0
        %734 = vmatprep.subr.mxu0 0.0
        %735 = vmatpush2.xpose.msra.mxu0 0.0
        %736 = vmatprep.subr.mxu0 0.0
        %737 = vmatpush2.xpose.msra.mxu0 0.0
        %738 = vmatprep.subr.mxu0 0.0
        %739 = vmatpush2.xpose.msra.mxu0 0.0
        %740 = vmatprep.subr.mxu0 0.0
        %741 = vmatpush2.xpose.msra.mxu0 0.0
        %742 = vmatprep.subr.mxu0 0.0
        %743 = vmatpush2.xpose.msra.mxu0 0.0
        %744 = vmatprep.subr.mxu0 0.0
        %745 = vmatpush2.xpose.msra.mxu0 0.0
        %746 = vmatprep.subr.mxu0 0.0
        %747 = vmatpush2.xpose.msra.mxu0 0.0
        %748 = vmatprep.subr.mxu0 0.0
        %749 = vmatpush2.xpose.msra.mxu0 0.0
        %750 = vmatprep.subr.mxu0 0.0
        %751 = vmatpush2.xpose.msra.mxu0 0.0
        %752 = vmatprep.subr.mxu0 0.0
        %753 = vmatpush2.xpose.msra.mxu0 0.0
        %754 = vmatprep.subr.mxu0 0.0
        %755 = vmatpush2.xpose.msra.mxu0 0.0
        %756 = vmatprep.subr.mxu0 0.0
        %757 = vmatpush2.xpose.msra.mxu0 0.0
        %758 = vmatprep.mubr.f32.mxu0 0.0
        %759 = vmatmul.mubr.f32.gmra.mxu0 %v689
        %v760 = vpop.f32.mrf.mxu0
        %v761 = vadd.f32 0.0, %v760
        %v762 = vpop.f32.mrf.mxu0
        %763 = vdwg.mxu0
        %v765 = vsel %vm687, %v498, 0
        %v768 = vsel %vm687, %v591, 0
        %770 = vmatprep.subr.mxu0 0.0
        %771 = vmatpush1.xpose.msra.mxu0 0.0
        %772 = vmatprep.subr.mxu0 0.0
        %773 = vmatpush1.xpose.msra.mxu0 0.0
        %774 = vmatprep.subr.mxu0 0.0
        %775 = vmatpush1.xpose.msra.mxu0 0.0
        %776 = vmatprep.subr.mxu0 0.0
        %777 = vmatpush1.xpose.msra.mxu0 0.0
        %778 = vmatprep.subr.mxu0 0.0
        %779 = vmatpush1.xpose.msra.mxu0 0.0
        %780 = vmatprep.subr.mxu0 0.0
        %781 = vmatpush1.xpose.msra.mxu0 0.0
        %782 = vmatprep.subr.mxu0 0.0
        %783 = vmatpush1.xpose.msra.mxu0 0.0
        %784 = vmatprep.subr.mxu0 0.0
        %785 = vmatpush1.xpose.msra.mxu0 0.0
        %786 = vmatprep.subr.mxu0 0.0
        %787 = vmatpush1.xpose.msra.mxu0 0.0
        %788 = vmatprep.subr.mxu0 0.0
        %789 = vmatpush1.xpose.msra.mxu0 0.0
        %790 = vmatprep.subr.mxu0 0.0
        %791 = vmatpush1.xpose.msra.mxu0 0.0
        %792 = vmatprep.subr.mxu0 0.0
        %793 = vmatpush1.xpose.msra.mxu0 0.0
        %794 = vmatprep.subr.mxu0 0.0
        %795 = vmatpush1.xpose.msra.mxu0 0.0
        %796 = vmatprep.subr.mxu0 0.0
        %797 = vmatpush1.xpose.msra.mxu0 0.0
        %798 = vmatprep.subr.mxu0 0.0
        %799 = vmatpush1.xpose.msra.mxu0 0.0
        %800 = vmatprep.subr.mxu0 0.0
        %801 = vmatpush1.xpose.msra.mxu0 %v768
        %802 = vmatprep.subr.mxu0 0.0
        %803 = vmatpush2.xpose.msra.mxu0 0.0
        %804 = vmatprep.subr.mxu0 0.0
        %805 = vmatpush2.xpose.msra.mxu0 0.0
        %806 = vmatprep.subr.mxu0 0.0
        %807 = vmatpush2.xpose.msra.mxu0 0.0
        %808 = vmatprep.subr.mxu0 0.0
        %809 = vmatpush2.xpose.msra.mxu0 0.0
        %810 = vmatprep.subr.mxu0 0.0
        %811 = vmatpush2.xpose.msra.mxu0 0.0
        %812 = vmatprep.subr.mxu0 0.0
        %813 = vmatpush2.xpose.msra.mxu0 0.0
        %814 = vmatprep.subr.mxu0 0.0
        %815 = vmatpush2.xpose.msra.mxu0 0.0
        %816 = vmatprep.subr.mxu0 0.0
        %817 = vmatpush2.xpose.msra.mxu0 0.0
        %818 = vmatprep.subr.mxu0 0.0
        %819 = vmatpush2.xpose.msra.mxu0 0.0
        %820 = vmatprep.subr.mxu0 0.0
        %821 = vmatpush2.xpose.msra.mxu0 0.0
        %822 = vmatprep.subr.mxu0 0.0
        %823 = vmatpush2.xpose.msra.mxu0 0.0
        %824 = vmatprep.subr.mxu0 0.0
        %825 = vmatpush2.xpose.msra.mxu0 0.0
        %826 = vmatprep.subr.mxu0 0.0
        %827 = vmatpush2.xpose.msra.mxu0 0.0
        %828 = vmatprep.subr.mxu0 0.0
        %829 = vmatpush2.xpose.msra.mxu0 0.0
        %830 = vmatprep.subr.mxu0 0.0
        %831 = vmatpush2.xpose.msra.mxu0 0.0
        %832 = vmatprep.subr.mxu0 0.0
        %833 = vmatpush2.xpose.msra.mxu0 0.0
        %834 = vmatprep.mubr.f32.mxu0 0.0
        %835 = vmatmul.mubr.f32.gmra.mxu0 %v765
        %v836 = vpop.f32.mrf.mxu0
        %v837 = vadd.f32 0.0, %v836
        %v838 = vpop.f32.mrf.mxu0
        %839 = vdwg.mxu0
        %vm840 = vcmask 64512
        %v841 = vsel %vm840, %v761, -inf
        %842 = vmax.xlane.f32.xlu0 %v841
        %v843 = vpop.xlane.xlu0 %842
        %v844 = vsel %vm840, %v837, -inf
        %845 = vmax.xlane.f32.xlu0 %v844
        %v846 = vpop.xlane.xlu0 %845
        %v847 = vsub.f32 %v761, %v843
        %v848 = vsub.f32 %v837, %v846
        %v849 = vmul.f32 %v847, 1.442695
        %v850 = vpow.pop %v849
        %v851 = vmul.f32 %v848, 1.442695
        %v852 = vpow.pop %v851
        %v853 = vsel %vm840, %v850, 0.0
        %854 = vadd.xlane.f32.xlu0 %v853
        %v855 = vpop.xlane.xlu0 %854
        %v856 = vsel %vm840, %v852, 0.0
        %857 = vadd.xlane.f32.xlu0 %v856
        %v858 = vpop.xlane.xlu0 %857
        %v859 = vrcp.pop %v855
        %v860 = vrcp.pop %v858
        %v861 = vmul.f32 %v850, %v859
        %v862 = vmul.f32 %v852, %v860
        %v864 = vsel %vm840, %v861, 0
        %866 = vmatprep.subr.mxu0 0.0
        %867 = vmatpush1.msra.mxu0 0.0
        %868 = vmatprep.subr.mxu0 0.0
        %869 = vmatpush1.msra.mxu0 0.0
        %870 = vmatprep.subr.mxu0 0.0
        %871 = vmatpush1.msra.mxu0 0.0
        %872 = vmatprep.subr.mxu0 0.0
        %873 = vmatpush1.msra.mxu0 0.0
        %874 = vmatprep.subr.mxu0 0.0
        %875 = vmatpush1.msra.mxu0 0.0
        %876 = vmatprep.subr.mxu0 0.0
        %877 = vmatpush1.msra.mxu0 0.0
        %878 = vmatprep.subr.mxu0 0.0
        %879 = vmatpush1.msra.mxu0 0.0
        %880 = vmatprep.subr.mxu0 0.0
        %881 = vmatpush1.msra.mxu0 0.0
        %882 = vmatprep.subr.mxu0 0.0
        %883 = vmatpush1.msra.mxu0 0.0
        %884 = vmatprep.subr.mxu0 0.0
        %885 = vmatpush1.msra.mxu0 0.0
        %886 = vmatprep.subr.mxu0 0.0
        %887 = vmatpush1.msra.mxu0 0.0
        %888 = vmatprep.subr.mxu0 0.0
        %889 = vmatpush1.msra.mxu0 0.0
        %890 = vmatprep.subr.mxu0 0.0
        %891 = vmatpush1.msra.mxu0 0.0
        %892 = vmatprep.subr.mxu0 0.0
        %893 = vmatpush1.msra.mxu0 0.0
        %894 = vmatprep.subr.mxu0 0.0
        %895 = vmatpush1.msra.mxu0 0.0
        %896 = vmatprep.subr.mxu0 0.0
        %897 = vmatpush1.msra.mxu0 %v679
        %898 = vmatprep.subr.mxu0 0.0
        %899 = vmatpush2.msra.mxu0 0.0
        %900 = vmatprep.subr.mxu0 0.0
        %901 = vmatpush2.msra.mxu0 0.0
        %902 = vmatprep.subr.mxu0 0.0
        %903 = vmatpush2.msra.mxu0 0.0
        %904 = vmatprep.subr.mxu0 0.0
        %905 = vmatpush2.msra.mxu0 0.0
        %906 = vmatprep.subr.mxu0 0.0
        %907 = vmatpush2.msra.mxu0 0.0
        %908 = vmatprep.subr.mxu0 0.0
        %909 = vmatpush2.msra.mxu0 0.0
        %910 = vmatprep.subr.mxu0 0.0
        %911 = vmatpush2.msra.mxu0 0.0
        %912 = vmatprep.subr.mxu0 0.0
        %913 = vmatpush2.msra.mxu0 0.0
        %914 = vmatprep.subr.mxu0 0.0
        %915 = vmatpush2.msra.mxu0 0.0
        %916 = vmatprep.subr.mxu0 0.0
        %917 = vmatpush2.msra.mxu0 0.0
        %918 = vmatprep.subr.mxu0 0.0
        %919 = vmatpush2.msra.mxu0 0.0
        %920 = vmatprep.subr.mxu0 0.0
        %921 = vmatpush2.msra.mxu0 0.0
        %922 = vmatprep.subr.mxu0 0.0
        %923 = vmatpush2.msra.mxu0 0.0
        %924 = vmatprep.subr.mxu0 0.0
        %925 = vmatpush2.msra.mxu0 0.0
        %926 = vmatprep.subr.mxu0 0.0
        %927 = vmatpush2.msra.mxu0 0.0
        %928 = vmatprep.subr.mxu0 0.0
        %929 = vmatpush2.msra.mxu0 0.0
        %930 = vmatprep.mubr.f32.mxu0 0.0
        %931 = vmatmul.mubr.f32.gmra.mxu0 %v864
        %v932 = vpop.f32.mrf.mxu0
        %v933 = vadd.f32 0.0, %v932
        %v934 = vpop.f32.mrf.mxu0
        %935 = vdwg.mxu0
        %v937 = vsel %vm840, %v862, 0
        %939 = vmatprep.subr.mxu0 0.0
        %940 = vmatpush1.msra.mxu0 0.0
        %941 = vmatprep.subr.mxu0 0.0
        %942 = vmatpush1.msra.mxu0 0.0
        %943 = vmatprep.subr.mxu0 0.0
        %944 = vmatpush1.msra.mxu0 0.0
        %945 = vmatprep.subr.mxu0 0.0
        %946 = vmatpush1.msra.mxu0 0.0
        %947 = vmatprep.subr.mxu0 0.0
        %948 = vmatpush1.msra.mxu0 0.0
        %949 = vmatprep.subr.mxu0 0.0
        %950 = vmatpush1.msra.mxu0 0.0
        %951 = vmatprep.subr.mxu0 0.0
        %952 = vmatpush1.msra.mxu0 0.0
        %953 = vmatprep.subr.mxu0 0.0
        %954 = vmatpush1.msra.mxu0 0.0
        %955 = vmatprep.subr.mxu0 0.0
        %956 = vmatpush1.msra.mxu0 0.0
        %957 = vmatprep.subr.mxu0 0.0
        %958 = vmatpush1.msra.mxu0 0.0
        %959 = vmatprep.subr.mxu0 0.0
        %960 = vmatpush1.msra.mxu0 0.0
        %961 = vmatprep.subr.mxu0 0.0
        %962 = vmatpush1.msra.mxu0 0.0
        %963 = vmatprep.subr.mxu0 0.0
        %964 = vmatpush1.msra.mxu0 0.0
        %965 = vmatprep.subr.mxu0 0.0
        %966 = vmatpush1.msra.mxu0 0.0
        %967 = vmatprep.subr.mxu0 0.0
        %968 = vmatpush1.msra.mxu0 0.0
        %969 = vmatprep.subr.mxu0 0.0
        %970 = vmatpush1.msra.mxu0 %v684
        %971 = vmatprep.subr.mxu0 0.0
        %972 = vmatpush2.msra.mxu0 0.0
        %973 = vmatprep.subr.mxu0 0.0
        %974 = vmatpush2.msra.mxu0 0.0
        %975 = vmatprep.subr.mxu0 0.0
        %976 = vmatpush2.msra.mxu0 0.0
        %977 = vmatprep.subr.mxu0 0.0
        %978 = vmatpush2.msra.mxu0 0.0
        %979 = vmatprep.subr.mxu0 0.0
        %980 = vmatpush2.msra.mxu0 0.0
        %981 = vmatprep.subr.mxu0 0.0
        %982 = vmatpush2.msra.mxu0 0.0
        %983 = vmatprep.subr.mxu0 0.0
        %984 = vmatpush2.msra.mxu0 0.0
        %985 = vmatprep.subr.mxu0 0.0
        %986 = vmatpush2.msra.mxu0 0.0
        %987 = vmatprep.subr.mxu0 0.0
        %988 = vmatpush2.msra.mxu0 0.0
        %989 = vmatprep.subr.mxu0 0.0
        %990 = vmatpush2.msra.mxu0 0.0
        %991 = vmatprep.subr.mxu0 0.0
        %992 = vmatpush2.msra.mxu0 0.0
        %993 = vmatprep.subr.mxu0 0.0
        %994 = vmatpush2.msra.mxu0 0.0
        %995 = vmatprep.subr.mxu0 0.0
        %996 = vmatpush2.msra.mxu0 0.0
        %997 = vmatprep.subr.mxu0 0.0
        %998 = vmatpush2.msra.mxu0 0.0
        %999 = vmatprep.subr.mxu0 0.0
        %1000 = vmatpush2.msra.mxu0 0.0
        %1001 = vmatprep.subr.mxu0 0.0
        %1002 = vmatpush2.msra.mxu0 0.0
        %1003 = vmatprep.mubr.f32.mxu0 0.0
        %1004 = vmatmul.mubr.f32.gmra.mxu0 %v937
        %v1005 = vpop.f32.mrf.mxu0
        %v1006 = vadd.f32 0.0, %v1005
        %v1007 = vpop.f32.mrf.mxu0
        %1008 = vdwg.mxu0
        %v1009 = vld [vmem:[%s379] sm:$0xff]
        %v1010 = vld [vmem:[%s379 + $0x8] sm:$0xff]
        %v1011 = vld [vmem:[%s379 + $0x10] sm:$0xff]
        %v1012 = vld [vmem:[%s379 + $0x18] sm:$0x1]
        %s1013 = scalar_lea.vmem %s374, 56
        %v1014 = vld [vmem:[%s1013] sm:$0xff]
        %v1015 = vld [vmem:[%s1013 + $0x8] sm:$0xff]
        %v1016 = vld [vmem:[%s1013 + $0x10] sm:$0xff]
        %v1017 = vld [vmem:[%s1013 + $0x18] sm:$0xff]
        %v1018 = vld [vmem:[%s1013 + $0x20] sm:$0xff]
        %v1019 = vld [vmem:[%s1013 + $0x28] sm:$0xff]
        %v1020 = vld [vmem:[%s1013 + $0x30] sm:$0x3]
        %v1021 = vld [vmem:[%s388 + $0x1] sm:$0x1]
        %v1023 = vlaneseq
        %v1024 = vshrl.u32 %v1023, 7
        %v1025 = vsub.s32 0, %v1024
        %v1026 = vrot.slane %v1021, %v1025
        %v1029 = vsel %vm422, %v1020, 0
        %1031 = vmatprep.subr.mxu0 0.0
        %1032 = vmatpush1.msra.mxu0 0.0
        %1033 = vmatprep.subr.mxu0 0.0
        %1034 = vmatpush1.msra.mxu0 0.0
        %1035 = vmatprep.subr.mxu0 0.0
        %1036 = vmatpush1.msra.mxu0 0.0
        %1037 = vmatprep.subr.mxu0 0.0
        %1038 = vmatpush1.msra.mxu0 0.0
        %1039 = vmatprep.subr.mxu0 0.0
        %1040 = vmatpush1.msra.mxu0 0.0
        %1041 = vmatprep.subr.mxu0 0.0
        %1042 = vmatpush1.msra.mxu0 0.0
        %1043 = vmatprep.subr.mxu0 0.0
        %1044 = vmatpush1.msra.mxu0 0.0
        %1045 = vmatprep.subr.mxu0 0.0
        %1046 = vmatpush1.msra.mxu0 0.0
        %1047 = vmatprep.subr.mxu0 0.0
        %1048 = vmatpush1.msra.mxu0 0.0
        %1049 = vmatprep.subr.mxu0 0.0
        %1050 = vmatpush1.msra.mxu0 %v1029
        %1051 = vmatprep.subr.mxu0 0.0
        %1052 = vmatpush1.msra.mxu0 %v1019
        %1053 = vmatprep.subr.mxu0 0.0
        %1054 = vmatpush1.msra.mxu0 %v1018
        %1055 = vmatprep.subr.mxu0 0.0
        %1056 = vmatpush1.msra.mxu0 %v1017
        %1057 = vmatprep.subr.mxu0 0.0
        %1058 = vmatpush1.msra.mxu0 %v1016
        %1059 = vmatprep.subr.mxu0 0.0
        %1060 = vmatpush1.msra.mxu0 %v1015
        %1061 = vmatprep.subr.mxu0 0.0
        %1062 = vmatpush1.msra.mxu0 %v1014
        %1063 = vmatprep.subr.mxu0 0.0
        %1064 = vmatpush2.msra.mxu0 0.0
        %1065 = vmatprep.subr.mxu0 0.0
        %1066 = vmatpush2.msra.mxu0 0.0
        %1067 = vmatprep.subr.mxu0 0.0
        %1068 = vmatpush2.msra.mxu0 0.0
        %1069 = vmatprep.subr.mxu0 0.0
        %1070 = vmatpush2.msra.mxu0 0.0
        %1071 = vmatprep.subr.mxu0 0.0
        %1072 = vmatpush2.msra.mxu0 0.0
        %1073 = vmatprep.subr.mxu0 0.0
        %1074 = vmatpush2.msra.mxu0 0.0
        %1075 = vmatprep.subr.mxu0 0.0
        %1076 = vmatpush2.msra.mxu0 0.0
        %1077 = vmatprep.subr.mxu0 0.0
        %1078 = vmatpush2.msra.mxu0 0.0
        %1079 = vmatprep.subr.mxu0 0.0
        %1080 = vmatpush2.msra.mxu0 0.0
        %1081 = vmatprep.subr.mxu0 0.0
        %1082 = vmatpush2.msra.mxu0 0.0
        %1083 = vmatprep.subr.mxu0 0.0
        %1084 = vmatpush2.msra.mxu0 0.0
        %1085 = vmatprep.subr.mxu0 0.0
        %1086 = vmatpush2.msra.mxu0 0.0
        %1087 = vmatprep.subr.mxu0 0.0
        %1088 = vmatpush2.msra.mxu0 0.0
        %1089 = vmatprep.subr.mxu0 0.0
        %1090 = vmatpush2.msra.mxu0 0.0
        %1091 = vmatprep.subr.mxu0 0.0
        %1092 = vmatpush2.msra.mxu0 0.0
        %1093 = vmatprep.subr.mxu0 0.0
        %1094 = vmatpush2.msra.mxu0 0.0
        %1095 = vmatprep.mubr.f32.mxu0 0.0
        %1096 = vmatmul.mubr.f32.gmra.mxu0 %v417
        %v1097 = vpop.f32.mrf.mxu0
        %v1098 = vadd.f32 %v1026, %v1097
        %v1099 = vpop.f32.mrf.mxu0
        %1100 = vmatprep.mubr.f32.mxu0 0.0
        %1101 = vmatmul.mubr.f32.gmra.mxu0 %v420
        %v1102 = vpop.f32.mrf.mxu0
        %v1103 = vadd.f32 %v1026, %v1102
        %v1104 = vpop.f32.mrf.mxu0
        %1105 = vdwg.mxu0
        %s1106 = scalar_lea.vmem %s374, 168
        %v1107 = vld [vmem:[%s1106] sm:$0xff]
        %v1108 = vld [vmem:[%s1106 + $0x8] sm:$0xff]
        %v1109 = vld [vmem:[%s1106 + $0x10] sm:$0xff]
        %v1110 = vld [vmem:[%s1106 + $0x18] sm:$0xff]
        %v1111 = vld [vmem:[%s1106 + $0x20] sm:$0xff]
        %v1112 = vld [vmem:[%s1106 + $0x28] sm:$0xff]
        %v1113 = vld [vmem:[%s1106 + $0x30] sm:$0x3]
        %v1114 = vld [vmem:[%s388 + $0x3] sm:$0x1]
        %v1116 = vlaneseq
        %v1117 = vshrl.u32 %v1116, 7
        %v1118 = vsub.s32 0, %v1117
        %v1119 = vrot.slane %v1114, %v1118
        %v1122 = vsel %vm422, %v1113, 0
        %1124 = vmatprep.subr.mxu0 0.0
        %1125 = vmatpush1.msra.mxu0 0.0
        %1126 = vmatprep.subr.mxu0 0.0
        %1127 = vmatpush1.msra.mxu0 0.0
        %1128 = vmatprep.subr.mxu0 0.0
        %1129 = vmatpush1.msra.mxu0 0.0
        %1130 = vmatprep.subr.mxu0 0.0
        %1131 = vmatpush1.msra.mxu0 0.0
        %1132 = vmatprep.subr.mxu0 0.0
        %1133 = vmatpush1.msra.mxu0 0.0
        %1134 = vmatprep.subr.mxu0 0.0
        %1135 = vmatpush1.msra.mxu0 0.0
        %1136 = vmatprep.subr.mxu0 0.0
        %1137 = vmatpush1.msra.mxu0 0.0
        %1138 = vmatprep.subr.mxu0 0.0
        %1139 = vmatpush1.msra.mxu0 0.0
        %1140 = vmatprep.subr.mxu0 0.0
        %1141 = vmatpush1.msra.mxu0 0.0
        %1142 = vmatprep.subr.mxu0 0.0
        %1143 = vmatpush1.msra.mxu0 %v1122
        %1144 = vmatprep.subr.mxu0 0.0
        %1145 = vmatpush1.msra.mxu0 %v1112
        %1146 = vmatprep.subr.mxu0 0.0
        %1147 = vmatpush1.msra.mxu0 %v1111
        %1148 = vmatprep.subr.mxu0 0.0
        %1149 = vmatpush1.msra.mxu0 %v1110
        %1150 = vmatprep.subr.mxu0 0.0
        %1151 = vmatpush1.msra.mxu0 %v1109
        %1152 = vmatprep.subr.mxu0 0.0
        %1153 = vmatpush1.msra.mxu0 %v1108
        %1154 = vmatprep.subr.mxu0 0.0
        %1155 = vmatpush1.msra.mxu0 %v1107
        %1156 = vmatprep.subr.mxu0 0.0
        %1157 = vmatpush2.msra.mxu0 0.0
        %1158 = vmatprep.subr.mxu0 0.0
        %1159 = vmatpush2.msra.mxu0 0.0
        %1160 = vmatprep.subr.mxu0 0.0
        %1161 = vmatpush2.msra.mxu0 0.0
        %1162 = vmatprep.subr.mxu0 0.0
        %1163 = vmatpush2.msra.mxu0 0.0
        %1164 = vmatprep.subr.mxu0 0.0
        %1165 = vmatpush2.msra.mxu0 0.0
        %1166 = vmatprep.subr.mxu0 0.0
        %1167 = vmatpush2.msra.mxu0 0.0
        %1168 = vmatprep.subr.mxu0 0.0
        %1169 = vmatpush2.msra.mxu0 0.0
        %1170 = vmatprep.subr.mxu0 0.0
        %1171 = vmatpush2.msra.mxu0 0.0
        %1172 = vmatprep.subr.mxu0 0.0
        %1173 = vmatpush2.msra.mxu0 0.0
        %1174 = vmatprep.subr.mxu0 0.0
        %1175 = vmatpush2.msra.mxu0 0.0
        %1176 = vmatprep.subr.mxu0 0.0
        %1177 = vmatpush2.msra.mxu0 0.0
        %1178 = vmatprep.subr.mxu0 0.0
        %1179 = vmatpush2.msra.mxu0 0.0
        %1180 = vmatprep.subr.mxu0 0.0
        %1181 = vmatpush2.msra.mxu0 0.0
        %1182 = vmatprep.subr.mxu0 0.0
        %1183 = vmatpush2.msra.mxu0 0.0
        %1184 = vmatprep.subr.mxu0 0.0
        %1185 = vmatpush2.msra.mxu0 0.0
        %1186 = vmatprep.subr.mxu0 0.0
        %1187 = vmatpush2.msra.mxu0 0.0
        %1188 = vmatprep.mubr.f32.mxu0 0.0
        %1189 = vmatmul.mubr.f32.gmra.mxu0 %v417
        %v1190 = vpop.f32.mrf.mxu0
        %v1191 = vadd.f32 %v1119, %v1190
        %v1192 = vpop.f32.mrf.mxu0
        %1193 = vmatprep.mubr.f32.mxu0 0.0
        %1194 = vmatmul.mubr.f32.gmra.mxu0 %v420
        %v1195 = vpop.f32.mrf.mxu0
        %v1196 = vadd.f32 %v1119, %v1195
        %v1197 = vpop.f32.mrf.mxu0
        %1198 = vdwg.mxu0
        %s1199 = scalar_lea.vmem %s374, 280
        %v1200 = vld [vmem:[%s1199] sm:$0xff]
        %v1201 = vld [vmem:[%s1199 + $0x8] sm:$0xff]
        %v1202 = vld [vmem:[%s1199 + $0x10] sm:$0xff]
        %v1203 = vld [vmem:[%s1199 + $0x18] sm:$0xff]
        %v1204 = vld [vmem:[%s1199 + $0x20] sm:$0xff]
        %v1205 = vld [vmem:[%s1199 + $0x28] sm:$0xff]
        %v1206 = vld [vmem:[%s1199 + $0x30] sm:$0x3]
        %v1207 = vld [vmem:[%s388 + $0x5] sm:$0x1]
        %v1209 = vlaneseq
        %v1210 = vshrl.u32 %v1209, 7
        %v1211 = vsub.s32 0, %v1210
        %v1212 = vrot.slane %v1207, %v1211
        %v1215 = vsel %vm422, %v1206, 0
        %1217 = vmatprep.subr.mxu0 0.0
        %1218 = vmatpush1.msra.mxu0 0.0
        %1219 = vmatprep.subr.mxu0 0.0
        %1220 = vmatpush1.msra.mxu0 0.0
        %1221 = vmatprep.subr.mxu0 0.0
        %1222 = vmatpush1.msra.mxu0 0.0
        %1223 = vmatprep.subr.mxu0 0.0
        %1224 = vmatpush1.msra.mxu0 0.0
        %1225 = vmatprep.subr.mxu0 0.0
        %1226 = vmatpush1.msra.mxu0 0.0
        %1227 = vmatprep.subr.mxu0 0.0
        %1228 = vmatpush1.msra.mxu0 0.0
        %1229 = vmatprep.subr.mxu0 0.0
        %1230 = vmatpush1.msra.mxu0 0.0
        %1231 = vmatprep.subr.mxu0 0.0
        %1232 = vmatpush1.msra.mxu0 0.0
        %1233 = vmatprep.subr.mxu0 0.0
        %1234 = vmatpush1.msra.mxu0 0.0
        %1235 = vmatprep.subr.mxu0 0.0
        %1236 = vmatpush1.msra.mxu0 %v1215
        %1237 = vmatprep.subr.mxu0 0.0
        %1238 = vmatpush1.msra.mxu0 %v1205
        %1239 = vmatprep.subr.mxu0 0.0
        %1240 = vmatpush1.msra.mxu0 %v1204
        %1241 = vmatprep.subr.mxu0 0.0
        %1242 = vmatpush1.msra.mxu0 %v1203
        %1243 = vmatprep.subr.mxu0 0.0
        %1244 = vmatpush1.msra.mxu0 %v1202
        %1245 = vmatprep.subr.mxu0 0.0
        %1246 = vmatpush1.msra.mxu0 %v1201
        %1247 = vmatprep.subr.mxu0 0.0
        %1248 = vmatpush1.msra.mxu0 %v1200
        %1249 = vmatprep.subr.mxu0 0.0
        %1250 = vmatpush2.msra.mxu0 0.0
        %1251 = vmatprep.subr.mxu0 0.0
        %1252 = vmatpush2.msra.mxu0 0.0
        %1253 = vmatprep.subr.mxu0 0.0
        %1254 = vmatpush2.msra.mxu0 0.0
        %1255 = vmatprep.subr.mxu0 0.0
        %1256 = vmatpush2.msra.mxu0 0.0
        %1257 = vmatprep.subr.mxu0 0.0
        %1258 = vmatpush2.msra.mxu0 0.0
        %1259 = vmatprep.subr.mxu0 0.0
        %1260 = vmatpush2.msra.mxu0 0.0
        %1261 = vmatprep.subr.mxu0 0.0
        %1262 = vmatpush2.msra.mxu0 0.0
        %1263 = vmatprep.subr.mxu0 0.0
        %1264 = vmatpush2.msra.mxu0 0.0
        %1265 = vmatprep.subr.mxu0 0.0
        %1266 = vmatpush2.msra.mxu0 0.0
        %1267 = vmatprep.subr.mxu0 0.0
        %1268 = vmatpush2.msra.mxu0 0.0
        %1269 = vmatprep.subr.mxu0 0.0
        %1270 = vmatpush2.msra.mxu0 0.0
        %1271 = vmatprep.subr.mxu0 0.0
        %1272 = vmatpush2.msra.mxu0 0.0
        %1273 = vmatprep.subr.mxu0 0.0
        %1274 = vmatpush2.msra.mxu0 0.0
        %1275 = vmatprep.subr.mxu0 0.0
        %1276 = vmatpush2.msra.mxu0 0.0
        %1277 = vmatprep.subr.mxu0 0.0
        %1278 = vmatpush2.msra.mxu0 0.0
        %1279 = vmatprep.subr.mxu0 0.0
        %1280 = vmatpush2.msra.mxu0 0.0
        %1281 = vmatprep.mubr.f32.mxu0 0.0
        %1282 = vmatmul.mubr.f32.gmra.mxu0 %v417
        %v1283 = vpop.f32.mrf.mxu0
        %v1284 = vadd.f32 %v1212, %v1283
        %v1285 = vpop.f32.mrf.mxu0
        %1286 = vmatprep.mubr.f32.mxu0 0.0
        %1287 = vmatmul.mubr.f32.gmra.mxu0 %v420
        %v1288 = vpop.f32.mrf.mxu0
        %v1289 = vadd.f32 %v1212, %v1288
        %v1290 = vpop.f32.mrf.mxu0
        %1291 = vdwg.mxu0
        %v1293 = vsel %vm687, %v1098, 0
        %v1296 = vsel %vm687, %v1191, 0
        %1298 = vmatprep.subr.mxu0 0.0
        %1299 = vmatpush1.xpose.msra.mxu0 0.0
        %1300 = vmatprep.subr.mxu0 0.0
        %1301 = vmatpush1.xpose.msra.mxu0 0.0
        %1302 = vmatprep.subr.mxu0 0.0
        %1303 = vmatpush1.xpose.msra.mxu0 0.0
        %1304 = vmatprep.subr.mxu0 0.0
        %1305 = vmatpush1.xpose.msra.mxu0 0.0
        %1306 = vmatprep.subr.mxu0 0.0
        %1307 = vmatpush1.xpose.msra.mxu0 0.0
        %1308 = vmatprep.subr.mxu0 0.0
        %1309 = vmatpush1.xpose.msra.mxu0 0.0
        %1310 = vmatprep.subr.mxu0 0.0
        %1311 = vmatpush1.xpose.msra.mxu0 0.0
        %1312 = vmatprep.subr.mxu0 0.0
        %1313 = vmatpush1.xpose.msra.mxu0 0.0
        %1314 = vmatprep.subr.mxu0 0.0
        %1315 = vmatpush1.xpose.msra.mxu0 0.0
        %1316 = vmatprep.subr.mxu0 0.0
        %1317 = vmatpush1.xpose.msra.mxu0 0.0
        %1318 = vmatprep.subr.mxu0 0.0
        %1319 = vmatpush1.xpose.msra.mxu0 0.0
        %1320 = vmatprep.subr.mxu0 0.0
        %1321 = vmatpush1.xpose.msra.mxu0 0.0
        %1322 = vmatprep.subr.mxu0 0.0
        %1323 = vmatpush1.xpose.msra.mxu0 0.0
        %1324 = vmatprep.subr.mxu0 0.0
        %1325 = vmatpush1.xpose.msra.mxu0 0.0
        %1326 = vmatprep.subr.mxu0 0.0
        %1327 = vmatpush1.xpose.msra.mxu0 0.0
        %1328 = vmatprep.subr.mxu0 0.0
        %1329 = vmatpush1.xpose.msra.mxu0 %v1296
        %1330 = vmatprep.subr.mxu0 0.0
        %1331 = vmatpush2.xpose.msra.mxu0 0.0
        %1332 = vmatprep.subr.mxu0 0.0
        %1333 = vmatpush2.xpose.msra.mxu0 0.0
        %1334 = vmatprep.subr.mxu0 0.0
        %1335 = vmatpush2.xpose.msra.mxu0 0.0
        %1336 = vmatprep.subr.mxu0 0.0
        %1337 = vmatpush2.xpose.msra.mxu0 0.0
        %1338 = vmatprep.subr.mxu0 0.0
        %1339 = vmatpush2.xpose.msra.mxu0 0.0
        %1340 = vmatprep.subr.mxu0 0.0
        %1341 = vmatpush2.xpose.msra.mxu0 0.0
        %1342 = vmatprep.subr.mxu0 0.0
        %1343 = vmatpush2.xpose.msra.mxu0 0.0
        %1344 = vmatprep.subr.mxu0 0.0
        %1345 = vmatpush2.xpose.msra.mxu0 0.0
        %1346 = vmatprep.subr.mxu0 0.0
        %1347 = vmatpush2.xpose.msra.mxu0 0.0
        %1348 = vmatprep.subr.mxu0 0.0
        %1349 = vmatpush2.xpose.msra.mxu0 0.0
        %1350 = vmatprep.subr.mxu0 0.0
        %1351 = vmatpush2.xpose.msra.mxu0 0.0
        %1352 = vmatprep.subr.mxu0 0.0
        %1353 = vmatpush2.xpose.msra.mxu0 0.0
        %1354 = vmatprep.subr.mxu0 0.0
        %1355 = vmatpush2.xpose.msra.mxu0 0.0
        %1356 = vmatprep.subr.mxu0 0.0
        %1357 = vmatpush2.xpose.msra.mxu0 0.0
        %1358 = vmatprep.subr.mxu0 0.0
        %1359 = vmatpush2.xpose.msra.mxu0 0.0
        %1360 = vmatprep.subr.mxu0 0.0
        %1361 = vmatpush2.xpose.msra.mxu0 0.0
        %1362 = vmatprep.mubr.f32.mxu0 0.0
        %1363 = vmatmul.mubr.f32.gmra.mxu0 %v1293
        %v1364 = vpop.f32.mrf.mxu0
        %v1365 = vadd.f32 0.0, %v1364
        %v1366 = vpop.f32.mrf.mxu0
        %1367 = vdwg.mxu0
        %v1369 = vsel %vm687, %v1103, 0
        %v1372 = vsel %vm687, %v1196, 0
        %1374 = vmatprep.subr.mxu0 0.0
        %1375 = vmatpush1.xpose.msra.mxu0 0.0
        %1376 = vmatprep.subr.mxu0 0.0
        %1377 = vmatpush1.xpose.msra.mxu0 0.0
        %1378 = vmatprep.subr.mxu0 0.0
        %1379 = vmatpush1.xpose.msra.mxu0 0.0
        %1380 = vmatprep.subr.mxu0 0.0
        %1381 = vmatpush1.xpose.msra.mxu0 0.0
        %1382 = vmatprep.subr.mxu0 0.0
        %1383 = vmatpush1.xpose.msra.mxu0 0.0
        %1384 = vmatprep.subr.mxu0 0.0
        %1385 = vmatpush1.xpose.msra.mxu0 0.0
        %1386 = vmatprep.subr.mxu0 0.0
        %1387 = vmatpush1.xpose.msra.mxu0 0.0
        %1388 = vmatprep.subr.mxu0 0.0
        %1389 = vmatpush1.xpose.msra.mxu0 0.0
        %1390 = vmatprep.subr.mxu0 0.0
        %1391 = vmatpush1.xpose.msra.mxu0 0.0
        %1392 = vmatprep.subr.mxu0 0.0
        %1393 = vmatpush1.xpose.msra.mxu0 0.0
        %1394 = vmatprep.subr.mxu0 0.0
        %1395 = vmatpush1.xpose.msra.mxu0 0.0
        %1396 = vmatprep.subr.mxu0 0.0
        %1397 = vmatpush1.xpose.msra.mxu0 0.0
        %1398 = vmatprep.subr.mxu0 0.0
        %1399 = vmatpush1.xpose.msra.mxu0 0.0
        %1400 = vmatprep.subr.mxu0 0.0
        %1401 = vmatpush1.xpose.msra.mxu0 0.0
        %1402 = vmatprep.subr.mxu0 0.0
        %1403 = vmatpush1.xpose.msra.mxu0 0.0
        %1404 = vmatprep.subr.mxu0 0.0
        %1405 = vmatpush1.xpose.msra.mxu0 %v1372
        %1406 = vmatprep.subr.mxu0 0.0
        %1407 = vmatpush2.xpose.msra.mxu0 0.0
        %1408 = vmatprep.subr.mxu0 0.0
        %1409 = vmatpush2.xpose.msra.mxu0 0.0
        %1410 = vmatprep.subr.mxu0 0.0
        %1411 = vmatpush2.xpose.msra.mxu0 0.0
        %1412 = vmatprep.subr.mxu0 0.0
        %1413 = vmatpush2.xpose.msra.mxu0 0.0
        %1414 = vmatprep.subr.mxu0 0.0
        %1415 = vmatpush2.xpose.msra.mxu0 0.0
        %1416 = vmatprep.subr.mxu0 0.0
        %1417 = vmatpush2.xpose.msra.mxu0 0.0
        %1418 = vmatprep.subr.mxu0 0.0
        %1419 = vmatpush2.xpose.msra.mxu0 0.0
        %1420 = vmatprep.subr.mxu0 0.0
        %1421 = vmatpush2.xpose.msra.mxu0 0.0
        %1422 = vmatprep.subr.mxu0 0.0
        %1423 = vmatpush2.xpose.msra.mxu0 0.0
        %1424 = vmatprep.subr.mxu0 0.0
        %1425 = vmatpush2.xpose.msra.mxu0 0.0
        %1426 = vmatprep.subr.mxu0 0.0
        %1427 = vmatpush2.xpose.msra.mxu0 0.0
        %1428 = vmatprep.subr.mxu0 0.0
        %1429 = vmatpush2.xpose.msra.mxu0 0.0
        %1430 = vmatprep.subr.mxu0 0.0
        %1431 = vmatpush2.xpose.msra.mxu0 0.0
        %1432 = vmatprep.subr.mxu0 0.0
        %1433 = vmatpush2.xpose.msra.mxu0 0.0
        %1434 = vmatprep.subr.mxu0 0.0
        %1435 = vmatpush2.xpose.msra.mxu0 0.0
        %1436 = vmatprep.subr.mxu0 0.0
        %1437 = vmatpush2.xpose.msra.mxu0 0.0
        %1438 = vmatprep.mubr.f32.mxu0 0.0
        %1439 = vmatmul.mubr.f32.gmra.mxu0 %v1369
        %v1440 = vpop.f32.mrf.mxu0
        %v1441 = vadd.f32 0.0, %v1440
        %v1442 = vpop.f32.mrf.mxu0
        %1443 = vdwg.mxu0
        %v1444 = vsel %vm840, %v1365, -inf
        %1445 = vmax.xlane.f32.xlu0 %v1444
        %v1446 = vpop.xlane.xlu0 %1445
        %v1447 = vsel %vm840, %v1441, -inf
        %1448 = vmax.xlane.f32.xlu0 %v1447
        %v1449 = vpop.xlane.xlu0 %1448
        %v1450 = vsub.f32 %v1365, %v1446
        %v1451 = vsub.f32 %v1441, %v1449
        %v1452 = vmul.f32 %v1450, 1.442695
        %v1453 = vpow.pop %v1452
        %v1454 = vmul.f32 %v1451, 1.442695
        %v1455 = vpow.pop %v1454
        %v1456 = vsel %vm840, %v1453, 0.0
        %1457 = vadd.xlane.f32.xlu0 %v1456
        %v1458 = vpop.xlane.xlu0 %1457
        %v1459 = vsel %vm840, %v1455, 0.0
        %1460 = vadd.xlane.f32.xlu0 %v1459
        %v1461 = vpop.xlane.xlu0 %1460
        %v1462 = vrcp.pop %v1458
        %v1463 = vrcp.pop %v1461
        %v1464 = vmul.f32 %v1453, %v1462
        %v1465 = vmul.f32 %v1455, %v1463
        %v1467 = vsel %vm840, %v1464, 0
        %1469 = vmatprep.subr.mxu0 0.0
        %1470 = vmatpush1.msra.mxu0 0.0
        %1471 = vmatprep.subr.mxu0 0.0
        %1472 = vmatpush1.msra.mxu0 0.0
        %1473 = vmatprep.subr.mxu0 0.0
        %1474 = vmatpush1.msra.mxu0 0.0
        %1475 = vmatprep.subr.mxu0 0.0
        %1476 = vmatpush1.msra.mxu0 0.0
        %1477 = vmatprep.subr.mxu0 0.0
        %1478 = vmatpush1.msra.mxu0 0.0
        %1479 = vmatprep.subr.mxu0 0.0
        %1480 = vmatpush1.msra.mxu0 0.0
        %1481 = vmatprep.subr.mxu0 0.0
        %1482 = vmatpush1.msra.mxu0 0.0
        %1483 = vmatprep.subr.mxu0 0.0
        %1484 = vmatpush1.msra.mxu0 0.0
        %1485 = vmatprep.subr.mxu0 0.0
        %1486 = vmatpush1.msra.mxu0 0.0
        %1487 = vmatprep.subr.mxu0 0.0
        %1488 = vmatpush1.msra.mxu0 0.0
        %1489 = vmatprep.subr.mxu0 0.0
        %1490 = vmatpush1.msra.mxu0 0.0
        %1491 = vmatprep.subr.mxu0 0.0
        %1492 = vmatpush1.msra.mxu0 0.0
        %1493 = vmatprep.subr.mxu0 0.0
        %1494 = vmatpush1.msra.mxu0 0.0
        %1495 = vmatprep.subr.mxu0 0.0
        %1496 = vmatpush1.msra.mxu0 0.0
        %1497 = vmatprep.subr.mxu0 0.0
        %1498 = vmatpush1.msra.mxu0 0.0
        %1499 = vmatprep.subr.mxu0 0.0
        %1500 = vmatpush1.msra.mxu0 %v1284
        %1501 = vmatprep.subr.mxu0 0.0
        %1502 = vmatpush2.msra.mxu0 0.0
        %1503 = vmatprep.subr.mxu0 0.0
        %1504 = vmatpush2.msra.mxu0 0.0
        %1505 = vmatprep.subr.mxu0 0.0
        %1506 = vmatpush2.msra.mxu0 0.0
        %1507 = vmatprep.subr.mxu0 0.0
        %1508 = vmatpush2.msra.mxu0 0.0
        %1509 = vmatprep.subr.mxu0 0.0
        %1510 = vmatpush2.msra.mxu0 0.0
        %1511 = vmatprep.subr.mxu0 0.0
        %1512 = vmatpush2.msra.mxu0 0.0
        %1513 = vmatprep.subr.mxu0 0.0
        %1514 = vmatpush2.msra.mxu0 0.0
        %1515 = vmatprep.subr.mxu0 0.0
        %1516 = vmatpush2.msra.mxu0 0.0
        %1517 = vmatprep.subr.mxu0 0.0
        %1518 = vmatpush2.msra.mxu0 0.0
        %1519 = vmatprep.subr.mxu0 0.0
        %1520 = vmatpush2.msra.mxu0 0.0
        %1521 = vmatprep.subr.mxu0 0.0
        %1522 = vmatpush2.msra.mxu0 0.0
        %1523 = vmatprep.subr.mxu0 0.0
        %1524 = vmatpush2.msra.mxu0 0.0
        %1525 = vmatprep.subr.mxu0 0.0
        %1526 = vmatpush2.msra.mxu0 0.0
        %1527 = vmatprep.subr.mxu0 0.0
        %1528 = vmatpush2.msra.mxu0 0.0
        %1529 = vmatprep.subr.mxu0 0.0
        %1530 = vmatpush2.msra.mxu0 0.0
        %1531 = vmatprep.subr.mxu0 0.0
        %1532 = vmatpush2.msra.mxu0 0.0
        %1533 = vmatprep.mubr.f32.mxu0 0.0
        %1534 = vmatmul.mubr.f32.gmra.mxu0 %v1467
        %v1535 = vpop.f32.mrf.mxu0
        %v1536 = vadd.f32 0.0, %v1535
        %v1537 = vpop.f32.mrf.mxu0
        %1538 = vdwg.mxu0
        %v1540 = vsel %vm840, %v1465, 0
        %1542 = vmatprep.subr.mxu0 0.0
        %1543 = vmatpush1.msra.mxu0 0.0
        %1544 = vmatprep.subr.mxu0 0.0
        %1545 = vmatpush1.msra.mxu0 0.0
        %1546 = vmatprep.subr.mxu0 0.0
        %1547 = vmatpush1.msra.mxu0 0.0
        %1548 = vmatprep.subr.mxu0 0.0
        %1549 = vmatpush1.msra.mxu0 0.0
        %1550 = vmatprep.subr.mxu0 0.0
        %1551 = vmatpush1.msra.mxu0 0.0
        %1552 = vmatprep.subr.mxu0 0.0
        %1553 = vmatpush1.msra.mxu0 0.0
        %1554 = vmatprep.subr.mxu0 0.0
        %1555 = vmatpush1.msra.mxu0 0.0
        %1556 = vmatprep.subr.mxu0 0.0
        %1557 = vmatpush1.msra.mxu0 0.0
        %1558 = vmatprep.subr.mxu0 0.0
        %1559 = vmatpush1.msra.mxu0 0.0
        %1560 = vmatprep.subr.mxu0 0.0
        %1561 = vmatpush1.msra.mxu0 0.0
        %1562 = vmatprep.subr.mxu0 0.0
        %1563 = vmatpush1.msra.mxu0 0.0
        %1564 = vmatprep.subr.mxu0 0.0
        %1565 = vmatpush1.msra.mxu0 0.0
        %1566 = vmatprep.subr.mxu0 0.0
        %1567 = vmatpush1.msra.mxu0 0.0
        %1568 = vmatprep.subr.mxu0 0.0
        %1569 = vmatpush1.msra.mxu0 0.0
        %1570 = vmatprep.subr.mxu0 0.0
        %1571 = vmatpush1.msra.mxu0 0.0
        %1572 = vmatprep.subr.mxu0 0.0
        %1573 = vmatpush1.msra.mxu0 %v1289
        %1574 = vmatprep.subr.mxu0 0.0
        %1575 = vmatpush2.msra.mxu0 0.0
        %1576 = vmatprep.subr.mxu0 0.0
        %1577 = vmatpush2.msra.mxu0 0.0
        %1578 = vmatprep.subr.mxu0 0.0
        %1579 = vmatpush2.msra.mxu0 0.0
        %1580 = vmatprep.subr.mxu0 0.0
        %1581 = vmatpush2.msra.mxu0 0.0
        %1582 = vmatprep.subr.mxu0 0.0
        %1583 = vmatpush2.msra.mxu0 0.0
        %1584 = vmatprep.subr.mxu0 0.0
        %1585 = vmatpush2.msra.mxu0 0.0
        %1586 = vmatprep.subr.mxu0 0.0
        %1587 = vmatpush2.msra.mxu0 0.0
        %1588 = vmatprep.subr.mxu0 0.0
        %1589 = vmatpush2.msra.mxu0 0.0
        %1590 = vmatprep.subr.mxu0 0.0
        %1591 = vmatpush2.msra.mxu0 0.0
        %1592 = vmatprep.subr.mxu0 0.0
        %1593 = vmatpush2.msra.mxu0 0.0
        %1594 = vmatprep.subr.mxu0 0.0
        %1595 = vmatpush2.msra.mxu0 0.0
        %1596 = vmatprep.subr.mxu0 0.0
        %1597 = vmatpush2.msra.mxu0 0.0
        %1598 = vmatprep.subr.mxu0 0.0
        %1599 = vmatpush2.msra.mxu0 0.0
        %1600 = vmatprep.subr.mxu0 0.0
        %1601 = vmatpush2.msra.mxu0 0.0
        %1602 = vmatprep.subr.mxu0 0.0
        %1603 = vmatpush2.msra.mxu0 0.0
        %1604 = vmatprep.subr.mxu0 0.0
        %1605 = vmatpush2.msra.mxu0 0.0
        %1606 = vmatprep.mubr.f32.mxu0 0.0
        %1607 = vmatmul.mubr.f32.gmra.mxu0 %v1540
        %v1608 = vpop.f32.mrf.mxu0
        %v1609 = vadd.f32 0.0, %v1608
        %v1610 = vpop.f32.mrf.mxu0
        %1611 = vdwg.mxu0
        %s1612 = scalar_lea.vmem %s379, 32
        %v1613 = vld [vmem:[%s1612] sm:$0xff]
        %v1614 = vld [vmem:[%s1612 + $0x8] sm:$0xff]
        %v1615 = vld [vmem:[%s1612 + $0x10] sm:$0xff]
        %v1616 = vld [vmem:[%s1612 + $0x18] sm:$0x1]
        %v1618 = vsel %vm687, %v1536, 0
        %v1621 = vsel %vm687, %v1609, 0
        %vm1623 = vcmask 1040384
        %v1625 = vsel %vm1623, %v1616, 0
        %1627 = vmatprep.subr.mxu0 0.0
        %1628 = vmatpush1.msra.mxu0 0.0
        %1629 = vmatprep.subr.mxu0 0.0
        %1630 = vmatpush1.msra.mxu0 0.0
        %1631 = vmatprep.subr.mxu0 0.0
        %1632 = vmatpush1.msra.mxu0 0.0
        %1633 = vmatprep.subr.mxu0 0.0
        %1634 = vmatpush1.msra.mxu0 0.0
        %1635 = vmatprep.subr.mxu0 0.0
        %1636 = vmatpush1.msra.mxu0 0.0
        %1637 = vmatprep.subr.mxu0 0.0
        %1638 = vmatpush1.msra.mxu0 0.0
        %1639 = vmatprep.subr.mxu0 0.0
        %1640 = vmatpush1.msra.mxu0 0.0
        %1641 = vmatprep.subr.mxu0 0.0
        %1642 = vmatpush1.msra.mxu0 0.0
        %1643 = vmatprep.subr.mxu0 0.0
        %1644 = vmatpush1.msra.mxu0 0.0
        %1645 = vmatprep.subr.mxu0 0.0
        %1646 = vmatpush1.msra.mxu0 0.0
        %1647 = vmatprep.subr.mxu0 0.0
        %1648 = vmatpush1.msra.mxu0 0.0
        %1649 = vmatprep.subr.mxu0 0.0
        %1650 = vmatpush1.msra.mxu0 0.0
        %1651 = vmatprep.subr.mxu0 0.0
        %1652 = vmatpush1.msra.mxu0 %v1625
        %1653 = vmatprep.subr.mxu0 0.0
        %1654 = vmatpush1.msra.mxu0 %v1615
        %1655 = vmatprep.subr.mxu0 0.0
        %1656 = vmatpush1.msra.mxu0 %v1614
        %1657 = vmatprep.subr.mxu0 0.0
        %1658 = vmatpush1.msra.mxu0 %v1613
        %1659 = vmatprep.subr.mxu0 0.0
        %1660 = vmatpush2.msra.mxu0 0.0
        %1661 = vmatprep.subr.mxu0 0.0
        %1662 = vmatpush2.msra.mxu0 0.0
        %1663 = vmatprep.subr.mxu0 0.0
        %1664 = vmatpush2.msra.mxu0 0.0
        %1665 = vmatprep.subr.mxu0 0.0
        %1666 = vmatpush2.msra.mxu0 0.0
        %1667 = vmatprep.subr.mxu0 0.0
        %1668 = vmatpush2.msra.mxu0 0.0
        %1669 = vmatprep.subr.mxu0 0.0
        %1670 = vmatpush2.msra.mxu0 0.0
        %1671 = vmatprep.subr.mxu0 0.0
        %1672 = vmatpush2.msra.mxu0 0.0
        %1673 = vmatprep.subr.mxu0 0.0
        %1674 = vmatpush2.msra.mxu0 0.0
        %1675 = vmatprep.subr.mxu0 0.0
        %1676 = vmatpush2.msra.mxu0 0.0
        %1677 = vmatprep.subr.mxu0 0.0
        %1678 = vmatpush2.msra.mxu0 0.0
        %1679 = vmatprep.subr.mxu0 0.0
        %1680 = vmatpush2.msra.mxu0 0.0
        %1681 = vmatprep.subr.mxu0 0.0
        %1682 = vmatpush2.msra.mxu0 0.0
        %1683 = vmatprep.subr.mxu0 0.0
        %1684 = vmatpush2.msra.mxu0 0.0
        %1685 = vmatprep.subr.mxu0 0.0
        %1686 = vmatpush2.msra.mxu0 0.0
        %1687 = vmatprep.subr.mxu0 0.0
        %1688 = vmatpush2.msra.mxu0 0.0
        %1689 = vmatprep.subr.mxu0 0.0
        %1690 = vmatpush2.msra.mxu0 0.0
        %1691 = vmatprep.mubr.f32.mxu0 0.0
        %1692 = vmatmul.mubr.f32.gmra.mxu0 %v1618
        %v1693 = vpop.f32.mrf.mxu0
        %v1694 = vadd.f32 0.0, %v1693
        %v1695 = vpop.f32.mrf.mxu0
        %1696 = vmatprep.mubr.f32.mxu0 0.0
        %1697 = vmatmul.mubr.f32.gmra.mxu0 %v1621
        %v1698 = vpop.f32.mrf.mxu0
        %v1699 = vadd.f32 0.0, %v1698
        %v1700 = vpop.f32.mrf.mxu0
        %1701 = vdwg.mxu0
        %v1703 = vsel %vm687, %v933, 0
        %v1706 = vsel %vm687, %v1006, 0
        %v1709 = vsel %vm1623, %v1012, 0
        %1711 = vmatprep.subr.mxu0 0.0
        %1712 = vmatpush1.msra.mxu0 0.0
        %1713 = vmatprep.subr.mxu0 0.0
        %1714 = vmatpush1.msra.mxu0 0.0
        %1715 = vmatprep.subr.mxu0 0.0
        %1716 = vmatpush1.msra.mxu0 0.0
        %1717 = vmatprep.subr.mxu0 0.0
        %1718 = vmatpush1.msra.mxu0 0.0
        %1719 = vmatprep.subr.mxu0 0.0
        %1720 = vmatpush1.msra.mxu0 0.0
        %1721 = vmatprep.subr.mxu0 0.0
        %1722 = vmatpush1.msra.mxu0 0.0
        %1723 = vmatprep.subr.mxu0 0.0
        %1724 = vmatpush1.msra.mxu0 0.0
        %1725 = vmatprep.subr.mxu0 0.0
        %1726 = vmatpush1.msra.mxu0 0.0
        %1727 = vmatprep.subr.mxu0 0.0
        %1728 = vmatpush1.msra.mxu0 0.0
        %1729 = vmatprep.subr.mxu0 0.0
        %1730 = vmatpush1.msra.mxu0 0.0
        %1731 = vmatprep.subr.mxu0 0.0
        %1732 = vmatpush1.msra.mxu0 0.0
        %1733 = vmatprep.subr.mxu0 0.0
        %1734 = vmatpush1.msra.mxu0 0.0
        %1735 = vmatprep.subr.mxu0 0.0
        %1736 = vmatpush1.msra.mxu0 %v1709
        %1737 = vmatprep.subr.mxu0 0.0
        %1738 = vmatpush1.msra.mxu0 %v1011
        %1739 = vmatprep.subr.mxu0 0.0
        %1740 = vmatpush1.msra.mxu0 %v1010
        %1741 = vmatprep.subr.mxu0 0.0
        %1742 = vmatpush1.msra.mxu0 %v1009
        %1743 = vmatprep.subr.mxu0 0.0
        %1744 = vmatpush2.msra.mxu0 0.0
        %1745 = vmatprep.subr.mxu0 0.0
        %1746 = vmatpush2.msra.mxu0 0.0
        %1747 = vmatprep.subr.mxu0 0.0
        %1748 = vmatpush2.msra.mxu0 0.0
        %1749 = vmatprep.subr.mxu0 0.0
        %1750 = vmatpush2.msra.mxu0 0.0
        %1751 = vmatprep.subr.mxu0 0.0
        %1752 = vmatpush2.msra.mxu0 0.0
        %1753 = vmatprep.subr.mxu0 0.0
        %1754 = vmatpush2.msra.mxu0 0.0
        %1755 = vmatprep.subr.mxu0 0.0
        %1756 = vmatpush2.msra.mxu0 0.0
        %1757 = vmatprep.subr.mxu0 0.0
        %1758 = vmatpush2.msra.mxu0 0.0
        %1759 = vmatprep.subr.mxu0 0.0
        %1760 = vmatpush2.msra.mxu0 0.0
        %1761 = vmatprep.subr.mxu0 0.0
        %1762 = vmatpush2.msra.mxu0 0.0
        %1763 = vmatprep.subr.mxu0 0.0
        %1764 = vmatpush2.msra.mxu0 0.0
        %1765 = vmatprep.subr.mxu0 0.0
        %1766 = vmatpush2.msra.mxu0 0.0
        %1767 = vmatprep.subr.mxu0 0.0
        %1768 = vmatpush2.msra.mxu0 0.0
        %1769 = vmatprep.subr.mxu0 0.0
        %1770 = vmatpush2.msra.mxu0 0.0
        %1771 = vmatprep.subr.mxu0 0.0
        %1772 = vmatpush2.msra.mxu0 0.0
        %1773 = vmatprep.subr.mxu0 0.0
        %1774 = vmatpush2.msra.mxu0 0.0
        %1775 = vmatprep.mubr.f32.mxu0 0.0
        %1776 = vmatmul.mubr.f32.gmra.mxu0 %v1703
        %v1777 = vpop.f32.mrf.mxu0
        %v1778 = vadd.f32 %v1694, %v1777
        %v1779 = vpop.f32.mrf.mxu0
        %1780 = vmatprep.mubr.f32.mxu0 0.0
        %1781 = vmatmul.mubr.f32.gmra.mxu0 %v1706
        %v1782 = vpop.f32.mrf.mxu0
        %v1783 = vadd.f32 %v1699, %v1782
        %v1784 = vpop.f32.mrf.mxu0
        %1785 = vdwg.mxu0
        %v1786 = vld [vmem:[%s388 + $0x6] sm:$0x1]
        %v1788 = vlaneseq
        %v1789 = vshrl.u32 %v1788, 7
        %v1790 = vsub.s32 0, %v1789
        %v1791 = vrot.slane %v1786, %v1790
        %v1793 = vadd.f32 %v1778, %v1791
        %v1794 = vadd.f32 %v1783, %v1791
        %v1795 = vadd.f32 %v399, %v1793
        %v1796 = vadd.f32 %v400, %v1794
        %v1797 = vld [vmem:[%s388 + $0x7] sm:$0x1]
        %v1798 = vld [vmem:[%s388 + $0x8] sm:$0x1]
        %v1799 = vsel %vm415, %v1795, 0.0
        %1800 = vadd.xlane.f32.xlu0 %v1799
        %v1801 = vpop.xlane.xlu0 %1800
        %v1802 = vsel %vm415, %v1796, 0.0
        %1803 = vadd.xlane.f32.xlu0 %v1802
        %v1804 = vpop.xlane.xlu0 %1803
        %v1805 = vrcp.pop 50.0
        %v1806 = vmul.f32 %v1801, %v1805
        %v1807 = vmul.f32 %v1804, %v1805
        %v1808 = vsub.f32 %v1795, %v1806
        %v1809 = vsub.f32 %v1796, %v1807
        %v1810 = vmul.f32 %v1808, %v1808
        %v1811 = vmul.f32 %v1809, %v1809
        %v1812 = vsel %vm415, %v1810, 0.0
        %1813 = vadd.xlane.f32.xlu0 %v1812
        %v1814 = vpop.xlane.xlu0 %1813
        %v1815 = vsel %vm415, %v1811, 0.0
        %1816 = vadd.xlane.f32.xlu0 %v1815
        %v1817 = vpop.xlane.xlu0 %1816
        %v1818 = vmul.f32 %v1814, %v1805
        %v1819 = vmul.f32 %v1817, %v1805
        %v1820 = vadd.f32 %v1818, 1e-05
        %v1821 = vadd.f32 %v1819, 1e-05
        %v1822 = vrsqrt.pop %v1820
        %v1823 = vrsqrt.pop %v1821
        %v1824 = vmul.f32 %v1808, %v1822
        %v1825 = vmul.f32 %v1809, %v1823
        %v1827 = vlaneseq
        %v1828 = vshrl.u32 %v1827, 7
        %v1829 = vsub.s32 0, %v1828
        %v1830 = vrot.slane %v1797, %v1829
        %v1832 = vmul.f32 %v1824, %v1830
        %v1833 = vmul.f32 %v1825, %v1830
        %v1835 = vlaneseq
        %v1836 = vshrl.u32 %v1835, 7
        %v1837 = vsub.s32 0, %v1836
        %v1838 = vrot.slane %v1798, %v1837
        %v1840 = vadd.f32 %v1832, %v1838
        %v1841 = vadd.f32 %v1833, %v1838
        %v1842 = vpack.c.bf16 %v1841, %v1840
        %v1843 = vld [vmem:[%s384] sm:$0xff]
        %v1844 = vld [vmem:[%s384 + $0x8] sm:$0xff]
        %v1845 = vld [vmem:[%s384 + $0x10] sm:$0xff]
        %v1846 = vld [vmem:[%s384 + $0x18] sm:$0xff]
        %v1847 = vld [vmem:[%s384 + $0x40] sm:$0xff]
        %v1848 = vld [vmem:[%s384 + $0x48] sm:$0xff]
        %v1849 = vld [vmem:[%s384 + $0x50] sm:$0xff]
        %v1850 = vld [vmem:[%s384 + $0x58] sm:$0xff]
        %v1851 = vld [vmem:[%s384 + $0x80] sm:$0xff]
        %v1852 = vld [vmem:[%s384 + $0x88] sm:$0xff]
        %v1853 = vld [vmem:[%s384 + $0x90] sm:$0xff]
        %v1854 = vld [vmem:[%s384 + $0x98] sm:$0xff]
        %v1855 = vld [vmem:[%s384 + $0xc0] sm:$0xff]
        %v1856 = vld [vmem:[%s384 + $0xc8] sm:$0xff]
        %v1857 = vld [vmem:[%s384 + $0xd0] sm:$0xff]
        %v1858 = vld [vmem:[%s384 + $0xd8] sm:$0xff]
        %v1859 = vld [vmem:[%s384 + $0x100] sm:$0xff]
        %v1860 = vld [vmem:[%s384 + $0x108] sm:$0xff]
        %v1861 = vld [vmem:[%s384 + $0x110] sm:$0xff]
        %v1862 = vld [vmem:[%s384 + $0x118] sm:$0xff]
        %v1863 = vld [vmem:[%s384 + $0x140] sm:$0xff]
        %v1864 = vld [vmem:[%s384 + $0x148] sm:$0xff]
        %v1865 = vld [vmem:[%s384 + $0x150] sm:$0xff]
        %v1866 = vld [vmem:[%s384 + $0x158] sm:$0xff]
        %v1867 = vld [vmem:[%s384 + $0x180] sm:$0x11]
        %v1868 = vld [vmem:[%s384 + $0x188] sm:$0x11]
        %v1869 = vld [vmem:[%s384 + $0x190] sm:$0x11]
        %v1870 = vld [vmem:[%s384 + $0x198] sm:$0x11]
        %v1871 = vld [vmem:[%s388 + $0xc] sm:$0xff]
        %v1873 = vlaneseq
        %v1874 = vshrl.u32 %v1873, 7
        %v1875 = vsub.s32 0, %v1874
        %v1876 = vrot.slane %v1871, %v1875
        %v1877 = vlaneseq
        %v1878 = vshrl.u32 %v1877, 7
        %v1879 = vsub.s32 1, %v1878
        %v1880 = vrot.slane %v1871, %v1879
        %v1881 = vlaneseq
        %v1882 = vshrl.u32 %v1881, 7
        %v1883 = vsub.s32 2, %v1882
        %v1884 = vrot.slane %v1871, %v1883
        %v1885 = vlaneseq
        %v1886 = vshrl.u32 %v1885, 7
        %v1887 = vsub.s32 3, %v1886
        %v1888 = vrot.slane %v1871, %v1887
        %v1889 = vlaneseq
        %v1890 = vshrl.u32 %v1889, 7
        %v1891 = vsub.s32 4, %v1890
        %v1892 = vrot.slane %v1871, %v1891
        %v1893 = vlaneseq
        %v1894 = vshrl.u32 %v1893, 7
        %v1895 = vsub.s32 5, %v1894
        %v1896 = vrot.slane %v1871, %v1895
        %v1897 = vlaneseq
        %v1898 = vshrl.u32 %v1897, 7
        %v1899 = vsub.s32 6, %v1898
        %v1900 = vrot.slane %v1871, %v1899
        %v1901 = vlaneseq
        %v1902 = vshrl.u32 %v1901, 7
        %v1903 = vsub.s32 7, %v1902
        %v1904 = vrot.slane %v1871, %v1903
        %v1941 = vunpack.c.l.b16 %v1843
        %v1942 = vunpack.c.h.b16 %v1843
        %v1943 = vunpack.c.l.b16 %v1844
        %v1944 = vunpack.c.h.b16 %v1844
        %v1945 = vunpack.c.l.b16 %v1845
        %v1946 = vunpack.c.h.b16 %v1845
        %v1947 = vunpack.c.l.b16 %v1846
        %v1948 = vunpack.c.h.b16 %v1846
        %v1949 = vunpack.c.l.b16 %v1847
        %v1950 = vunpack.c.h.b16 %v1847
        %v1951 = vunpack.c.l.b16 %v1848
        %v1952 = vunpack.c.h.b16 %v1848
        %v1953 = vunpack.c.l.b16 %v1849
        %v1954 = vunpack.c.h.b16 %v1849
        %v1955 = vunpack.c.l.b16 %v1850
        %v1956 = vunpack.c.h.b16 %v1850
        %v1957 = vunpack.c.l.b16 %v1851
        %v1958 = vunpack.c.h.b16 %v1851
        %v1959 = vunpack.c.l.b16 %v1852
        %v1960 = vunpack.c.h.b16 %v1852
        %v1961 = vunpack.c.l.b16 %v1853
        %v1962 = vunpack.c.h.b16 %v1853
        %v1963 = vunpack.c.l.b16 %v1854
        %v1964 = vunpack.c.h.b16 %v1854
        %v1965 = vunpack.c.l.b16 %v1855
        %v1966 = vunpack.c.h.b16 %v1855
        %v1967 = vunpack.c.l.b16 %v1856
        %v1968 = vunpack.c.h.b16 %v1856
        %v1969 = vunpack.c.l.b16 %v1857
        %v1970 = vunpack.c.h.b16 %v1857
        %v1971 = vunpack.c.l.b16 %v1858
        %v1972 = vunpack.c.h.b16 %v1858
        %v1973 = vunpack.c.l.b16 %v1859
        %v1974 = vunpack.c.h.b16 %v1859
        %v1975 = vunpack.c.l.b16 %v1860
        %v1976 = vunpack.c.h.b16 %v1860
        %v1977 = vunpack.c.l.b16 %v1861
        %v1978 = vunpack.c.h.b16 %v1861
        %v1979 = vunpack.c.l.b16 %v1862
        %v1980 = vunpack.c.h.b16 %v1862
        %v1981 = vunpack.c.l.b16 %v1863
        %v1982 = vunpack.c.h.b16 %v1863
        %v1983 = vunpack.c.l.b16 %v1864
        %v1984 = vunpack.c.h.b16 %v1864
        %v1985 = vunpack.c.l.b16 %v1865
        %v1986 = vunpack.c.h.b16 %v1865
        %v1987 = vunpack.c.l.b16 %v1866
        %v1988 = vunpack.c.h.b16 %v1866
        %v1989 = vunpack.c.l.b16 %v1867
        %v1990 = vunpack.c.h.b16 %v1867
        %v1991 = vunpack.c.l.b16 %v1868
        %v1992 = vunpack.c.h.b16 %v1868
        %v1993 = vunpack.c.l.b16 %v1869
        %v1994 = vunpack.c.h.b16 %v1869
        %v1995 = vunpack.c.l.b16 %v1870
        %v1996 = vunpack.c.h.b16 %v1870
        %v1997 = vpack.c.b16 %v1949, %v1941
        %v1998 = vpack.c.b16 %v1950, %v1942
        %v1999 = vpack.c.b16 %v1951, %v1943
        %v2000 = vpack.c.b16 %v1952, %v1944
        %v2001 = vpack.c.b16 %v1953, %v1945
        %v2002 = vpack.c.b16 %v1954, %v1946
        %v2003 = vpack.c.b16 %v1955, %v1947
        %v2004 = vpack.c.b16 %v1956, %v1948
        %v2005 = vpack.c.b16 %v1965, %v1957
        %v2006 = vpack.c.b16 %v1966, %v1958
        %v2007 = vpack.c.b16 %v1967, %v1959
        %v2008 = vpack.c.b16 %v1968, %v1960
        %v2009 = vpack.c.b16 %v1969, %v1961
        %v2010 = vpack.c.b16 %v1970, %v1962
        %v2011 = vpack.c.b16 %v1971, %v1963
        %v2012 = vpack.c.b16 %v1972, %v1964
        %v2013 = vpack.c.b16 %v1981, %v1973
        %v2014 = vpack.c.b16 %v1982, %v1974
        %v2015 = vpack.c.b16 %v1983, %v1975
        %v2016 = vpack.c.b16 %v1984, %v1976
        %v2017 = vpack.c.b16 %v1985, %v1977
        %v2018 = vpack.c.b16 %v1986, %v1978
        %v2019 = vpack.c.b16 %v1987, %v1979
        %v2020 = vpack.c.b16 %v1988, %v1980
        %v2021 = vpack.c.b16 %v1989, %v1989
        %v2022 = vpack.c.b16 %v1990, %v1990
        %v2023 = vpack.c.b16 %v1991, %v1991
        %v2024 = vpack.c.b16 %v1992, %v1992
        %v2025 = vpack.c.b16 %v1993, %v1993
        %v2026 = vpack.c.b16 %v1994, %v1994
        %v2027 = vpack.c.b16 %v1995, %v1995
        %v2028 = vpack.c.b16 %v1996, %v1996
        %v2054 = vsel %vm415, %v1842, 0
        %v2057 = vsel %vm1623, %v2021, 0
        %v2060 = vsel %vm1623, %v2022, 0
        %v2063 = vsel %vm1623, %v2023, 0
        %v2066 = vsel %vm1623, %v2024, 0
        %v2069 = vsel %vm1623, %v2025, 0
        %v2072 = vsel %vm1623, %v2026, 0
        %v2075 = vsel %vm1623, %v2027, 0
        %v2078 = vsel %vm1623, %v2028, 0
        %2080 = vmatprep.subr.bf16.mxu0 0
        %2081 = vmatpush1.bf16.msra.mxu0 0
        %2082 = vmatprep.subr.bf16.mxu0 0
        %2083 = vmatpush1.bf16.msra.mxu0 0
        %2084 = vmatprep.subr.bf16.mxu0 0
        %2085 = vmatpush1.bf16.msra.mxu0 0
        %2086 = vmatprep.subr.bf16.mxu0 0
        %2087 = vmatpush1.bf16.msra.mxu0 0
        %2088 = vmatprep.subr.bf16.mxu0 %v2060
        %2089 = vmatpush1.bf16.msra.mxu0 %v2057
        %2090 = vmatprep.subr.bf16.mxu0 %v2014
        %2091 = vmatpush1.bf16.msra.mxu0 %v2013
        %2092 = vmatprep.subr.bf16.mxu0 %v2006
        %2093 = vmatpush1.bf16.msra.mxu0 %v2005
        %2094 = vmatprep.subr.bf16.mxu0 %v1998
        %2095 = vmatpush1.bf16.msra.mxu0 %v1997
        %2096 = vmatprep.subr.bf16.mxu0 0
        %2097 = vmatpush2.bf16.msra.mxu0 0
        %2098 = vmatprep.subr.bf16.mxu0 0
        %2099 = vmatpush2.bf16.msra.mxu0 0
        %2100 = vmatprep.subr.bf16.mxu0 0
        %2101 = vmatpush2.bf16.msra.mxu0 0
        %2102 = vmatprep.subr.bf16.mxu0 0
        %2103 = vmatpush2.bf16.msra.mxu0 0
        %2104 = vmatprep.subr.bf16.mxu0 0
        %2105 = vmatpush2.bf16.msra.mxu0 0
        %2106 = vmatprep.subr.bf16.mxu0 0
        %2107 = vmatpush2.bf16.msra.mxu0 0
        %2108 = vmatprep.subr.bf16.mxu0 0
        %2109 = vmatpush2.bf16.msra.mxu0 0
        %2110 = vmatprep.subr.bf16.mxu0 0
        %2111 = vmatpush2.bf16.msra.mxu0 0
        %2112 = vmatprep.mubr.bf16.mxu0 0
        %2113 = vmatmul.mubr.bf16.gmra.mxu0 %v2054
        %v2114 = vpop.f32.mrf.mxu0
        %v2115 = vadd.f32 %v1876, %v2114
        %v2116 = vpop.f32.mrf.mxu0
        %v2117 = vadd.f32 %v1880, %v2116
        %v2118 = vpop.f32.mrf.mxu0
        %v2119 = vadd.f32 %v1876, %v2118
        %v2120 = vpop.f32.mrf.mxu0
        %v2121 = vadd.f32 %v1880, %v2120
        %2122 = vdwg.mxu0
        %2123 = vmatprep.subr.bf16.mxu0 0
        %2124 = vmatpush1.bf16.msra.mxu0 0
        %2125 = vmatprep.subr.bf16.mxu0 0
        %2126 = vmatpush1.bf16.msra.mxu0 0
        %2127 = vmatprep.subr.bf16.mxu0 0
        %2128 = vmatpush1.bf16.msra.mxu0 0
        %2129 = vmatprep.subr.bf16.mxu0 0
        %2130 = vmatpush1.bf16.msra.mxu0 0
        %2131 = vmatprep.subr.bf16.mxu0 %v2066
        %2132 = vmatpush1.bf16.msra.mxu0 %v2063
        %2133 = vmatprep.subr.bf16.mxu0 %v2016
        %2134 = vmatpush1.bf16.msra.mxu0 %v2015
        %2135 = vmatprep.subr.bf16.mxu0 %v2008
        %2136 = vmatpush1.bf16.msra.mxu0 %v2007
        %2137 = vmatprep.subr.bf16.mxu0 %v2000
        %2138 = vmatpush1.bf16.msra.mxu0 %v1999
        %2139 = vmatprep.subr.bf16.mxu0 0
        %2140 = vmatpush2.bf16.msra.mxu0 0
        %2141 = vmatprep.subr.bf16.mxu0 0
        %2142 = vmatpush2.bf16.msra.mxu0 0
        %2143 = vmatprep.subr.bf16.mxu0 0
        %2144 = vmatpush2.bf16.msra.mxu0 0
        %2145 = vmatprep.subr.bf16.mxu0 0
        %2146 = vmatpush2.bf16.msra.mxu0 0
        %2147 = vmatprep.subr.bf16.mxu0 0
        %2148 = vmatpush2.bf16.msra.mxu0 0
        %2149 = vmatprep.subr.bf16.mxu0 0
        %2150 = vmatpush2.bf16.msra.mxu0 0
        %2151 = vmatprep.subr.bf16.mxu0 0
        %2152 = vmatpush2.bf16.msra.mxu0 0
        %2153 = vmatprep.subr.bf16.mxu0 0
        %2154 = vmatpush2.bf16.msra.mxu0 0
        %2155 = vmatprep.mubr.bf16.mxu0 0
        %2156 = vmatmul.mubr.bf16.gmra.mxu0 %v2054
        %v2157 = vpop.f32.mrf.mxu0
        %v2158 = vadd.f32 %v1884, %v2157
        %v2159 = vpop.f32.mrf.mxu0
        %v2160 = vadd.f32 %v1888, %v2159
        %v2161 = vpop.f32.mrf.mxu0
        %v2162 = vadd.f32 %v1884, %v2161
        %v2163 = vpop.f32.mrf.mxu0
        %v2164 = vadd.f32 %v1888, %v2163
        %2165 = vdwg.mxu0
        %2166 = vmatprep.subr.bf16.mxu0 0
        %2167 = vmatpush1.bf16.msra.mxu0 0
        %2168 = vmatprep.subr.bf16.mxu0 0
        %2169 = vmatpush1.bf16.msra.mxu0 0
        %2170 = vmatprep.subr.bf16.mxu0 0
        %2171 = vmatpush1.bf16.msra.mxu0 0
        %2172 = vmatprep.subr.bf16.mxu0 0
        %2173 = vmatpush1.bf16.msra.mxu0 0
        %2174 = vmatprep.subr.bf16.mxu0 %v2072
        %2175 = vmatpush1.bf16.msra.mxu0 %v2069
        %2176 = vmatprep.subr.bf16.mxu0 %v2018
        %2177 = vmatpush1.bf16.msra.mxu0 %v2017
        %2178 = vmatprep.subr.bf16.mxu0 %v2010
        %2179 = vmatpush1.bf16.msra.mxu0 %v2009
        %2180 = vmatprep.subr.bf16.mxu0 %v2002
        %2181 = vmatpush1.bf16.msra.mxu0 %v2001
        %2182 = vmatprep.subr.bf16.mxu0 0
        %2183 = vmatpush2.bf16.msra.mxu0 0
        %2184 = vmatprep.subr.bf16.mxu0 0
        %2185 = vmatpush2.bf16.msra.mxu0 0
        %2186 = vmatprep.subr.bf16.mxu0 0
        %2187 = vmatpush2.bf16.msra.mxu0 0
        %2188 = vmatprep.subr.bf16.mxu0 0
        %2189 = vmatpush2.bf16.msra.mxu0 0
        %2190 = vmatprep.subr.bf16.mxu0 0
        %2191 = vmatpush2.bf16.msra.mxu0 0
        %2192 = vmatprep.subr.bf16.mxu0 0
        %2193 = vmatpush2.bf16.msra.mxu0 0
        %2194 = vmatprep.subr.bf16.mxu0 0
        %2195 = vmatpush2.bf16.msra.mxu0 0
        %2196 = vmatprep.subr.bf16.mxu0 0
        %2197 = vmatpush2.bf16.msra.mxu0 0
        %2198 = vmatprep.mubr.bf16.mxu0 0
        %2199 = vmatmul.mubr.bf16.gmra.mxu0 %v2054
        %v2200 = vpop.f32.mrf.mxu0
        %v2201 = vadd.f32 %v1892, %v2200
        %v2202 = vpop.f32.mrf.mxu0
        %v2203 = vadd.f32 %v1896, %v2202
        %v2204 = vpop.f32.mrf.mxu0
        %v2205 = vadd.f32 %v1892, %v2204
        %v2206 = vpop.f32.mrf.mxu0
        %v2207 = vadd.f32 %v1896, %v2206
        %2208 = vdwg.mxu0
        %2209 = vmatprep.subr.bf16.mxu0 0
        %2210 = vmatpush1.bf16.msra.mxu0 0
        %2211 = vmatprep.subr.bf16.mxu0 0
        %2212 = vmatpush1.bf16.msra.mxu0 0
        %2213 = vmatprep.subr.bf16.mxu0 0
        %2214 = vmatpush1.bf16.msra.mxu0 0
        %2215 = vmatprep.subr.bf16.mxu0 0
        %2216 = vmatpush1.bf16.msra.mxu0 0
        %2217 = vmatprep.subr.bf16.mxu0 %v2078
        %2218 = vmatpush1.bf16.msra.mxu0 %v2075
        %2219 = vmatprep.subr.bf16.mxu0 %v2020
        %2220 = vmatpush1.bf16.msra.mxu0 %v2019
        %2221 = vmatprep.subr.bf16.mxu0 %v2012
        %2222 = vmatpush1.bf16.msra.mxu0 %v2011
        %2223 = vmatprep.subr.bf16.mxu0 %v2004
        %2224 = vmatpush1.bf16.msra.mxu0 %v2003
        %2225 = vmatprep.subr.bf16.mxu0 0
        %2226 = vmatpush2.bf16.msra.mxu0 0
        %2227 = vmatprep.subr.bf16.mxu0 0
        %2228 = vmatpush2.bf16.msra.mxu0 0
        %2229 = vmatprep.subr.bf16.mxu0 0
        %2230 = vmatpush2.bf16.msra.mxu0 0
        %2231 = vmatprep.subr.bf16.mxu0 0
        %2232 = vmatpush2.bf16.msra.mxu0 0
        %2233 = vmatprep.subr.bf16.mxu0 0
        %2234 = vmatpush2.bf16.msra.mxu0 0
        %2235 = vmatprep.subr.bf16.mxu0 0
        %2236 = vmatpush2.bf16.msra.mxu0 0
        %2237 = vmatprep.subr.bf16.mxu0 0
        %2238 = vmatpush2.bf16.msra.mxu0 0
        %2239 = vmatprep.subr.bf16.mxu0 0
        %2240 = vmatpush2.bf16.msra.mxu0 0
        %2241 = vmatprep.mubr.bf16.mxu0 0
        %2242 = vmatmul.mubr.bf16.gmra.mxu0 %v2054
        %v2243 = vpop.f32.mrf.mxu0
        %v2244 = vadd.f32 %v1900, %v2243
        %v2245 = vpop.f32.mrf.mxu0
        %v2246 = vadd.f32 %v1904, %v2245
        %v2247 = vpop.f32.mrf.mxu0
        %v2248 = vadd.f32 %v1900, %v2247
        %v2249 = vpop.f32.mrf.mxu0
        %v2250 = vadd.f32 %v1904, %v2249
        %2251 = vdwg.mxu0
        %v2252 = vmax.f32 %v2115, 0.0
        %v2253 = vmax.f32 %v2117, 0.0
        %v2254 = vmax.f32 %v2158, 0.0
        %v2255 = vmax.f32 %v2160, 0.0
        %v2256 = vmax.f32 %v2201, 0.0
        %v2257 = vmax.f32 %v2203, 0.0
        %v2258 = vmax.f32 %v2244, 0.0
        %v2259 = vmax.f32 %v2246, 0.0
        %v2260 = vmax.f32 %v2119, 0.0
        %v2261 = vmax.f32 %v2121, 0.0
        %v2262 = vmax.f32 %v2162, 0.0
        %v2263 = vmax.f32 %v2164, 0.0
        %v2264 = vmax.f32 %v2205, 0.0
        %v2265 = vmax.f32 %v2207, 0.0
        %v2266 = vmax.f32 %v2248, 0.0
        %v2267 = vmax.f32 %v2250, 0.0
        %v2268 = vpack.c.bf16 %v2260, %v2252
        %v2269 = vpack.c.bf16 %v2261, %v2253
        %v2270 = vpack.c.bf16 %v2262, %v2254
        %v2271 = vpack.c.bf16 %v2263, %v2255
        %v2272 = vpack.c.bf16 %v2264, %v2256
        %v2273 = vpack.c.bf16 %v2265, %v2257
        %v2274 = vpack.c.bf16 %v2266, %v2258
        %v2275 = vpack.c.bf16 %v2267, %v2259
        %v2276 = vld [vmem:[%s323] sm:$0xff]
        %v2277 = vld [vmem:[%s323 + $0x8] sm:$0xff]
        %v2278 = vld [vmem:[%s323 + $0x10] sm:$0xff]
        %v2279 = vld [vmem:[%s323 + $0x18] sm:$0xff]
        %v2280 = vld [vmem:[%s323 + $0x40] sm:$0xff]
        %v2281 = vld [vmem:[%s323 + $0x48] sm:$0xff]
        %v2282 = vld [vmem:[%s323 + $0x50] sm:$0xff]
        %v2283 = vld [vmem:[%s323 + $0x58] sm:$0xff]
        %v2284 = vld [vmem:[%s323 + $0x80] sm:$0xff]
        %v2285 = vld [vmem:[%s323 + $0x88] sm:$0xff]
        %v2286 = vld [vmem:[%s323 + $0x90] sm:$0xff]
        %v2287 = vld [vmem:[%s323 + $0x98] sm:$0xff]
        %v2288 = vld [vmem:[%s323 + $0xc0] sm:$0xff]
        %v2289 = vld [vmem:[%s323 + $0xc8] sm:$0xff]
        %v2290 = vld [vmem:[%s323 + $0xd0] sm:$0xff]
        %v2291 = vld [vmem:[%s323 + $0xd8] sm:$0xff]
        %v2292 = vld [vmem:[%s323 + $0x100] sm:$0xff]
        %v2293 = vld [vmem:[%s323 + $0x108] sm:$0xff]
        %v2294 = vld [vmem:[%s323 + $0x110] sm:$0xff]
        %v2295 = vld [vmem:[%s323 + $0x118] sm:$0xff]
        %v2296 = vld [vmem:[%s323 + $0x140] sm:$0xff]
        %v2297 = vld [vmem:[%s323 + $0x148] sm:$0xff]
        %v2298 = vld [vmem:[%s323 + $0x150] sm:$0xff]
        %v2299 = vld [vmem:[%s323 + $0x158] sm:$0xff]
        %v2300 = vld [vmem:[%s323 + $0x180] sm:$0x11]
        %v2301 = vld [vmem:[%s323 + $0x188] sm:$0x11]
        %v2302 = vld [vmem:[%s323 + $0x190] sm:$0x11]
        %v2303 = vld [vmem:[%s323 + $0x198] sm:$0x11]
        %v2304 = vld [vmem:[%s384 + $0x20] sm:$0xff]
        %v2305 = vld [vmem:[%s384 + $0x28] sm:$0xff]
        %v2306 = vld [vmem:[%s384 + $0x30] sm:$0xff]
        %v2307 = vld [vmem:[%s384 + $0x38] sm:$0xff]
        %v2308 = vld [vmem:[%s384 + $0x60] sm:$0xff]
        %v2309 = vld [vmem:[%s384 + $0x68] sm:$0xff]
        %v2310 = vld [vmem:[%s384 + $0x70] sm:$0xff]
        %v2311 = vld [vmem:[%s384 + $0x78] sm:$0xff]
        %v2312 = vld [vmem:[%s384 + $0xa0] sm:$0xff]
        %v2313 = vld [vmem:[%s384 + $0xa8] sm:$0xff]
        %v2314 = vld [vmem:[%s384 + $0xb0] sm:$0xff]
        %v2315 = vld [vmem:[%s384 + $0xb8] sm:$0xff]
        %v2316 = vld [vmem:[%s384 + $0xe0] sm:$0xff]
        %v2317 = vld [vmem:[%s384 + $0xe8] sm:$0xff]
        %v2318 = vld [vmem:[%s384 + $0xf0] sm:$0xff]
        %v2319 = vld [vmem:[%s384 + $0xf8] sm:$0xff]
        %v2320 = vld [vmem:[%s384 + $0x120] sm:$0xff]
        %v2321 = vld [vmem:[%s384 + $0x128] sm:$0xff]
        %v2322 = vld [vmem:[%s384 + $0x130] sm:$0xff]
        %v2323 = vld [vmem:[%s384 + $0x138] sm:$0xff]
        %v2324 = vld [vmem:[%s384 + $0x160] sm:$0xff]
        %v2325 = vld [vmem:[%s384 + $0x168] sm:$0xff]
        %v2326 = vld [vmem:[%s384 + $0x170] sm:$0xff]
        %v2327 = vld [vmem:[%s384 + $0x178] sm:$0xff]
        %v2328 = vld [vmem:[%s384 + $0x1a0] sm:$0x11]
        %v2329 = vld [vmem:[%s384 + $0x1a8] sm:$0x11]
        %v2330 = vld [vmem:[%s384 + $0x1b0] sm:$0x11]
        %v2331 = vld [vmem:[%s384 + $0x1b8] sm:$0x11]
        %v2332 = vld [vmem:[%s388 + $0x14] sm:$0xff]
        %v2334 = vlaneseq
        %v2335 = vshrl.u32 %v2334, 7
        %v2336 = vsub.s32 0, %v2335
        %v2337 = vrot.slane %v2332, %v2336
        %v2338 = vlaneseq
        %v2339 = vshrl.u32 %v2338, 7
        %v2340 = vsub.s32 1, %v2339
        %v2341 = vrot.slane %v2332, %v2340
        %v2342 = vlaneseq
        %v2343 = vshrl.u32 %v2342, 7
        %v2344 = vsub.s32 2, %v2343
        %v2345 = vrot.slane %v2332, %v2344
        %v2346 = vlaneseq
        %v2347 = vshrl.u32 %v2346, 7
        %v2348 = vsub.s32 3, %v2347
        %v2349 = vrot.slane %v2332, %v2348
        %v2350 = vlaneseq
        %v2351 = vshrl.u32 %v2350, 7
        %v2352 = vsub.s32 4, %v2351
        %v2353 = vrot.slane %v2332, %v2352
        %v2354 = vlaneseq
        %v2355 = vshrl.u32 %v2354, 7
        %v2356 = vsub.s32 5, %v2355
        %v2357 = vrot.slane %v2332, %v2356
        %v2358 = vlaneseq
        %v2359 = vshrl.u32 %v2358, 7
        %v2360 = vsub.s32 6, %v2359
        %v2361 = vrot.slane %v2332, %v2360
        %v2362 = vlaneseq
        %v2363 = vshrl.u32 %v2362, 7
        %v2364 = vsub.s32 7, %v2363
        %v2365 = vrot.slane %v2332, %v2364
        %v2402 = vunpack.c.l.b16 %v2304
        %v2403 = vunpack.c.h.b16 %v2304
        %v2404 = vunpack.c.l.b16 %v2305
        %v2405 = vunpack.c.h.b16 %v2305
        %v2406 = vunpack.c.l.b16 %v2306
        %v2407 = vunpack.c.h.b16 %v2306
        %v2408 = vunpack.c.l.b16 %v2307
        %v2409 = vunpack.c.h.b16 %v2307
        %v2410 = vunpack.c.l.b16 %v2308
        %v2411 = vunpack.c.h.b16 %v2308
        %v2412 = vunpack.c.l.b16 %v2309
        %v2413 = vunpack.c.h.b16 %v2309
        %v2414 = vunpack.c.l.b16 %v2310
        %v2415 = vunpack.c.h.b16 %v2310
        %v2416 = vunpack.c.l.b16 %v2311
        %v2417 = vunpack.c.h.b16 %v2311
        %v2418 = vunpack.c.l.b16 %v2312
        %v2419 = vunpack.c.h.b16 %v2312
        %v2420 = vunpack.c.l.b16 %v2313
        %v2421 = vunpack.c.h.b16 %v2313
        %v2422 = vunpack.c.l.b16 %v2314
        %v2423 = vunpack.c.h.b16 %v2314
        %v2424 = vunpack.c.l.b16 %v2315
        %v2425 = vunpack.c.h.b16 %v2315
        %v2426 = vunpack.c.l.b16 %v2316
        %v2427 = vunpack.c.h.b16 %v2316
        %v2428 = vunpack.c.l.b16 %v2317
        %v2429 = vunpack.c.h.b16 %v2317
        %v2430 = vunpack.c.l.b16 %v2318
        %v2431 = vunpack.c.h.b16 %v2318
        %v2432 = vunpack.c.l.b16 %v2319
        %v2433 = vunpack.c.h.b16 %v2319
        %v2434 = vunpack.c.l.b16 %v2320
        %v2435 = vunpack.c.h.b16 %v2320
        %v2436 = vunpack.c.l.b16 %v2321
        %v2437 = vunpack.c.h.b16 %v2321
        %v2438 = vunpack.c.l.b16 %v2322
        %v2439 = vunpack.c.h.b16 %v2322
        %v2440 = vunpack.c.l.b16 %v2323
        %v2441 = vunpack.c.h.b16 %v2323
        %v2442 = vunpack.c.l.b16 %v2324
        %v2443 = vunpack.c.h.b16 %v2324
        %v2444 = vunpack.c.l.b16 %v2325
        %v2445 = vunpack.c.h.b16 %v2325
        %v2446 = vunpack.c.l.b16 %v2326
        %v2447 = vunpack.c.h.b16 %v2326
        %v2448 = vunpack.c.l.b16 %v2327
        %v2449 = vunpack.c.h.b16 %v2327
        %v2450 = vunpack.c.l.b16 %v2328
        %v2451 = vunpack.c.h.b16 %v2328
        %v2452 = vunpack.c.l.b16 %v2329
        %v2453 = vunpack.c.h.b16 %v2329
        %v2454 = vunpack.c.l.b16 %v2330
        %v2455 = vunpack.c.h.b16 %v2330
        %v2456 = vunpack.c.l.b16 %v2331
        %v2457 = vunpack.c.h.b16 %v2331
        %v2458 = vpack.c.b16 %v2410, %v2402
        %v2459 = vpack.c.b16 %v2411, %v2403
        %v2460 = vpack.c.b16 %v2412, %v2404
        %v2461 = vpack.c.b16 %v2413, %v2405
        %v2462 = vpack.c.b16 %v2414, %v2406
        %v2463 = vpack.c.b16 %v2415, %v2407
        %v2464 = vpack.c.b16 %v2416, %v2408
        %v2465 = vpack.c.b16 %v2417, %v2409
        %v2466 = vpack.c.b16 %v2426, %v2418
        %v2467 = vpack.c.b16 %v2427, %v2419
        %v2468 = vpack.c.b16 %v2428, %v2420
        %v2469 = vpack.c.b16 %v2429, %v2421
        %v2470 = vpack.c.b16 %v2430, %v2422
        %v2471 = vpack.c.b16 %v2431, %v2423
        %v2472 = vpack.c.b16 %v2432, %v2424
        %v2473 = vpack.c.b16 %v2433, %v2425
        %v2474 = vpack.c.b16 %v2442, %v2434
        %v2475 = vpack.c.b16 %v2443, %v2435
        %v2476 = vpack.c.b16 %v2444, %v2436
        %v2477 = vpack.c.b16 %v2445, %v2437
        %v2478 = vpack.c.b16 %v2446, %v2438
        %v2479 = vpack.c.b16 %v2447, %v2439
        %v2480 = vpack.c.b16 %v2448, %v2440
        %v2481 = vpack.c.b16 %v2449, %v2441
        %v2482 = vpack.c.b16 %v2450, %v2450
        %v2483 = vpack.c.b16 %v2451, %v2451
        %v2484 = vpack.c.b16 %v2452, %v2452
        %v2485 = vpack.c.b16 %v2453, %v2453
        %v2486 = vpack.c.b16 %v2454, %v2454
        %v2487 = vpack.c.b16 %v2455, %v2455
        %v2488 = vpack.c.b16 %v2456, %v2456
        %v2489 = vpack.c.b16 %v2457, %v2457
        %v2515 = vsel %vm1623, %v2482, 0
        %v2518 = vsel %vm1623, %v2483, 0
        %v2521 = vsel %vm1623, %v2484, 0
        %v2524 = vsel %vm1623, %v2485, 0
        %v2527 = vsel %vm1623, %v2486, 0
        %v2530 = vsel %vm1623, %v2487, 0
        %v2533 = vsel %vm1623, %v2488, 0
        %v2536 = vsel %vm1623, %v2489, 0
        %2538 = vmatprep.subr.bf16.mxu0 0
        %2539 = vmatpush1.bf16.msra.mxu0 0
        %2540 = vmatprep.subr.bf16.mxu0 0
        %2541 = vmatpush1.bf16.msra.mxu0 0
        %2542 = vmatprep.subr.bf16.mxu0 0
        %2543 = vmatpush1.bf16.msra.mxu0 0
        %2544 = vmatprep.subr.bf16.mxu0 0
        %2545 = vmatpush1.bf16.msra.mxu0 0
        %2546 = vmatprep.subr.bf16.mxu0 %v2518
        %2547 = vmatpush1.bf16.msra.mxu0 %v2515
        %2548 = vmatprep.subr.bf16.mxu0 %v2475
        %2549 = vmatpush1.bf16.msra.mxu0 %v2474
        %2550 = vmatprep.subr.bf16.mxu0 %v2467
        %2551 = vmatpush1.bf16.msra.mxu0 %v2466
        %2552 = vmatprep.subr.bf16.mxu0 %v2459
        %2553 = vmatpush1.bf16.msra.mxu0 %v2458
        %2554 = vmatprep.subr.bf16.mxu0 0
        %2555 = vmatpush2.bf16.msra.mxu0 0
        %2556 = vmatprep.subr.bf16.mxu0 0
        %2557 = vmatpush2.bf16.msra.mxu0 0
        %2558 = vmatprep.subr.bf16.mxu0 0
        %2559 = vmatpush2.bf16.msra.mxu0 0
        %2560 = vmatprep.subr.bf16.mxu0 0
        %2561 = vmatpush2.bf16.msra.mxu0 0
        %2562 = vmatprep.subr.bf16.mxu0 0
        %2563 = vmatpush2.bf16.msra.mxu0 0
        %2564 = vmatprep.subr.bf16.mxu0 0
        %2565 = vmatpush2.bf16.msra.mxu0 0
        %2566 = vmatprep.subr.bf16.mxu0 0
        %2567 = vmatpush2.bf16.msra.mxu0 0
        %2568 = vmatprep.subr.bf16.mxu0 0
        %2569 = vmatpush2.bf16.msra.mxu0 0
        %2570 = vmatprep.mubr.bf16.mxu0 0
        %2571 = vmatmul.mubr.bf16.gmra.mxu0 %v2054
        %v2572 = vpop.f32.mrf.mxu0
        %v2573 = vadd.f32 %v2337, %v2572
        %v2574 = vpop.f32.mrf.mxu0
        %v2575 = vadd.f32 %v2341, %v2574
        %v2576 = vpop.f32.mrf.mxu0
        %v2577 = vadd.f32 %v2337, %v2576
        %v2578 = vpop.f32.mrf.mxu0
        %v2579 = vadd.f32 %v2341, %v2578
        %2580 = vdwg.mxu0
        %2581 = vmatprep.subr.bf16.mxu0 0
        %2582 = vmatpush1.bf16.msra.mxu0 0
        %2583 = vmatprep.subr.bf16.mxu0 0
        %2584 = vmatpush1.bf16.msra.mxu0 0
        %2585 = vmatprep.subr.bf16.mxu0 0
        %2586 = vmatpush1.bf16.msra.mxu0 0
        %2587 = vmatprep.subr.bf16.mxu0 0
        %2588 = vmatpush1.bf16.msra.mxu0 0
        %2589 = vmatprep.subr.bf16.mxu0 %v2524
        %2590 = vmatpush1.bf16.msra.mxu0 %v2521
        %2591 = vmatprep.subr.bf16.mxu0 %v2477
        %2592 = vmatpush1.bf16.msra.mxu0 %v2476
        %2593 = vmatprep.subr.bf16.mxu0 %v2469
        %2594 = vmatpush1.bf16.msra.mxu0 %v2468
        %2595 = vmatprep.subr.bf16.mxu0 %v2461
        %2596 = vmatpush1.bf16.msra.mxu0 %v2460
        %2597 = vmatprep.subr.bf16.mxu0 0
        %2598 = vmatpush2.bf16.msra.mxu0 0
        %2599 = vmatprep.subr.bf16.mxu0 0
        %2600 = vmatpush2.bf16.msra.mxu0 0
        %2601 = vmatprep.subr.bf16.mxu0 0
        %2602 = vmatpush2.bf16.msra.mxu0 0
        %2603 = vmatprep.subr.bf16.mxu0 0
        %2604 = vmatpush2.bf16.msra.mxu0 0
        %2605 = vmatprep.subr.bf16.mxu0 0
        %2606 = vmatpush2.bf16.msra.mxu0 0
        %2607 = vmatprep.subr.bf16.mxu0 0
        %2608 = vmatpush2.bf16.msra.mxu0 0
        %2609 = vmatprep.subr.bf16.mxu0 0
        %2610 = vmatpush2.bf16.msra.mxu0 0
        %2611 = vmatprep.subr.bf16.mxu0 0
        %2612 = vmatpush2.bf16.msra.mxu0 0
        %2613 = vmatprep.mubr.bf16.mxu0 0
        %2614 = vmatmul.mubr.bf16.gmra.mxu0 %v2054
        %v2615 = vpop.f32.mrf.mxu0
        %v2616 = vadd.f32 %v2345, %v2615
        %v2617 = vpop.f32.mrf.mxu0
        %v2618 = vadd.f32 %v2349, %v2617
        %v2619 = vpop.f32.mrf.mxu0
        %v2620 = vadd.f32 %v2345, %v2619
        %v2621 = vpop.f32.mrf.mxu0
        %v2622 = vadd.f32 %v2349, %v2621
        %2623 = vdwg.mxu0
        %2624 = vmatprep.subr.bf16.mxu0 0
        %2625 = vmatpush1.bf16.msra.mxu0 0
        %2626 = vmatprep.subr.bf16.mxu0 0
        %2627 = vmatpush1.bf16.msra.mxu0 0
        %2628 = vmatprep.subr.bf16.mxu0 0
        %2629 = vmatpush1.bf16.msra.mxu0 0
        %2630 = vmatprep.subr.bf16.mxu0 0
        %2631 = vmatpush1.bf16.msra.mxu0 0
        %2632 = vmatprep.subr.bf16.mxu0 %v2530
        %2633 = vmatpush1.bf16.msra.mxu0 %v2527
        %2634 = vmatprep.subr.bf16.mxu0 %v2479
        %2635 = vmatpush1.bf16.msra.mxu0 %v2478
        %2636 = vmatprep.subr.bf16.mxu0 %v2471
        %2637 = vmatpush1.bf16.msra.mxu0 %v2470
        %2638 = vmatprep.subr.bf16.mxu0 %v2463
        %2639 = vmatpush1.bf16.msra.mxu0 %v2462
        %2640 = vmatprep.subr.bf16.mxu0 0
        %2641 = vmatpush2.bf16.msra.mxu0 0
        %2642 = vmatprep.subr.bf16.mxu0 0
        %2643 = vmatpush2.bf16.msra.mxu0 0
        %2644 = vmatprep.subr.bf16.mxu0 0
        %2645 = vmatpush2.bf16.msra.mxu0 0
        %2646 = vmatprep.subr.bf16.mxu0 0
        %2647 = vmatpush2.bf16.msra.mxu0 0
        %2648 = vmatprep.subr.bf16.mxu0 0
        %2649 = vmatpush2.bf16.msra.mxu0 0
        %2650 = vmatprep.subr.bf16.mxu0 0
        %2651 = vmatpush2.bf16.msra.mxu0 0
        %2652 = vmatprep.subr.bf16.mxu0 0
        %2653 = vmatpush2.bf16.msra.mxu0 0
        %2654 = vmatprep.subr.bf16.mxu0 0
        %2655 = vmatpush2.bf16.msra.mxu0 0
        %2656 = vmatprep.mubr.bf16.mxu0 0
        %2657 = vmatmul.mubr.bf16.gmra.mxu0 %v2054
        %v2658 = vpop.f32.mrf.mxu0
        %v2659 = vadd.f32 %v2353, %v2658
        %v2660 = vpop.f32.mrf.mxu0
        %v2661 = vadd.f32 %v2357, %v2660
        %v2662 = vpop.f32.mrf.mxu0
        %v2663 = vadd.f32 %v2353, %v2662
        %v2664 = vpop.f32.mrf.mxu0
        %v2665 = vadd.f32 %v2357, %v2664
        %2666 = vdwg.mxu0
        %2667 = vmatprep.subr.bf16.mxu0 0
        %2668 = vmatpush1.bf16.msra.mxu0 0
        %2669 = vmatprep.subr.bf16.mxu0 0
        %2670 = vmatpush1.bf16.msra.mxu0 0
        %2671 = vmatprep.subr.bf16.mxu0 0
        %2672 = vmatpush1.bf16.msra.mxu0 0
        %2673 = vmatprep.subr.bf16.mxu0 0
        %2674 = vmatpush1.bf16.msra.mxu0 0
        %2675 = vmatprep.subr.bf16.mxu0 %v2536
        %2676 = vmatpush1.bf16.msra.mxu0 %v2533
        %2677 = vmatprep.subr.bf16.mxu0 %v2481
        %2678 = vmatpush1.bf16.msra.mxu0 %v2480
        %2679 = vmatprep.subr.bf16.mxu0 %v2473
        %2680 = vmatpush1.bf16.msra.mxu0 %v2472
        %2681 = vmatprep.subr.bf16.mxu0 %v2465
        %2682 = vmatpush1.bf16.msra.mxu0 %v2464
        %2683 = vmatprep.subr.bf16.mxu0 0
        %2684 = vmatpush2.bf16.msra.mxu0 0
        %2685 = vmatprep.subr.bf16.mxu0 0
        %2686 = vmatpush2.bf16.msra.mxu0 0
        %2687 = vmatprep.subr.bf16.mxu0 0
        %2688 = vmatpush2.bf16.msra.mxu0 0
        %2689 = vmatprep.subr.bf16.mxu0 0
        %2690 = vmatpush2.bf16.msra.mxu0 0
        %2691 = vmatprep.subr.bf16.mxu0 0
        %2692 = vmatpush2.bf16.msra.mxu0 0
        %2693 = vmatprep.subr.bf16.mxu0 0
        %2694 = vmatpush2.bf16.msra.mxu0 0
        %2695 = vmatprep.subr.bf16.mxu0 0
        %2696 = vmatpush2.bf16.msra.mxu0 0
        %2697 = vmatprep.subr.bf16.mxu0 0
        %2698 = vmatpush2.bf16.msra.mxu0 0
        %2699 = vmatprep.mubr.bf16.mxu0 0
        %2700 = vmatmul.mubr.bf16.gmra.mxu0 %v2054
        %v2701 = vpop.f32.mrf.mxu0
        %v2702 = vadd.f32 %v2361, %v2701
        %v2703 = vpop.f32.mrf.mxu0
        %v2704 = vadd.f32 %v2365, %v2703
        %v2705 = vpop.f32.mrf.mxu0
        %v2706 = vadd.f32 %v2361, %v2705
        %v2707 = vpop.f32.mrf.mxu0
        %v2708 = vadd.f32 %v2365, %v2707
        %2709 = vdwg.mxu0
        %v2710 = vmax.f32 %v2573, 0.0
        %v2711 = vmax.f32 %v2575, 0.0
        %v2712 = vmax.f32 %v2616, 0.0
        %v2713 = vmax.f32 %v2618, 0.0
        %v2714 = vmax.f32 %v2659, 0.0
        %v2715 = vmax.f32 %v2661, 0.0
        %v2716 = vmax.f32 %v2702, 0.0
        %v2717 = vmax.f32 %v2704, 0.0
        %v2718 = vmax.f32 %v2577, 0.0
        %v2719 = vmax.f32 %v2579, 0.0
        %v2720 = vmax.f32 %v2620, 0.0
        %v2721 = vmax.f32 %v2622, 0.0
        %v2722 = vmax.f32 %v2663, 0.0
        %v2723 = vmax.f32 %v2665, 0.0
        %v2724 = vmax.f32 %v2706, 0.0
        %v2725 = vmax.f32 %v2708, 0.0
        %v2726 = vpack.c.bf16 %v2718, %v2710
        %v2727 = vpack.c.bf16 %v2719, %v2711
        %v2728 = vpack.c.bf16 %v2720, %v2712
        %v2729 = vpack.c.bf16 %v2721, %v2713
        %v2730 = vpack.c.bf16 %v2722, %v2714
        %v2731 = vpack.c.bf16 %v2723, %v2715
        %v2732 = vpack.c.bf16 %v2724, %v2716
        %v2733 = vpack.c.bf16 %v2725, %v2717
        %v2734 = vld [vmem:[%s323 + $0x20] sm:$0xff]
        %v2735 = vld [vmem:[%s323 + $0x28] sm:$0xff]
        %v2736 = vld [vmem:[%s323 + $0x30] sm:$0xff]
        %v2737 = vld [vmem:[%s323 + $0x38] sm:$0xff]
        %v2738 = vld [vmem:[%s323 + $0x60] sm:$0xff]
        %v2739 = vld [vmem:[%s323 + $0x68] sm:$0xff]
        %v2740 = vld [vmem:[%s323 + $0x70] sm:$0xff]
        %v2741 = vld [vmem:[%s323 + $0x78] sm:$0xff]
        %v2742 = vld [vmem:[%s323 + $0xa0] sm:$0xff]
        %v2743 = vld [vmem:[%s323 + $0xa8] sm:$0xff]
        %v2744 = vld [vmem:[%s323 + $0xb0] sm:$0xff]
        %v2745 = vld [vmem:[%s323 + $0xb8] sm:$0xff]
        %v2746 = vld [vmem:[%s323 + $0xe0] sm:$0xff]
        %v2747 = vld [vmem:[%s323 + $0xe8] sm:$0xff]
        %v2748 = vld [vmem:[%s323 + $0xf0] sm:$0xff]
        %v2749 = vld [vmem:[%s323 + $0xf8] sm:$0xff]
        %v2750 = vld [vmem:[%s323 + $0x120] sm:$0xff]
        %v2751 = vld [vmem:[%s323 + $0x128] sm:$0xff]
        %v2752 = vld [vmem:[%s323 + $0x130] sm:$0xff]
        %v2753 = vld [vmem:[%s323 + $0x138] sm:$0xff]
        %v2754 = vld [vmem:[%s323 + $0x160] sm:$0xff]
        %v2755 = vld [vmem:[%s323 + $0x168] sm:$0xff]
        %v2756 = vld [vmem:[%s323 + $0x170] sm:$0xff]
        %v2757 = vld [vmem:[%s323 + $0x178] sm:$0xff]
        %v2758 = vld [vmem:[%s323 + $0x1a0] sm:$0x11]
        %v2759 = vld [vmem:[%s323 + $0x1a8] sm:$0x11]
        %v2760 = vld [vmem:[%s323 + $0x1b0] sm:$0x11]
        %v2761 = vld [vmem:[%s323 + $0x1b8] sm:$0x11]
        %v2790 = vunpack.c.l.b16 %v2734
        %v2791 = vunpack.c.h.b16 %v2734
        %v2792 = vunpack.c.l.b16 %v2735
        %v2793 = vunpack.c.h.b16 %v2735
        %v2794 = vunpack.c.l.b16 %v2736
        %v2795 = vunpack.c.h.b16 %v2736
        %v2796 = vunpack.c.l.b16 %v2737
        %v2797 = vunpack.c.h.b16 %v2737
        %v2798 = vunpack.c.l.b16 %v2738
        %v2799 = vunpack.c.h.b16 %v2738
        %v2800 = vunpack.c.l.b16 %v2739
        %v2801 = vunpack.c.h.b16 %v2739
        %v2802 = vunpack.c.l.b16 %v2740
        %v2803 = vunpack.c.h.b16 %v2740
        %v2804 = vunpack.c.l.b16 %v2741
        %v2805 = vunpack.c.h.b16 %v2741
        %v2806 = vunpack.c.l.b16 %v2742
        %v2807 = vunpack.c.h.b16 %v2742
        %v2808 = vunpack.c.l.b16 %v2743
        %v2809 = vunpack.c.h.b16 %v2743
        %v2810 = vunpack.c.l.b16 %v2744
        %v2811 = vunpack.c.h.b16 %v2744
        %v2812 = vunpack.c.l.b16 %v2745
        %v2813 = vunpack.c.h.b16 %v2745
        %v2814 = vunpack.c.l.b16 %v2746
        %v2815 = vunpack.c.h.b16 %v2746
        %v2816 = vunpack.c.l.b16 %v2747
        %v2817 = vunpack.c.h.b16 %v2747
        %v2818 = vunpack.c.l.b16 %v2748
        %v2819 = vunpack.c.h.b16 %v2748
        %v2820 = vunpack.c.l.b16 %v2749
        %v2821 = vunpack.c.h.b16 %v2749
        %v2822 = vunpack.c.l.b16 %v2750
        %v2823 = vunpack.c.h.b16 %v2750
        %v2824 = vunpack.c.l.b16 %v2751
        %v2825 = vunpack.c.h.b16 %v2751
        %v2826 = vunpack.c.l.b16 %v2752
        %v2827 = vunpack.c.h.b16 %v2752
        %v2828 = vunpack.c.l.b16 %v2753
        %v2829 = vunpack.c.h.b16 %v2753
        %v2830 = vunpack.c.l.b16 %v2754
        %v2831 = vunpack.c.h.b16 %v2754
        %v2832 = vunpack.c.l.b16 %v2755
        %v2833 = vunpack.c.h.b16 %v2755
        %v2834 = vunpack.c.l.b16 %v2756
        %v2835 = vunpack.c.h.b16 %v2756
        %v2836 = vunpack.c.l.b16 %v2757
        %v2837 = vunpack.c.h.b16 %v2757
        %v2838 = vunpack.c.l.b16 %v2758
        %v2839 = vunpack.c.h.b16 %v2758
        %v2840 = vunpack.c.l.b16 %v2759
        %v2841 = vunpack.c.h.b16 %v2759
        %v2842 = vunpack.c.l.b16 %v2760
        %v2843 = vunpack.c.h.b16 %v2760
        %v2844 = vunpack.c.l.b16 %v2761
        %v2845 = vunpack.c.h.b16 %v2761
        %v2846 = vpack.c.b16 %v2798, %v2790
        %v2847 = vpack.c.b16 %v2799, %v2791
        %v2848 = vpack.c.b16 %v2800, %v2792
        %v2849 = vpack.c.b16 %v2801, %v2793
        %v2850 = vpack.c.b16 %v2802, %v2794
        %v2851 = vpack.c.b16 %v2803, %v2795
        %v2852 = vpack.c.b16 %v2804, %v2796
        %v2853 = vpack.c.b16 %v2805, %v2797
        %v2854 = vpack.c.b16 %v2814, %v2806
        %v2855 = vpack.c.b16 %v2815, %v2807
        %v2856 = vpack.c.b16 %v2816, %v2808
        %v2857 = vpack.c.b16 %v2817, %v2809
        %v2858 = vpack.c.b16 %v2818, %v2810
        %v2859 = vpack.c.b16 %v2819, %v2811
        %v2860 = vpack.c.b16 %v2820, %v2812
        %v2861 = vpack.c.b16 %v2821, %v2813
        %v2862 = vpack.c.b16 %v2830, %v2822
        %v2863 = vpack.c.b16 %v2831, %v2823
        %v2864 = vpack.c.b16 %v2832, %v2824
        %v2865 = vpack.c.b16 %v2833, %v2825
        %v2866 = vpack.c.b16 %v2834, %v2826
        %v2867 = vpack.c.b16 %v2835, %v2827
        %v2868 = vpack.c.b16 %v2836, %v2828
        %v2869 = vpack.c.b16 %v2837, %v2829
        %v2870 = vpack.c.b16 %v2838, %v2838
        %v2871 = vpack.c.b16 %v2839, %v2839
        %v2872 = vpack.c.b16 %v2840, %v2840
        %v2873 = vpack.c.b16 %v2841, %v2841
        %v2874 = vpack.c.b16 %v2842, %v2842
        %v2875 = vpack.c.b16 %v2843, %v2843
        %v2876 = vpack.c.b16 %v2844, %v2844
        %v2877 = vpack.c.b16 %v2845, %v2845
        %2910 = vmatprep.subr.bf16.mxu0 0
        %2911 = vmatpush1.bf16.xpose.msra.mxu0 0
        %2912 = vmatprep.subr.bf16.mxu0 0
        %2913 = vmatpush1.bf16.xpose.msra.mxu0 0
        %2914 = vmatprep.subr.bf16.mxu0 0
        %2915 = vmatpush1.bf16.xpose.msra.mxu0 0
        %2916 = vmatprep.subr.bf16.mxu0 0
        %2917 = vmatpush1.bf16.xpose.msra.mxu0 0
        %2918 = vmatprep.subr.bf16.mxu0 %v2871
        %2919 = vmatpush1.bf16.xpose.msra.mxu0 %v2870
        %2920 = vmatprep.subr.bf16.mxu0 %v2863
        %2921 = vmatpush1.bf16.xpose.msra.mxu0 %v2862
        %2922 = vmatprep.subr.bf16.mxu0 %v2855
        %2923 = vmatpush1.bf16.xpose.msra.mxu0 %v2854
        %2924 = vmatprep.subr.bf16.mxu0 %v2847
        %2925 = vmatpush1.bf16.xpose.msra.mxu0 %v2846
        %2926 = vmatprep.subr.bf16.mxu0 0
        %2927 = vmatpush2.bf16.xpose.msra.mxu0 0
        %2928 = vmatprep.subr.bf16.mxu0 0
        %2929 = vmatpush2.bf16.xpose.msra.mxu0 0
        %2930 = vmatprep.subr.bf16.mxu0 0
        %2931 = vmatpush2.bf16.xpose.msra.mxu0 0
        %2932 = vmatprep.subr.bf16.mxu0 0
        %2933 = vmatpush2.bf16.xpose.msra.mxu0 0
        %2934 = vmatprep.subr.bf16.mxu0 0
        %2935 = vmatpush2.bf16.xpose.msra.mxu0 0
        %2936 = vmatprep.subr.bf16.mxu0 0
        %2937 = vmatpush2.bf16.xpose.msra.mxu0 0
        %2938 = vmatprep.subr.bf16.mxu0 0
        %2939 = vmatpush2.bf16.xpose.msra.mxu0 0
        %2940 = vmatprep.subr.bf16.mxu0 0
        %2941 = vmatpush2.bf16.xpose.msra.mxu0 0
        %2942 = vmatprep.mubr.bf16.mxu0 %v2727
        %2943 = vmatmul.mubr.bf16.gmra.mxu0 %v2726
        %v2944 = vpop.f32.mrf.mxu0
        %v2945 = vadd.f32 0.0, %v2944
        %v2946 = vpop.f32.mrf.mxu0
        %v2947 = vpop.f32.mrf.mxu0
        %v2948 = vadd.f32 0.0, %v2947
        %v2949 = vpop.f32.mrf.mxu0
        %2950 = vdwg.mxu0
        %2951 = vmatprep.subr.bf16.mxu0 0
        %2952 = vmatpush1.bf16.xpose.msra.mxu0 0
        %2953 = vmatprep.subr.bf16.mxu0 0
        %2954 = vmatpush1.bf16.xpose.msra.mxu0 0
        %2955 = vmatprep.subr.bf16.mxu0 0
        %2956 = vmatpush1.bf16.xpose.msra.mxu0 0
        %2957 = vmatprep.subr.bf16.mxu0 0
        %2958 = vmatpush1.bf16.xpose.msra.mxu0 0
        %2959 = vmatprep.subr.bf16.mxu0 %v2873
        %2960 = vmatpush1.bf16.xpose.msra.mxu0 %v2872
        %2961 = vmatprep.subr.bf16.mxu0 %v2865
        %2962 = vmatpush1.bf16.xpose.msra.mxu0 %v2864
        %2963 = vmatprep.subr.bf16.mxu0 %v2857
        %2964 = vmatpush1.bf16.xpose.msra.mxu0 %v2856
        %2965 = vmatprep.subr.bf16.mxu0 %v2849
        %2966 = vmatpush1.bf16.xpose.msra.mxu0 %v2848
        %2967 = vmatprep.subr.bf16.mxu0 0
        %2968 = vmatpush2.bf16.xpose.msra.mxu0 0
        %2969 = vmatprep.subr.bf16.mxu0 0
        %2970 = vmatpush2.bf16.xpose.msra.mxu0 0
        %2971 = vmatprep.subr.bf16.mxu0 0
        %2972 = vmatpush2.bf16.xpose.msra.mxu0 0
        %2973 = vmatprep.subr.bf16.mxu0 0
        %2974 = vmatpush2.bf16.xpose.msra.mxu0 0
        %2975 = vmatprep.subr.bf16.mxu0 0
        %2976 = vmatpush2.bf16.xpose.msra.mxu0 0
        %2977 = vmatprep.subr.bf16.mxu0 0
        %2978 = vmatpush2.bf16.xpose.msra.mxu0 0
        %2979 = vmatprep.subr.bf16.mxu0 0
        %2980 = vmatpush2.bf16.xpose.msra.mxu0 0
        %2981 = vmatprep.subr.bf16.mxu0 0
        %2982 = vmatpush2.bf16.xpose.msra.mxu0 0
        %2983 = vmatprep.mubr.bf16.mxu0 %v2729
        %2984 = vmatmul.mubr.bf16.gmra.mxu0 %v2728
        %v2985 = vpop.f32.mrf.mxu0
        %v2986 = vadd.f32 %v2945, %v2985
        %v2987 = vpop.f32.mrf.mxu0
        %v2988 = vpop.f32.mrf.mxu0
        %v2989 = vadd.f32 %v2948, %v2988
        %v2990 = vpop.f32.mrf.mxu0
        %2991 = vdwg.mxu0
        %2992 = vmatprep.subr.bf16.mxu0 0
        %2993 = vmatpush1.bf16.xpose.msra.mxu0 0
        %2994 = vmatprep.subr.bf16.mxu0 0
        %2995 = vmatpush1.bf16.xpose.msra.mxu0 0
        %2996 = vmatprep.subr.bf16.mxu0 0
        %2997 = vmatpush1.bf16.xpose.msra.mxu0 0
        %2998 = vmatprep.subr.bf16.mxu0 0
        %2999 = vmatpush1.bf16.xpose.msra.mxu0 0
        %3000 = vmatprep.subr.bf16.mxu0 %v2875
        %3001 = vmatpush1.bf16.xpose.msra.mxu0 %v2874
        %3002 = vmatprep.subr.bf16.mxu0 %v2867
        %3003 = vmatpush1.bf16.xpose.msra.mxu0 %v2866
        %3004 = vmatprep.subr.bf16.mxu0 %v2859
        %3005 = vmatpush1.bf16.xpose.msra.mxu0 %v2858
        %3006 = vmatprep.subr.bf16.mxu0 %v2851
        %3007 = vmatpush1.bf16.xpose.msra.mxu0 %v2850
        %3008 = vmatprep.subr.bf16.mxu0 0
        %3009 = vmatpush2.bf16.xpose.msra.mxu0 0
        %3010 = vmatprep.subr.bf16.mxu0 0
        %3011 = vmatpush2.bf16.xpose.msra.mxu0 0
        %3012 = vmatprep.subr.bf16.mxu0 0
        %3013 = vmatpush2.bf16.xpose.msra.mxu0 0
        %3014 = vmatprep.subr.bf16.mxu0 0
        %3015 = vmatpush2.bf16.xpose.msra.mxu0 0
        %3016 = vmatprep.subr.bf16.mxu0 0
        %3017 = vmatpush2.bf16.xpose.msra.mxu0 0
        %3018 = vmatprep.subr.bf16.mxu0 0
        %3019 = vmatpush2.bf16.xpose.msra.mxu0 0
        %3020 = vmatprep.subr.bf16.mxu0 0
        %3021 = vmatpush2.bf16.xpose.msra.mxu0 0
        %3022 = vmatprep.subr.bf16.mxu0 0
        %3023 = vmatpush2.bf16.xpose.msra.mxu0 0
        %3024 = vmatprep.mubr.bf16.mxu0 %v2731
        %3025 = vmatmul.mubr.bf16.gmra.mxu0 %v2730
        %v3026 = vpop.f32.mrf.mxu0
        %v3027 = vadd.f32 %v2986, %v3026
        %v3028 = vpop.f32.mrf.mxu0
        %v3029 = vpop.f32.mrf.mxu0
        %v3030 = vadd.f32 %v2989, %v3029
        %v3031 = vpop.f32.mrf.mxu0
        %3032 = vdwg.mxu0
        %3033 = vmatprep.subr.bf16.mxu0 0
        %3034 = vmatpush1.bf16.xpose.msra.mxu0 0
        %3035 = vmatprep.subr.bf16.mxu0 0
        %3036 = vmatpush1.bf16.xpose.msra.mxu0 0
        %3037 = vmatprep.subr.bf16.mxu0 0
        %3038 = vmatpush1.bf16.xpose.msra.mxu0 0
        %3039 = vmatprep.subr.bf16.mxu0 0
        %3040 = vmatpush1.bf16.xpose.msra.mxu0 0
        %3041 = vmatprep.subr.bf16.mxu0 %v2877
        %3042 = vmatpush1.bf16.xpose.msra.mxu0 %v2876
        %3043 = vmatprep.subr.bf16.mxu0 %v2869
        %3044 = vmatpush1.bf16.xpose.msra.mxu0 %v2868
        %3045 = vmatprep.subr.bf16.mxu0 %v2861
        %3046 = vmatpush1.bf16.xpose.msra.mxu0 %v2860
        %3047 = vmatprep.subr.bf16.mxu0 %v2853
        %3048 = vmatpush1.bf16.xpose.msra.mxu0 %v2852
        %3049 = vmatprep.subr.bf16.mxu0 0
        %3050 = vmatpush2.bf16.xpose.msra.mxu0 0
        %3051 = vmatprep.subr.bf16.mxu0 0
        %3052 = vmatpush2.bf16.xpose.msra.mxu0 0
        %3053 = vmatprep.subr.bf16.mxu0 0
        %3054 = vmatpush2.bf16.xpose.msra.mxu0 0
        %3055 = vmatprep.subr.bf16.mxu0 0
        %3056 = vmatpush2.bf16.xpose.msra.mxu0 0
        %3057 = vmatprep.subr.bf16.mxu0 0
        %3058 = vmatpush2.bf16.xpose.msra.mxu0 0
        %3059 = vmatprep.subr.bf16.mxu0 0
        %3060 = vmatpush2.bf16.xpose.msra.mxu0 0
        %3061 = vmatprep.subr.bf16.mxu0 0
        %3062 = vmatpush2.bf16.xpose.msra.mxu0 0
        %3063 = vmatprep.subr.bf16.mxu0 0
        %3064 = vmatpush2.bf16.xpose.msra.mxu0 0
        %3065 = vmatprep.mubr.bf16.mxu0 %v2733
        %3066 = vmatmul.mubr.bf16.gmra.mxu0 %v2732
        %v3067 = vpop.f32.mrf.mxu0
        %v3068 = vadd.f32 %v3027, %v3067
        %v3069 = vpop.f32.mrf.mxu0
        %v3070 = vpop.f32.mrf.mxu0
        %v3071 = vadd.f32 %v3030, %v3070
        %v3072 = vpop.f32.mrf.mxu0
        %3073 = vdwg.mxu0
        %v3102 = vunpack.c.l.b16 %v2276
        %v3103 = vunpack.c.h.b16 %v2276
        %v3104 = vunpack.c.l.b16 %v2277
        %v3105 = vunpack.c.h.b16 %v2277
        %v3106 = vunpack.c.l.b16 %v2278
        %v3107 = vunpack.c.h.b16 %v2278
        %v3108 = vunpack.c.l.b16 %v2279
        %v3109 = vunpack.c.h.b16 %v2279
        %v3110 = vunpack.c.l.b16 %v2280
        %v3111 = vunpack.c.h.b16 %v2280
        %v3112 = vunpack.c.l.b16 %v2281
        %v3113 = vunpack.c.h.b16 %v2281
        %v3114 = vunpack.c.l.b16 %v2282
        %v3115 = vunpack.c.h.b16 %v2282
        %v3116 = vunpack.c.l.b16 %v2283
        %v3117 = vunpack.c.h.b16 %v2283
        %v3118 = vunpack.c.l.b16 %v2284
        %v3119 = vunpack.c.h.b16 %v2284
        %v3120 = vunpack.c.l.b16 %v2285
        %v3121 = vunpack.c.h.b16 %v2285
        %v3122 = vunpack.c.l.b16 %v2286
        %v3123 = vunpack.c.h.b16 %v2286
        %v3124 = vunpack.c.l.b16 %v2287
        %v3125 = vunpack.c.h.b16 %v2287
        %v3126 = vunpack.c.l.b16 %v2288
        %v3127 = vunpack.c.h.b16 %v2288
        %v3128 = vunpack.c.l.b16 %v2289
        %v3129 = vunpack.c.h.b16 %v2289
        %v3130 = vunpack.c.l.b16 %v2290
        %v3131 = vunpack.c.h.b16 %v2290
        %v3132 = vunpack.c.l.b16 %v2291
        %v3133 = vunpack.c.h.b16 %v2291
        %v3134 = vunpack.c.l.b16 %v2292
        %v3135 = vunpack.c.h.b16 %v2292
        %v3136 = vunpack.c.l.b16 %v2293
        %v3137 = vunpack.c.h.b16 %v2293
        %v3138 = vunpack.c.l.b16 %v2294
        %v3139 = vunpack.c.h.b16 %v2294
        %v3140 = vunpack.c.l.b16 %v2295
        %v3141 = vunpack.c.h.b16 %v2295
        %v3142 = vunpack.c.l.b16 %v2296
        %v3143 = vunpack.c.h.b16 %v2296
        %v3144 = vunpack.c.l.b16 %v2297
        %v3145 = vunpack.c.h.b16 %v2297
        %v3146 = vunpack.c.l.b16 %v2298
        %v3147 = vunpack.c.h.b16 %v2298
        %v3148 = vunpack.c.l.b16 %v2299
        %v3149 = vunpack.c.h.b16 %v2299
        %v3150 = vunpack.c.l.b16 %v2300
        %v3151 = vunpack.c.h.b16 %v2300
        %v3152 = vunpack.c.l.b16 %v2301
        %v3153 = vunpack.c.h.b16 %v2301
        %v3154 = vunpack.c.l.b16 %v2302
        %v3155 = vunpack.c.h.b16 %v2302
        %v3156 = vunpack.c.l.b16 %v2303
        %v3157 = vunpack.c.h.b16 %v2303
        %v3158 = vpack.c.b16 %v3110, %v3102
        %v3159 = vpack.c.b16 %v3111, %v3103
        %v3160 = vpack.c.b16 %v3112, %v3104
        %v3161 = vpack.c.b16 %v3113, %v3105
        %v3162 = vpack.c.b16 %v3114, %v3106
        %v3163 = vpack.c.b16 %v3115, %v3107
        %v3164 = vpack.c.b16 %v3116, %v3108
        %v3165 = vpack.c.b16 %v3117, %v3109
        %v3166 = vpack.c.b16 %v3126, %v3118
        %v3167 = vpack.c.b16 %v3127, %v3119
        %v3168 = vpack.c.b16 %v3128, %v3120
        %v3169 = vpack.c.b16 %v3129, %v3121
        %v3170 = vpack.c.b16 %v3130, %v3122
        %v3171 = vpack.c.b16 %v3131, %v3123
        %v3172 = vpack.c.b16 %v3132, %v3124
        %v3173 = vpack.c.b16 %v3133, %v3125
        %v3174 = vpack.c.b16 %v3142, %v3134
        %v3175 = vpack.c.b16 %v3143, %v3135
        %v3176 = vpack.c.b16 %v3144, %v3136
        %v3177 = vpack.c.b16 %v3145, %v3137
        %v3178 = vpack.c.b16 %v3146, %v3138
        %v3179 = vpack.c.b16 %v3147, %v3139
        %v3180 = vpack.c.b16 %v3148, %v3140
        %v3181 = vpack.c.b16 %v3149, %v3141
        %v3182 = vpack.c.b16 %v3150, %v3150
        %v3183 = vpack.c.b16 %v3151, %v3151
        %v3184 = vpack.c.b16 %v3152, %v3152
        %v3185 = vpack.c.b16 %v3153, %v3153
        %v3186 = vpack.c.b16 %v3154, %v3154
        %v3187 = vpack.c.b16 %v3155, %v3155
        %v3188 = vpack.c.b16 %v3156, %v3156
        %v3189 = vpack.c.b16 %v3157, %v3157
        %3222 = vmatprep.subr.bf16.mxu0 0
        %3223 = vmatpush1.bf16.xpose.msra.mxu0 0
        %3224 = vmatprep.subr.bf16.mxu0 0
        %3225 = vmatpush1.bf16.xpose.msra.mxu0 0
        %3226 = vmatprep.subr.bf16.mxu0 0
        %3227 = vmatpush1.bf16.xpose.msra.mxu0 0
        %3228 = vmatprep.subr.bf16.mxu0 0
        %3229 = vmatpush1.bf16.xpose.msra.mxu0 0
        %3230 = vmatprep.subr.bf16.mxu0 %v3183
        %3231 = vmatpush1.bf16.xpose.msra.mxu0 %v3182
        %3232 = vmatprep.subr.bf16.mxu0 %v3175
        %3233 = vmatpush1.bf16.xpose.msra.mxu0 %v3174
        %3234 = vmatprep.subr.bf16.mxu0 %v3167
        %3235 = vmatpush1.bf16.xpose.msra.mxu0 %v3166
        %3236 = vmatprep.subr.bf16.mxu0 %v3159
        %3237 = vmatpush1.bf16.xpose.msra.mxu0 %v3158
        %3238 = vmatprep.subr.bf16.mxu0 0
        %3239 = vmatpush2.bf16.xpose.msra.mxu0 0
        %3240 = vmatprep.subr.bf16.mxu0 0
        %3241 = vmatpush2.bf16.xpose.msra.mxu0 0
        %3242 = vmatprep.subr.bf16.mxu0 0
        %3243 = vmatpush2.bf16.xpose.msra.mxu0 0
        %3244 = vmatprep.subr.bf16.mxu0 0
        %3245 = vmatpush2.bf16.xpose.msra.mxu0 0
        %3246 = vmatprep.subr.bf16.mxu0 0
        %3247 = vmatpush2.bf16.xpose.msra.mxu0 0
        %3248 = vmatprep.subr.bf16.mxu0 0
        %3249 = vmatpush2.bf16.xpose.msra.mxu0 0
        %3250 = vmatprep.subr.bf16.mxu0 0
        %3251 = vmatpush2.bf16.xpose.msra.mxu0 0
        %3252 = vmatprep.subr.bf16.mxu0 0
        %3253 = vmatpush2.bf16.xpose.msra.mxu0 0
        %3254 = vmatprep.mubr.bf16.mxu0 %v2269
        %3255 = vmatmul.mubr.bf16.gmra.mxu0 %v2268
        %v3256 = vpop.f32.mrf.mxu0
        %v3257 = vadd.f32 %v3068, %v3256
        %v3258 = vpop.f32.mrf.mxu0
        %v3259 = vpop.f32.mrf.mxu0
        %v3260 = vadd.f32 %v3071, %v3259
        %v3261 = vpop.f32.mrf.mxu0
        %3262 = vdwg.mxu0
        %3263 = vmatprep.subr.bf16.mxu0 0
        %3264 = vmatpush1.bf16.xpose.msra.mxu0 0
        %3265 = vmatprep.subr.bf16.mxu0 0
        %3266 = vmatpush1.bf16.xpose.msra.mxu0 0
        %3267 = vmatprep.subr.bf16.mxu0 0
        %3268 = vmatpush1.bf16.xpose.msra.mxu0 0
        %3269 = vmatprep.subr.bf16.mxu0 0
        %3270 = vmatpush1.bf16.xpose.msra.mxu0 0
        %3271 = vmatprep.subr.bf16.mxu0 %v3185
        %3272 = vmatpush1.bf16.xpose.msra.mxu0 %v3184
        %3273 = vmatprep.subr.bf16.mxu0 %v3177
        %3274 = vmatpush1.bf16.xpose.msra.mxu0 %v3176
        %3275 = vmatprep.subr.bf16.mxu0 %v3169
        %3276 = vmatpush1.bf16.xpose.msra.mxu0 %v3168
        %3277 = vmatprep.subr.bf16.mxu0 %v3161
        %3278 = vmatpush1.bf16.xpose.msra.mxu0 %v3160
        %3279 = vmatprep.subr.bf16.mxu0 0
        %3280 = vmatpush2.bf16.xpose.msra.mxu0 0
        %3281 = vmatprep.subr.bf16.mxu0 0
        %3282 = vmatpush2.bf16.xpose.msra.mxu0 0
        %3283 = vmatprep.subr.bf16.mxu0 0
        %3284 = vmatpush2.bf16.xpose.msra.mxu0 0
        %3285 = vmatprep.subr.bf16.mxu0 0
        %3286 = vmatpush2.bf16.xpose.msra.mxu0 0
        %3287 = vmatprep.subr.bf16.mxu0 0
        %3288 = vmatpush2.bf16.xpose.msra.mxu0 0
        %3289 = vmatprep.subr.bf16.mxu0 0
        %3290 = vmatpush2.bf16.xpose.msra.mxu0 0
        %3291 = vmatprep.subr.bf16.mxu0 0
        %3292 = vmatpush2.bf16.xpose.msra.mxu0 0
        %3293 = vmatprep.subr.bf16.mxu0 0
        %3294 = vmatpush2.bf16.xpose.msra.mxu0 0
        %3295 = vmatprep.mubr.bf16.mxu0 %v2271
        %3296 = vmatmul.mubr.bf16.gmra.mxu0 %v2270
        %v3297 = vpop.f32.mrf.mxu0
        %v3298 = vadd.f32 %v3257, %v3297
        %v3299 = vpop.f32.mrf.mxu0
        %v3300 = vpop.f32.mrf.mxu0
        %v3301 = vadd.f32 %v3260, %v3300
        %v3302 = vpop.f32.mrf.mxu0
        %3303 = vdwg.mxu0
        %3304 = vmatprep.subr.bf16.mxu0 0
        %3305 = vmatpush1.bf16.xpose.msra.mxu0 0
        %3306 = vmatprep.subr.bf16.mxu0 0
        %3307 = vmatpush1.bf16.xpose.msra.mxu0 0
        %3308 = vmatprep.subr.bf16.mxu0 0
        %3309 = vmatpush1.bf16.xpose.msra.mxu0 0
        %3310 = vmatprep.subr.bf16.mxu0 0
        %3311 = vmatpush1.bf16.xpose.msra.mxu0 0
        %3312 = vmatprep.subr.bf16.mxu0 %v3187
        %3313 = vmatpush1.bf16.xpose.msra.mxu0 %v3186
        %3314 = vmatprep.subr.bf16.mxu0 %v3179
        %3315 = vmatpush1.bf16.xpose.msra.mxu0 %v3178
        %3316 = vmatprep.subr.bf16.mxu0 %v3171
        %3317 = vmatpush1.bf16.xpose.msra.mxu0 %v3170
        %3318 = vmatprep.subr.bf16.mxu0 %v3163
        %3319 = vmatpush1.bf16.xpose.msra.mxu0 %v3162
        %3320 = vmatprep.subr.bf16.mxu0 0
        %3321 = vmatpush2.bf16.xpose.msra.mxu0 0
        %3322 = vmatprep.subr.bf16.mxu0 0
        %3323 = vmatpush2.bf16.xpose.msra.mxu0 0
        %3324 = vmatprep.subr.bf16.mxu0 0
        %3325 = vmatpush2.bf16.xpose.msra.mxu0 0
        %3326 = vmatprep.subr.bf16.mxu0 0
        %3327 = vmatpush2.bf16.xpose.msra.mxu0 0
        %3328 = vmatprep.subr.bf16.mxu0 0
        %3329 = vmatpush2.bf16.xpose.msra.mxu0 0
        %3330 = vmatprep.subr.bf16.mxu0 0
        %3331 = vmatpush2.bf16.xpose.msra.mxu0 0
        %3332 = vmatprep.subr.bf16.mxu0 0
        %3333 = vmatpush2.bf16.xpose.msra.mxu0 0
        %3334 = vmatprep.subr.bf16.mxu0 0
        %3335 = vmatpush2.bf16.xpose.msra.mxu0 0
        %3336 = vmatprep.mubr.bf16.mxu0 %v2273
        %3337 = vmatmul.mubr.bf16.gmra.mxu0 %v2272
        %v3338 = vpop.f32.mrf.mxu0
        %v3339 = vadd.f32 %v3298, %v3338
        %v3340 = vpop.f32.mrf.mxu0
        %v3341 = vpop.f32.mrf.mxu0
        %v3342 = vadd.f32 %v3301, %v3341
        %v3343 = vpop.f32.mrf.mxu0
        %3344 = vdwg.mxu0
        %3345 = vmatprep.subr.bf16.mxu0 0
        %3346 = vmatpush1.bf16.xpose.msra.mxu0 0
        %3347 = vmatprep.subr.bf16.mxu0 0
        %3348 = vmatpush1.bf16.xpose.msra.mxu0 0
        %3349 = vmatprep.subr.bf16.mxu0 0
        %3350 = vmatpush1.bf16.xpose.msra.mxu0 0
        %3351 = vmatprep.subr.bf16.mxu0 0
        %3352 = vmatpush1.bf16.xpose.msra.mxu0 0
        %3353 = vmatprep.subr.bf16.mxu0 %v3189
        %3354 = vmatpush1.bf16.xpose.msra.mxu0 %v3188
        %3355 = vmatprep.subr.bf16.mxu0 %v3181
        %3356 = vmatpush1.bf16.xpose.msra.mxu0 %v3180
        %3357 = vmatprep.subr.bf16.mxu0 %v3173
        %3358 = vmatpush1.bf16.xpose.msra.mxu0 %v3172
        %3359 = vmatprep.subr.bf16.mxu0 %v3165
        %3360 = vmatpush1.bf16.xpose.msra.mxu0 %v3164
        %3361 = vmatprep.subr.bf16.mxu0 0
        %3362 = vmatpush2.bf16.xpose.msra.mxu0 0
        %3363 = vmatprep.subr.bf16.mxu0 0
        %3364 = vmatpush2.bf16.xpose.msra.mxu0 0
        %3365 = vmatprep.subr.bf16.mxu0 0
        %3366 = vmatpush2.bf16.xpose.msra.mxu0 0
        %3367 = vmatprep.subr.bf16.mxu0 0
        %3368 = vmatpush2.bf16.xpose.msra.mxu0 0
        %3369 = vmatprep.subr.bf16.mxu0 0
        %3370 = vmatpush2.bf16.xpose.msra.mxu0 0
        %3371 = vmatprep.subr.bf16.mxu0 0
        %3372 = vmatpush2.bf16.xpose.msra.mxu0 0
        %3373 = vmatprep.subr.bf16.mxu0 0
        %3374 = vmatpush2.bf16.xpose.msra.mxu0 0
        %3375 = vmatprep.subr.bf16.mxu0 0
        %3376 = vmatpush2.bf16.xpose.msra.mxu0 0
        %3377 = vmatprep.mubr.bf16.mxu0 %v2275
        %3378 = vmatmul.mubr.bf16.gmra.mxu0 %v2274
        %v3379 = vpop.f32.mrf.mxu0
        %v3380 = vadd.f32 %v3339, %v3379
        %v3381 = vpop.f32.mrf.mxu0
        %v3382 = vpop.f32.mrf.mxu0
        %v3383 = vadd.f32 %v3342, %v3382
        %v3384 = vpop.f32.mrf.mxu0
        %3385 = vdwg.mxu0
        %v3386 = vld [vmem:[%s388 + $0x9] sm:$0x1]
        %v3388 = vlaneseq
        %v3389 = vshrl.u32 %v3388, 7
        %v3390 = vsub.s32 0, %v3389
        %v3391 = vrot.slane %v3386, %v3390
        %v3393 = vadd.f32 %v3380, %v3391
        %v3394 = vadd.f32 %v3383, %v3391
        %v3395 = vadd.f32 %v1840, %v3393
        %v3396 = vadd.f32 %v1841, %v3394
        %v3397 = vld [vmem:[%s388 + $0xa] sm:$0x1]
        %v3398 = vld [vmem:[%s388 + $0xb] sm:$0x1]
        %v3399 = vsel %vm415, %v3395, 0.0
        %3400 = vadd.xlane.f32.xlu0 %v3399
        %v3401 = vpop.xlane.xlu0 %3400
        %v3402 = vsel %vm415, %v3396, 0.0
        %3403 = vadd.xlane.f32.xlu0 %v3402
        %v3404 = vpop.xlane.xlu0 %3403
        %v3405 = vmul.f32 %v3401, %v1805
        %v3406 = vmul.f32 %v3404, %v1805
        %v3407 = vsub.f32 %v3395, %v3405
        %v3408 = vsub.f32 %v3396, %v3406
        %v3409 = vmul.f32 %v3407, %v3407
        %v3410 = vmul.f32 %v3408, %v3408
        %v3411 = vsel %vm415, %v3409, 0.0
        %3412 = vadd.xlane.f32.xlu0 %v3411
        %v3413 = vpop.xlane.xlu0 %3412
        %v3414 = vsel %vm415, %v3410, 0.0
        %3415 = vadd.xlane.f32.xlu0 %v3414
        %v3416 = vpop.xlane.xlu0 %3415
        %v3417 = vmul.f32 %v3413, %v1805
        %v3418 = vmul.f32 %v3416, %v1805
        %v3419 = vadd.f32 %v3417, 1e-05
        %v3420 = vadd.f32 %v3418, 1e-05
        %v3421 = vrsqrt.pop %v3419
        %v3422 = vrsqrt.pop %v3420
        %v3423 = vmul.f32 %v3407, %v3421
        %v3424 = vmul.f32 %v3408, %v3422
        %v3426 = vlaneseq
        %v3427 = vshrl.u32 %v3426, 7
        %v3428 = vsub.s32 0, %v3427
        %v3429 = vrot.slane %v3397, %v3428
        %v3431 = vmul.f32 %v3423, %v3429
        %v3432 = vmul.f32 %v3424, %v3429
        %v3434 = vlaneseq
        %v3435 = vshrl.u32 %v3434, 7
        %v3436 = vsub.s32 0, %v3435
        %v3437 = vrot.slane %v3398, %v3436
        %v3439 = vadd.f32 %v3431, %v3437
        %v3440 = vadd.f32 %v3432, %v3437
        %3441 = vst.msk [vmem:[#allocation2] sm:$0xff] %vm415, %v3439
        %3442 = vst.msk [vmem:[#allocation2 + $0x8] sm:$0xff] %vm415, %v3440
        %p3443 = scmp.eq.s32.totalorder %s23, 2
        // Predicated region
        $region61: #{transformer_forward.1} parent=51 // pred_check
          %p3444 = pneg %p3443
        $region62: #{transformer_forward.1} parent=51 // pred_check_branch
          %3446 = sbr.rel (%p3444) target = $region64
        $region63: #{transformer_forward.1} parent=51 // pred_region
          %v3447 = vld [vmem:[%s6] sm:$0x1]
          %v3448 = vld [vmem:[%s7] sm:$0x1]
          %v3449 = vsel %vm415, %v3439, 0.0
          %3450 = vadd.xlane.f32.xlu0 %v3449
          %v3451 = vpop.xlane.xlu0 %3450
          %v3452 = vsel %vm415, %v3440, 0.0
          %3453 = vadd.xlane.f32.xlu0 %v3452
          %v3454 = vpop.xlane.xlu0 %3453
          %v3455 = vmul.f32 %v3451, %v1805
          %v3456 = vmul.f32 %v3454, %v1805
          %v3457 = vsub.f32 %v3439, %v3455
          %v3458 = vsub.f32 %v3440, %v3456
          %v3459 = vmul.f32 %v3457, %v3457
          %v3460 = vmul.f32 %v3458, %v3458
          %v3461 = vsel %vm415, %v3459, 0.0
          %3462 = vadd.xlane.f32.xlu0 %v3461
          %v3463 = vpop.xlane.xlu0 %3462
          %v3464 = vsel %vm415, %v3460, 0.0
          %3465 = vadd.xlane.f32.xlu0 %v3464
          %v3466 = vpop.xlane.xlu0 %3465
          %v3467 = vmul.f32 %v3463, %v1805
          %v3468 = vmul.f32 %v3466, %v1805
          %v3469 = vadd.f32 %v3467, 1e-05
          %v3470 = vadd.f32 %v3468, 1e-05
          %v3471 = vrsqrt.pop %v3469
          %v3472 = vrsqrt.pop %v3470
          %v3473 = vmul.f32 %v3457, %v3471
          %v3474 = vmul.f32 %v3458, %v3472
          %v3476 = vlaneseq
          %v3477 = vshrl.u32 %v3476, 7
          %v3478 = vsub.s32 0, %v3477
          %v3479 = vrot.slane %v3447, %v3478
          %v3481 = vmul.f32 %v3473, %v3479
          %v3482 = vmul.f32 %v3474, %v3479
          %v3484 = vlaneseq
          %v3485 = vshrl.u32 %v3484, 7
          %v3486 = vsub.s32 0, %v3485
          %v3487 = vrot.slane %v3448, %v3486
          %v3489 = vadd.f32 %v3481, %v3487
          %v3490 = vadd.f32 %v3482, %v3487
          %3491 = vst.msk [vmem:[#allocation6] sm:$0xff] %vm415, %v3489
          %3493 = vrot.lane.b32.xlu0 %v3490, 50
          %v3494 = vpop.permute.xlu0 %3493
          %vm3496 = vcmask 818576
          %3497 = vst.msk [vmem:[#allocation6] sm:$0xff] %vm3496, %v3494
        $region64: #{transformer_forward.1} parent=51 // pred_fallthru
          _
        // Predicated region
        $region65: #{transformer_forward.1} parent=51 // pred_check
          %p3498 = pneg %p229
        $region66: #{transformer_forward.1} parent=51 // pred_check_branch
          %3500 = sbr.rel (%p3498) target = $region68
        $region67: #{transformer_forward.1} parent=51 // pred_region
          %s3502 = ssub.s32 128, 128
          %3503 = vsyncadd [#allocation5], %s3502
          %s3505 = sshll.u32 [#allocation6], 4
          %s3506 = int_to_ptr.vmem [resolvable:$true] %s3505
          %3508 = dma.vmem_to_hbm [thread:$0]  %s3506, 128, %s8, [#allocation5]
        $region68: #{transformer_forward.1} parent=51 // pred_fallthru
          _
        // Predicated region
        $region69: #{transformer_forward.1} parent=51 // pred_check
          %p3509 = pneg %p229
        $region70: #{transformer_forward.1} parent=51 // pred_check_branch
          %3511 = sbr.rel (%p3509) target = $region72
        $region71: #{transformer_forward.1} parent=51 // pred_region
          %3512 = dma.done [#allocation5], 128
        $region72: #{transformer_forward.1} parent=51 // pred_fallthru
          _
      $region52: #{transformer_forward.1} parent=5 // pred_fallthru
        _
      %p3513 = scmp.le.s32.totalorder 2, %s18
      // Predicated region
      $region73: #{transformer_forward.1} parent=5 // pred_check
        %p3514 = pneg %p3513
      $region74: #{transformer_forward.1} parent=5 // pred_check_branch
        %3516 = sbr.rel (%p3514) target = $region76
      $region75: #{transformer_forward.1} parent=5 // pred_region
        %s3517 = ssub.s32 %s18, 2
      $region76: #{transformer_forward.1} parent=5 // pred_fallthru
        _
    $region6: #{transformer_forward.1} parent=1 // loop_footer
      %s22 = sadd.s32 1, %s18
    $region7: #{transformer_forward.1} parent=1 // loop_footer_branch
      %17 = sbr.rel target = $region3
    $region8: #{transformer_forward.1} parent=1 // loop_exit
      _
    %3518 = vsyncpa [#allocation4], 1
    %s3519 = scalar_lea.sflag [#allocation4], 1
    %3520 = vsyncpa %s3519, 1
    %3521 = vsyncpa [#allocation5], 1
    %s3522 = scalar_lea.sflag [#allocation5], 1
    %3523 = vsyncpa %s3522, 1

</llo_original>
